<compile_context>
chip_gen: v7x
topology: tpu7x:2x2x1
jax: 0.10.0
libtpu: 0.0.40
codegen_flags: <defaults>
</compile_context>

<pallas_src>
import math

import jax
import jax.numpy as jnp
from jax.experimental import pallas as pl
from jax.experimental.pallas import tpu as pltpu

# ---- original Critic dimensions -------------------------------------------
OBS = 8           # obs_space_size
ACT = 2           # action_space_size
H1 = 300          # hidden1
H2 = 400          # hidden2
OUT = 1           # single Q value
OUT_W_RANGE = 0.003

# ---- lane-aligned padded dimensions ---------------------------------------
H1_P = 384        # 300 -> 384
H2_P = 512        # 400 -> 512
OUT_P = 128       # MXU-friendly padded width for the last weight (in-kernel only)
NBIAS_ROWS = 8    # bias pack rows (sublane aligned; only 4 used)


def _round_up(x, m):
    return (x + m - 1) // m * m


def _choose_tb(B):
    """Batch tile: multiples of 256 (MXU-aligned on v6e/v7x), capped at 512,
    and guaranteeing >= 2 tiles for B > 256 so both v7x TCs get work."""
    if B <= 256:
        return _round_up(max(B, 1), 8)
    half = (B + 1) // 2
    return min(512, _round_up(half, 256))


# ---- kernel ----------------------------------------------------------------
def critic_kernel(x_ref, a_ref, w1x_ref, w1a_ref, w2_ref, w3_ref, w4_ref,
                  b_ref, o_ref):
    """Fused 4-layer MLP on one batch tile. bf16 MXU matmuls, f32 accumulation.

    x_ref : (TB, OBS) f32           a_ref : (TB, ACT) f32
    w1x_ref: (OBS, H1_P) bf16       w1a_ref: (ACT, H1_P) bf16
    w2_ref: (H1_P, H2_P) bf16       w3_ref: (H2_P, H2_P) bf16
    w4_ref: (H2_P, OUT_P) bf16      b_ref : (NBIAS_ROWS, H2_P) f32
    o_ref : (TB, 1) f32
    """
    x = x_ref[...].astype(jnp.bfloat16)
    a = a_ref[...].astype(jnp.bfloat16)
    # layer 1: [x; a] @ W1 == x @ W1[:OBS] + a @ W1[OBS:]
    h = jnp.dot(x, w1x_ref[...], preferred_element_type=jnp.float32)
    h = h + jnp.dot(a, w1a_ref[...], preferred_element_type=jnp.float32)
    h = jnp.maximum(h + b_ref[0:1, :H1_P], 0.0)                      # (TB, H1_P)
    h = jnp.dot(h.astype(jnp.bfloat16), w2_ref[...],
                preferred_element_type=jnp.float32)
    h = jnp.maximum(h + b_ref[1:2, :], 0.0)                          # (TB, H2_P)
    h = jnp.dot(h.astype(jnp.bfloat16), w3_ref[...],
                preferred_element_type=jnp.float32)
    h = jnp.maximum(h + b_ref[2:3, :], 0.0)                          # (TB, H2_P)
    q = jnp.dot(h.astype(jnp.bfloat16), w4_ref[...],
                preferred_element_type=jnp.float32)                  # (TB, OUT_P)
    o_ref[...] = (q + b_ref[3:4, :OUT_P])[:, 0:1]                    # (TB, 1)


# ---- parameter handling -----------------------------------------------------
def init_params(key):
    """Match make_linear_with_weights semantics:
    weight ~ U(-limit, limit) with limit = 1/sqrt(in_features), except the
    output-layer weight which uses weights_range=0.003. Biases keep the
    default nn.Linear init U(-1/sqrt(in_features), 1/sqrt(in_features))."""
    ks = jax.random.split(key, 8)

    def uni(k, shape, limit):
        return jax.random.uniform(k, shape, jnp.float32, -limit, limit)

    lim_in = 1.0 / math.sqrt(OBS + ACT)
    lim_h1 = 1.0 / math.sqrt(H1)
    lim_h2 = 1.0 / math.sqrt(H2)

    w1 = uni(ks[0], (OBS + ACT, H1), lim_in)   # stored [in, out]
    b1 = uni(ks[1], (1, H1), lim_in)
    w2 = uni(ks[2], (H1, H2), lim_h1)
    b2 = uni(ks[3], (1, H2), lim_h1)
    w3 = uni(ks[4], (H2, H2), lim_h2)
    b3 = uni(ks[5], (1, H2), lim_h2)
    w4 = uni(ks[6], (H2, OUT), OUT_W_RANGE)    # output weight uses weights_range
    b4 = uni(ks[7], (1, OUT), lim_h2)          # output bias: default nn.Linear init
    return (w1, b1, w2, b2, w3, b3, w4, b4)


def pack_params(params):
    """One-time prep: zero-pad output dims to lane-aligned widths, cast
    weights to bf16, split W1 into obs/action halves (so the kernel never
    needs a concatenated/padded input), pack the four biases into a single
    (NBIAS_ROWS, H2_P) f32 array (one DMA descriptor instead of four)."""
    w1, b1, w2, b2, w3, b3, w4, b4 = params
    w1x = (jnp.zeros((OBS, H1_P), jnp.float32)
           .at[:, :H1].set(w1[:OBS, :]).astype(jnp.bfloat16))
    w1a = (jnp.zeros((ACT, H1_P), jnp.float32)
           .at[:, :H1].set(w1[OBS:, :]).astype(jnp.bfloat16))
    w2p = (jnp.zeros((H1_P, H2_P), jnp.float32)
           .at[:H1, :H2].set(w2).astype(jnp.bfloat16))
    w3p = (jnp.zeros((H2_P, H2_P), jnp.float32)
           .at[:H2, :H2].set(w3).astype(jnp.bfloat16))
    w4p = (jnp.zeros((H2_P, OUT_P), jnp.float32)
           .at[:H2, :OUT].set(w4).astype(jnp.bfloat16))
    bias_pk = jnp.zeros((NBIAS_ROWS, H2_P), jnp.float32)
    bias_pk = bias_pk.at[0, :H1].set(b1.reshape(-1))
    bias_pk = bias_pk.at[1, :H2].set(b2.reshape(-1))
    bias_pk = bias_pk.at[2, :H2].set(b3.reshape(-1))
    bias_pk = bias_pk.at[3, :OUT].set(b4.reshape(-1))
    return (w1x, w1a, w2p, w3p, w4p, bias_pk)


# ---- forward wrapper --------------------------------------------------------
@jax.jit
def critic_forward(x, a, packed):
    """x: (B, OBS) f32, a: (B, ACT) f32  ->  (B, 1) f32 Q values."""
    w1x, w1a, w2p, w3p, w4p, bias_pk = packed
    B = x.shape[0]

    tb = _choose_tb(B)
    b_pad = _round_up(B, tb)
    nb = b_pad // tb
    if b_pad != B:
        x = jnp.pad(x, ((0, b_pad - B), (0, 0)))
        a = jnp.pad(a, ((0, b_pad - B), (0, 0)))

    mm_terms = OBS * H1_P + ACT * H1_P + H1_P * H2_P + H2_P * H2_P + H2_P * OUT_P
    flops = 2 * b_pad * mm_terms
    weight_bytes = 2 * mm_terms + 4 * NBIAS_ROWS * H2_P
    bytes_accessed = weight_bytes + 4 * b_pad * (OBS + ACT + OUT)

    out = pl.pallas_call(
        critic_kernel,
        out_shape=jax.ShapeDtypeStruct((b_pad, OUT), jnp.float32),
        grid=(nb,),
        in_specs=[
            pl.BlockSpec((tb, OBS), lambda i: (i, 0)),          # batch-tiled obs
            pl.BlockSpec((tb, ACT), lambda i: (i, 0)),          # batch-tiled action
            pl.BlockSpec((OBS, H1_P), lambda i: (0, 0)),        # weights: VMEM-resident
            pl.BlockSpec((ACT, H1_P), lambda i: (0, 0)),
            pl.BlockSpec((H1_P, H2_P), lambda i: (0, 0)),
            pl.BlockSpec((H2_P, H2_P), lambda i: (0, 0)),
            pl.BlockSpec((H2_P, OUT_P), lambda i: (0, 0)),
            pl.BlockSpec((NBIAS_ROWS, H2_P), lambda i: (0, 0)),  # packed biases
        ],
        out_specs=pl.BlockSpec((tb, OUT), lambda i: (i, 0)),     # narrow (tb,1) writeback
        compiler_params=pltpu.CompilerParams(
            dimension_semantics=("parallel",),   # shard batch tiles across TCs (v7x)
            vmem_limit_bytes=32 * 1024 * 1024),  # headroom over v5e's 16 MiB default
        cost_estimate=pl.CostEstimate(
            flops=flops, transcendentals=0, bytes_accessed=bytes_accessed),
    )(x, a, w1x, w1a, w2p, w3p, w4p, bias_pk)

    return out if b_pad == B else out[:B]


# ---- reference (same bf16-input / f32-accumulate quantization) --------------
def ref_forward(x, a, params):
    w1, b1, w2, b2, w3, b3, w4, b4 = params

    def mm(h, w):
        return jnp.dot(h.astype(jnp.bfloat16).astype(jnp.float32),
                       w.astype(jnp.bfloat16).astype(jnp.float32))

    xa = jnp.concatenate([x, a], axis=1)
    h = jnp.maximum(mm(xa, w1) + b1, 0.0)
    h = jnp.maximum(mm(h, w2) + b2, 0.0)
    h = jnp.maximum(mm(h, w3) + b3, 0.0)
    return mm(h, w4) + b4


if __name__ == "__main__":
    key = jax.random.PRNGKey(0)
    pkey, xkey, akey = jax.random.split(key, 3)

    params = init_params(pkey)
    packed = pack_params(params)

    B = 300  # -> tb=256, 2 batch tiles (exercises multi-tile grid + batch padding)
    x = jax.random.normal(xkey, (B, OBS), jnp.float32)
    a = jax.random.normal(akey, (B, ACT), jnp.float32)

    q = critic_forward(x, a, packed)
    jax.block_until_ready(q)

    ref = ref_forward(x, a, params)
    assert q.shape == (B, 1), q.shape
    assert jnp.allclose(q, ref, atol=1e-3, rtol=1e-3), (
        float(jnp.max(jnp.abs(q - ref))))

    print("KERNEL_OK")
</pallas_src>

<mosaic_0001>
module attributes {stable_mosaic.version = 11 : i64} {
  func.func @critic_kernel(%arg0: i32, %arg1: memref<256x8xf32, #tpu.memory_space<vmem>>, %arg2: memref<256x2xf32, #tpu.memory_space<vmem>>, %arg3: memref<8x384xbf16, #tpu.memory_space<vmem>>, %arg4: memref<2x384xbf16, #tpu.memory_space<vmem>>, %arg5: memref<384x512xbf16, #tpu.memory_space<vmem>>, %arg6: memref<512x512xbf16, #tpu.memory_space<vmem>>, %arg7: memref<512x128xbf16, #tpu.memory_space<vmem>>, %arg8: memref<8x512xf32, #tpu.memory_space<vmem>>, %arg9: memref<256x1xf32, #tpu.memory_space<vmem>>) attributes {dimension_semantics = [#tpu.dimension_semantics<parallel>], iteration_bounds = array<i64: 2>, scalar_prefetch = 0 : i64, scratch_operands = 0 : i64, tpu.core_type = #tpu.core_type<tc>, window_params = [{transform_indices = @transform_0, window_bounds = array<i64: 256, 8>}, {transform_indices = @transform_1, window_bounds = array<i64: 256, 2>}, {pipeline_mode = #tpu.pipeline_mode<synchronous>, transform_indices = @transform_2, window_bounds = array<i64: 8, 384>}, {pipeline_mode = #tpu.pipeline_mode<synchronous>, transform_indices = @transform_3, window_bounds = array<i64: 2, 384>}, {pipeline_mode = #tpu.pipeline_mode<synchronous>, transform_indices = @transform_4, window_bounds = array<i64: 384, 512>}, {pipeline_mode = #tpu.pipeline_mode<synchronous>, transform_indices = @transform_5, window_bounds = array<i64: 512, 512>}, {pipeline_mode = #tpu.pipeline_mode<synchronous>, transform_indices = @transform_6, window_bounds = array<i64: 512, 128>}, {pipeline_mode = #tpu.pipeline_mode<synchronous>, transform_indices = @transform_7, window_bounds = array<i64: 8, 512>}, {transform_indices = @transform_8, window_bounds = array<i64: 256, 1>}]} {
    %c0 = arith.constant 0 : index
    %c0_0 = arith.constant 0 : index
    %0 = vector.load %arg1[%c0, %c0_0] : memref<256x8xf32, #tpu.memory_space<vmem>>, vector<256x8xf32>
    %1 = arith.truncf %0 : vector<256x8xf32> to vector<256x8xbf16>
    %c0_1 = arith.constant 0 : index
    %c0_2 = arith.constant 0 : index
    %2 = vector.load %arg2[%c0_1, %c0_2] : memref<256x2xf32, #tpu.memory_space<vmem>>, vector<256x2xf32>
    %3 = arith.truncf %2 : vector<256x2xf32> to vector<256x2xbf16>
    %c0_3 = arith.constant 0 : index
    %c0_4 = arith.constant 0 : index
    %4 = vector.load %arg3[%c0_3, %c0_4] : memref<8x384xbf16, #tpu.memory_space<vmem>>, vector<8x384xbf16>
    %cst = arith.constant dense<0.000000e+00> : vector<256x384xf32>
    %5 = tpu.matmul %1, %4, %cst {dimension_numbers = #tpu.dot_dimension_numbers<[1], [0], [0], [1], [0, 0, 1, 1], [], []>} : vector<256x8xbf16>, vector<8x384xbf16>, vector<256x384xf32> -> vector<256x384xf32>
    %c0_5 = arith.constant 0 : index
    %c0_6 = arith.constant 0 : index
    %6 = vector.load %arg4[%c0_5, %c0_6] : memref<2x384xbf16, #tpu.memory_space<vmem>>, vector<2x384xbf16>
    %cst_7 = arith.constant dense<0.000000e+00> : vector<256x384xf32>
    %7 = tpu.matmul %3, %6, %cst_7 {dimension_numbers = #tpu.dot_dimension_numbers<[1], [0], [0], [1], [0, 0, 1, 1], [], []>} : vector<256x2xbf16>, vector<2x384xbf16>, vector<256x384xf32> -> vector<256x384xf32>
    %8 = arith.addf %5, %7 : vector<256x384xf32>
    %c0_8 = arith.constant 0 : index
    %c0_9 = arith.constant 0 : index
    %9 = vector.load %arg8[%c0_8, %c0_9] : memref<8x512xf32, #tpu.memory_space<vmem>>, vector<1x384xf32>
    %10 = vector.broadcast %9 : vector<1x384xf32> to vector<256x384xf32>
    %11 = arith.addf %8, %10 : vector<256x384xf32>
    %cst_10 = arith.constant 0.000000e+00 : f32
    %12 = vector.broadcast %cst_10 : f32 to vector<256x384xf32>
    %13 = arith.maximumf %11, %12 : vector<256x384xf32>
    %14 = arith.truncf %13 : vector<256x384xf32> to vector<256x384xbf16>
    %c0_11 = arith.constant 0 : index
    %c0_12 = arith.constant 0 : index
    %15 = vector.load %arg5[%c0_11, %c0_12] : memref<384x512xbf16, #tpu.memory_space<vmem>>, vector<384x512xbf16>
    %cst_13 = arith.constant dense<0.000000e+00> : vector<256x512xf32>
    %16 = tpu.matmul %14, %15, %cst_13 {dimension_numbers = #tpu.dot_dimension_numbers<[1], [0], [0], [1], [0, 0, 1, 1], [], []>} : vector<256x384xbf16>, vector<384x512xbf16>, vector<256x512xf32> -> vector<256x512xf32>
    %c1 = arith.constant 1 : index
    %c0_14 = arith.constant 0 : index
    %17 = vector.load %arg8[%c1, %c0_14] : memref<8x512xf32, #tpu.memory_space<vmem>>, vector<1x512xf32>
    %18 = vector.broadcast %17 : vector<1x512xf32> to vector<256x512xf32>
    %19 = arith.addf %16, %18 : vector<256x512xf32>
    %cst_15 = arith.constant 0.000000e+00 : f32
    %20 = vector.broadcast %cst_15 : f32 to vector<256x512xf32>
    %21 = arith.maximumf %19, %20 : vector<256x512xf32>
    %22 = arith.truncf %21 : vector<256x512xf32> to vector<256x512xbf16>
    %c0_16 = arith.constant 0 : index
    %c0_17 = arith.constant 0 : index
    %23 = vector.load %arg6[%c0_16, %c0_17] : memref<512x512xbf16, #tpu.memory_space<vmem>>, vector<512x512xbf16>
    %cst_18 = arith.constant dense<0.000000e+00> : vector<256x512xf32>
    %24 = tpu.matmul %22, %23, %cst_18 {dimension_numbers = #tpu.dot_dimension_numbers<[1], [0], [0], [1], [0, 0, 1, 1], [], []>} : vector<256x512xbf16>, vector<512x512xbf16>, vector<256x512xf32> -> vector<256x512xf32>
    %c2 = arith.constant 2 : index
    %c0_19 = arith.constant 0 : index
    %25 = vector.load %arg8[%c2, %c0_19] : memref<8x512xf32, #tpu.memory_space<vmem>>, vector<1x512xf32>
    %26 = vector.broadcast %25 : vector<1x512xf32> to vector<256x512xf32>
    %27 = arith.addf %24, %26 : vector<256x512xf32>
    %cst_20 = arith.constant 0.000000e+00 : f32
    %28 = vector.broadcast %cst_20 : f32 to vector<256x512xf32>
    %29 = arith.maximumf %27, %28 : vector<256x512xf32>
    %30 = arith.truncf %29 : vector<256x512xf32> to vector<256x512xbf16>
    %c0_21 = arith.constant 0 : index
    %c0_22 = arith.constant 0 : index
    %31 = vector.load %arg7[%c0_21, %c0_22] : memref<512x128xbf16, #tpu.memory_space<vmem>>, vector<512x128xbf16>
    %cst_23 = arith.constant dense<0.000000e+00> : vector<256x128xf32>
    %32 = tpu.matmul %30, %31, %cst_23 {dimension_numbers = #tpu.dot_dimension_numbers<[1], [0], [0], [1], [0, 0, 1, 1], [], []>} : vector<256x512xbf16>, vector<512x128xbf16>, vector<256x128xf32> -> vector<256x128xf32>
    %c3 = arith.constant 3 : index
    %c0_24 = arith.constant 0 : index
    %33 = vector.load %arg8[%c3, %c0_24] : memref<8x512xf32, #tpu.memory_space<vmem>>, vector<1x128xf32>
    %34 = vector.broadcast %33 : vector<1x128xf32> to vector<256x128xf32>
    %35 = arith.addf %32, %34 : vector<256x128xf32>
    %36 = vector.extract_strided_slice %35 {offsets = [0, 0], sizes = [256, 1], strides = [1, 1]} : vector<256x128xf32> to vector<256x1xf32>
    %c0_25 = arith.constant 0 : index
    %c0_26 = arith.constant 0 : index
    %37 = vector.load %arg9[%c0_25, %c0_26] : memref<256x1xf32, #tpu.memory_space<vmem>>, vector<256x1xf32>
    tpu.vector_store %arg9[%c0_25, %c0_26], %36 {strides = array<i32>} : memref<256x1xf32, #tpu.memory_space<vmem>>, vector<256x1xf32>,
    return
  }
  func.func @transform_0(%arg0: i32) -> (i32, i32) {
    %c0_i32 = arith.constant 0 : i32
    %c0_i32_0 = arith.constant 0 : i32
    return %arg0, %c0_i32 : i32, i32
  }
  func.func @transform_1(%arg0: i32) -> (i32, i32) {
    %c0_i32 = arith.constant 0 : i32
    %c0_i32_0 = arith.constant 0 : i32
    return %arg0, %c0_i32 : i32, i32
  }
  func.func @transform_2(%arg0: i32) -> (i32, i32) {
    %c0_i32 = arith.constant 0 : i32
    %c0_i32_0 = arith.constant 0 : i32
    %c0_i32_1 = arith.constant 0 : i32
    return %c0_i32, %c0_i32_0 : i32, i32
  }
  func.func @transform_3(%arg0: i32) -> (i32, i32) {
    %c0_i32 = arith.constant 0 : i32
    %c0_i32_0 = arith.constant 0 : i32
    %c0_i32_1 = arith.constant 0 : i32
    return %c0_i32, %c0_i32_0 : i32, i32
  }
  func.func @transform_4(%arg0: i32) -> (i32, i32) {
    %c0_i32 = arith.constant 0 : i32
    %c0_i32_0 = arith.constant 0 : i32
    %c0_i32_1 = arith.constant 0 : i32
    return %c0_i32, %c0_i32_0 : i32, i32
  }
  func.func @transform_5(%arg0: i32) -> (i32, i32) {
    %c0_i32 = arith.constant 0 : i32
    %c0_i32_0 = arith.constant 0 : i32
    %c0_i32_1 = arith.constant 0 : i32
    return %c0_i32, %c0_i32_0 : i32, i32
  }
  func.func @transform_6(%arg0: i32) -> (i32, i32) {
    %c0_i32 = arith.constant 0 : i32
    %c0_i32_0 = arith.constant 0 : i32
    %c0_i32_1 = arith.constant 0 : i32
    return %c0_i32, %c0_i32_0 : i32, i32
  }
  func.func @transform_7(%arg0: i32) -> (i32, i32) {
    %c0_i32 = arith.constant 0 : i32
    %c0_i32_0 = arith.constant 0 : i32
    %c0_i32_1 = arith.constant 0 : i32
    return %c0_i32, %c0_i32_0 : i32, i32
  }
  func.func @transform_8(%arg0: i32) -> (i32, i32) {
    %c0_i32 = arith.constant 0 : i32
    %c0_i32_0 = arith.constant 0 : i32
    return %arg0, %c0_i32 : i32, i32
  }
}

</mosaic_0001>

<llo_original>
// kernel: critic_forward.1
$region0: #{critic_forward.1}
  #allocation0 [shape = 'u32[]', space=smem, size = 0x4, offset = 0x4, fixed_abs, tag = 'smem constant byte address 0x4 - core index']
  #allocation1 [shape = 'u32[144,128]{1,0:T(1,128)}', space=vmem, size = 0x12000, scoped, tag = 'internal scratch']
  %s0 = inlined_call_operand.vmem [shape: f32[512,8], index: 0, kind: input, shape index: {}]
  %s1 = inlined_call_operand.vmem [shape: f32[512,2], index: 1, kind: input, shape index: {}]
  %s2 = inlined_call_operand.vmem [shape: bf16[8,384], index: 2, kind: input, shape index: {}]
  %s3 = inlined_call_operand.vmem [shape: bf16[2,384], index: 3, kind: input, shape index: {}]
  %s4 = inlined_call_operand.vmem [shape: bf16[384,512], index: 4, kind: input, shape index: {}]
  %s5 = inlined_call_operand.vmem [shape: bf16[512,512], index: 5, kind: input, shape index: {}]
  %s6 = inlined_call_operand.vmem [shape: bf16[512,128], index: 6, kind: input, shape index: {}]
  %s7 = inlined_call_operand.vmem [shape: f32[8,512], index: 7, kind: input, shape index: {}]
  %s8 = inlined_call_operand.vmem [shape: f32[512,1], index: 8, kind: output, shape index: {}]
  %s9 = sld [smem:[#allocation0]]
  $region65: #{critic_forward.1} parent=0
    _
  %s11 = ssub.s32 1, %s9
  %s12 = scalar_select 0, %s11, %s9
  loop: start=0, step=1, limit=4
  $region2: #{critic_forward.1} parent=0 // loop_pre_header
    _
  $region3: #{critic_forward.1} parent=0 // loop_header
    %s14 = sphi 0, %s18
    %p15 = scmp.ge.s32.totalorder %s14, 4
    %s24 = sphi 0, %s26
    %s27 = sphi 0, %s24
    %s28 = sphi 0, %s27
    %s44 = sphi 0, %s28
    %s50 = sphi 0, %s52
    %s53 = sphi 0, %s50
    %s54 = sphi 0, %s53
    %s70 = sphi 0, %s54
    %s74 = sphi 0, %s74
    %s76 = sphi 0, %s74
    %s77 = sphi 0, %s76
    %s91 = sphi 0, %s77
    %s95 = sphi 0, %s95
    %s97 = sphi 0, %s95
    %s98 = sphi 0, %s97
    %s112 = sphi 0, %s98
    %s116 = sphi 0, %s116
    %s118 = sphi 0, %s116
    %s119 = sphi 0, %s118
    %s133 = sphi 0, %s119
    %s137 = sphi 0, %s137
    %s139 = sphi 0, %s137
    %s140 = sphi 0, %s139
    %s154 = sphi 0, %s140
    %s158 = sphi 0, %s158
    %s160 = sphi 0, %s158
    %s161 = sphi 0, %s160
    %s175 = sphi 0, %s161
    %s179 = sphi 0, %s179
    %s181 = sphi 0, %s179
    %s182 = sphi 0, %s181
    %s196 = sphi 0, %s182
    %s202 = sphi 0, %s204
    %s205 = sphi 0, %s202
    %s206 = sphi 0, %s205
    %s222 = sphi 0, %s206
  $region4: #{critic_forward.1} parent=0 // loop_header_branch
    %17 = sbr.rel (%p15) target = $region8
  $region5: #{critic_forward.1} parent=0 // loop_body
    %s19 = ssub.s32 %s14, 1
    %s20 = ssub.s32 %s14, 2
    %s21 = sadd.s32 %s14, 1
    %s22 = ssub.s32 %s14, %s21
    %p23 = scmp.eq.s32.totalorder %s22, 0
    %s25 = sadd.s32 %s24, 1
    %s26 = scalar_select %p23, %s24, %s25
    %p29 = pneg %p23
    %p30 = scmp.eq.s32.totalorder %s14, 1
    %p31 = por %p29, %p30
    %p32 = scmp.ne.s32.totalorder %s24, %s27
    %p33 = scmp.eq.s32.totalorder %s14, 0
    %p34 = por %p32, %p33
    %p35 = scmp.ne.s32.totalorder %s24, %s27
    %p36 = scmp.eq.s32.totalorder %s19, 1
    %p37 = por %p35, %p36
    %p38 = scmp.ne.s32.totalorder %s27, %s28
    %p39 = scmp.eq.s32.totalorder %s19, 0
    %p40 = por %p38, %p39
    %p41 = scmp.ne.s32.totalorder %s27, %s28
    %p42 = scmp.eq.s32.totalorder %s20, 1
    %p43 = por %p41, %p42
    %p45 = scmp.ne.s32.totalorder %s28, %s44
    %p46 = scmp.eq.s32.totalorder %s20, 0
    %p47 = por %p45, %p46
    %s48 = ssub.s32 %s14, %s21
    %p49 = scmp.eq.s32.totalorder %s48, 0
    %s51 = sadd.s32 %s50, 1
    %s52 = scalar_select %p49, %s50, %s51
    %p55 = pneg %p49
    %p56 = scmp.eq.s32.totalorder %s14, 1
    %p57 = por %p55, %p56
    %p58 = scmp.ne.s32.totalorder %s50, %s53
    %p59 = scmp.eq.s32.totalorder %s14, 0
    %p60 = por %p58, %p59
    %p61 = scmp.ne.s32.totalorder %s50, %s53
    %p62 = scmp.eq.s32.totalorder %s19, 1
    %p63 = por %p61, %p62
    %p64 = scmp.ne.s32.totalorder %s53, %s54
    %p65 = scmp.eq.s32.totalorder %s19, 0
    %p66 = por %p64, %p65
    %p67 = scmp.ne.s32.totalorder %s53, %s54
    %p68 = scmp.eq.s32.totalorder %s20, 1
    %p69 = por %p67, %p68
    %p71 = scmp.ne.s32.totalorder %s54, %s70
    %p72 = scmp.eq.s32.totalorder %s20, 0
    %p73 = por %p71, %p72
    %s75 = sadd.s32 %s74, 1
    %p78 = scmp.eq.s32.totalorder %s14, 1
    %p79 = scmp.ne.s32.totalorder %s74, %s76
    %p80 = scmp.eq.s32.totalorder %s14, 0
    %p81 = por %p79, %p80
    %p82 = scmp.ne.s32.totalorder %s74, %s76
    %p83 = scmp.eq.s32.totalorder %s19, 1
    %p84 = por %p82, %p83
    %p85 = scmp.ne.s32.totalorder %s76, %s77
    %p86 = scmp.eq.s32.totalorder %s19, 0
    %p87 = por %p85, %p86
    %p88 = scmp.ne.s32.totalorder %s76, %s77
    %p89 = scmp.eq.s32.totalorder %s20, 1
    %p90 = por %p88, %p89
    %p92 = scmp.ne.s32.totalorder %s77, %s91
    %p93 = scmp.eq.s32.totalorder %s20, 0
    %p94 = por %p92, %p93
    %s96 = sadd.s32 %s95, 1
    %p99 = scmp.eq.s32.totalorder %s14, 1
    %p100 = scmp.ne.s32.totalorder %s95, %s97
    %p101 = scmp.eq.s32.totalorder %s14, 0
    %p102 = por %p100, %p101
    %p103 = scmp.ne.s32.totalorder %s95, %s97
    %p104 = scmp.eq.s32.totalorder %s19, 1
    %p105 = por %p103, %p104
    %p106 = scmp.ne.s32.totalorder %s97, %s98
    %p107 = scmp.eq.s32.totalorder %s19, 0
    %p108 = por %p106, %p107
    %p109 = scmp.ne.s32.totalorder %s97, %s98
    %p110 = scmp.eq.s32.totalorder %s20, 1
    %p111 = por %p109, %p110
    %p113 = scmp.ne.s32.totalorder %s98, %s112
    %p114 = scmp.eq.s32.totalorder %s20, 0
    %p115 = por %p113, %p114
    %s117 = sadd.s32 %s116, 1
    %p120 = scmp.eq.s32.totalorder %s14, 1
    %p121 = scmp.ne.s32.totalorder %s116, %s118
    %p122 = scmp.eq.s32.totalorder %s14, 0
    %p123 = por %p121, %p122
    %p124 = scmp.ne.s32.totalorder %s116, %s118
    %p125 = scmp.eq.s32.totalorder %s19, 1
    %p126 = por %p124, %p125
    %p127 = scmp.ne.s32.totalorder %s118, %s119
    %p128 = scmp.eq.s32.totalorder %s19, 0
    %p129 = por %p127, %p128
    %p130 = scmp.ne.s32.totalorder %s118, %s119
    %p131 = scmp.eq.s32.totalorder %s20, 1
    %p132 = por %p130, %p131
    %p134 = scmp.ne.s32.totalorder %s119, %s133
    %p135 = scmp.eq.s32.totalorder %s20, 0
    %p136 = por %p134, %p135
    %s138 = sadd.s32 %s137, 1
    %p141 = scmp.eq.s32.totalorder %s14, 1
    %p142 = scmp.ne.s32.totalorder %s137, %s139
    %p143 = scmp.eq.s32.totalorder %s14, 0
    %p144 = por %p142, %p143
    %p145 = scmp.ne.s32.totalorder %s137, %s139
    %p146 = scmp.eq.s32.totalorder %s19, 1
    %p147 = por %p145, %p146
    %p148 = scmp.ne.s32.totalorder %s139, %s140
    %p149 = scmp.eq.s32.totalorder %s19, 0
    %p150 = por %p148, %p149
    %p151 = scmp.ne.s32.totalorder %s139, %s140
    %p152 = scmp.eq.s32.totalorder %s20, 1
    %p153 = por %p151, %p152
    %p155 = scmp.ne.s32.totalorder %s140, %s154
    %p156 = scmp.eq.s32.totalorder %s20, 0
    %p157 = por %p155, %p156
    %s159 = sadd.s32 %s158, 1
    %p162 = scmp.eq.s32.totalorder %s14, 1
    %p163 = scmp.ne.s32.totalorder %s158, %s160
    %p164 = scmp.eq.s32.totalorder %s14, 0
    %p165 = por %p163, %p164
    %p166 = scmp.ne.s32.totalorder %s158, %s160
    %p167 = scmp.eq.s32.totalorder %s19, 1
    %p168 = por %p166, %p167
    %p169 = scmp.ne.s32.totalorder %s160, %s161
    %p170 = scmp.eq.s32.totalorder %s19, 0
    %p171 = por %p169, %p170
    %p172 = scmp.ne.s32.totalorder %s160, %s161
    %p173 = scmp.eq.s32.totalorder %s20, 1
    %p174 = por %p172, %p173
    %p176 = scmp.ne.s32.totalorder %s161, %s175
    %p177 = scmp.eq.s32.totalorder %s20, 0
    %p178 = por %p176, %p177
    %s180 = sadd.s32 %s179, 1
    %p183 = scmp.eq.s32.totalorder %s14, 1
    %p184 = scmp.ne.s32.totalorder %s179, %s181
    %p185 = scmp.eq.s32.totalorder %s14, 0
    %p186 = por %p184, %p185
    %p187 = scmp.ne.s32.totalorder %s179, %s181
    %p188 = scmp.eq.s32.totalorder %s19, 1
    %p189 = por %p187, %p188
    %p190 = scmp.ne.s32.totalorder %s181, %s182
    %p191 = scmp.eq.s32.totalorder %s19, 0
    %p192 = por %p190, %p191
    %p193 = scmp.ne.s32.totalorder %s181, %s182
    %p194 = scmp.eq.s32.totalorder %s20, 1
    %p195 = por %p193, %p194
    %p197 = scmp.ne.s32.totalorder %s182, %s196
    %p198 = scmp.eq.s32.totalorder %s20, 0
    %p199 = por %p197, %p198
    %s200 = ssub.s32 %s14, %s21
    %p201 = scmp.eq.s32.totalorder %s200, 0
    %s203 = sadd.s32 %s202, 1
    %s204 = scalar_select %p201, %s202, %s203
    %p207 = pneg %p201
    %p208 = scmp.eq.s32.totalorder %s14, 1
    %p209 = por %p207, %p208
    %p210 = scmp.ne.s32.totalorder %s202, %s205
    %p211 = scmp.eq.s32.totalorder %s14, 0
    %p212 = por %p210, %p211
    %p213 = scmp.ne.s32.totalorder %s202, %s205
    %p214 = scmp.eq.s32.totalorder %s19, 1
    %p215 = por %p213, %p214
    %p216 = scmp.ne.s32.totalorder %s205, %s206
    %p217 = scmp.eq.s32.totalorder %s19, 0
    %p218 = por %p216, %p217
    %p219 = scmp.ne.s32.totalorder %s205, %s206
    %p220 = scmp.eq.s32.totalorder %s20, 1
    %p221 = por %p219, %p220
    %p223 = scmp.ne.s32.totalorder %s206, %s222
    %p224 = scmp.eq.s32.totalorder %s20, 0
    %p225 = por %p223, %p224
    %p226 = scmp.le.s32.totalorder 1, %s14
    %p227 = scmp.lt.s32.totalorder %s14, 3
    %p228 = pnand %p226, %p227
    %p229 = pneg %p228
    // Predicated region
    $region9: #{critic_forward.1} parent=5 // pred_check
      _
    $region10: #{critic_forward.1} parent=5 // pred_check_branch
      %231 = sbr.rel (%p228) target = $region12
    $region11: #{critic_forward.1} parent=5 // pred_region
      %s232 = ssub.s32 %s14, 1
      // Predicated region
      $region13: #{critic_forward.1} parent=11 // pred_check
        %p233 = pneg %p87
      $region14: #{critic_forward.1} parent=11 // pred_check_branch
        %235 = sbr.rel (%p233) target = $region16
      $region15: #{critic_forward.1} parent=11 // pred_region
        _
      $region16: #{critic_forward.1} parent=11 // pred_fallthru
        _
      // Predicated region
      $region17: #{critic_forward.1} parent=11 // pred_check
        %p236 = pneg %p108
      $region18: #{critic_forward.1} parent=11 // pred_check_branch
        %238 = sbr.rel (%p236) target = $region20
      $region19: #{critic_forward.1} parent=11 // pred_region
        _
      $region20: #{critic_forward.1} parent=11 // pred_fallthru
        _
      // Predicated region
      $region21: #{critic_forward.1} parent=11 // pred_check
        %p239 = pneg %p129
      $region22: #{critic_forward.1} parent=11 // pred_check_branch
        %241 = sbr.rel (%p239) target = $region24
      $region23: #{critic_forward.1} parent=11 // pred_region
        _
      $region24: #{critic_forward.1} parent=11 // pred_fallthru
        _
      // Predicated region
      $region25: #{critic_forward.1} parent=11 // pred_check
        %p242 = pneg %p150
      $region26: #{critic_forward.1} parent=11 // pred_check_branch
        %244 = sbr.rel (%p242) target = $region28
      $region27: #{critic_forward.1} parent=11 // pred_region
        _
      $region28: #{critic_forward.1} parent=11 // pred_fallthru
        _
      // Predicated region
      $region29: #{critic_forward.1} parent=11 // pred_check
        %p245 = pneg %p171
      $region30: #{critic_forward.1} parent=11 // pred_check_branch
        %247 = sbr.rel (%p245) target = $region32
      $region31: #{critic_forward.1} parent=11 // pred_region
        _
      $region32: #{critic_forward.1} parent=11 // pred_fallthru
        _
      // Predicated region
      $region33: #{critic_forward.1} parent=11 // pred_check
        %p248 = pneg %p192
      $region34: #{critic_forward.1} parent=11 // pred_check_branch
        %250 = sbr.rel (%p248) target = $region36
      $region35: #{critic_forward.1} parent=11 // pred_region
        _
      $region36: #{critic_forward.1} parent=11 // pred_fallthru
        _
    $region12: #{critic_forward.1} parent=5 // pred_fallthru
      _
    %p251 = scmp.lt.s32.totalorder %s14, 2
    // Predicated region
    $region37: #{critic_forward.1} parent=5 // pred_check
      %p252 = pneg %p251
    $region38: #{critic_forward.1} parent=5 // pred_check_branch
      %254 = sbr.rel (%p252) target = $region40
    $region39: #{critic_forward.1} parent=5 // pred_region
      // Predicated region
      $region41: #{critic_forward.1} parent=39 // pred_check
        %p255 = pneg %p34
      $region42: #{critic_forward.1} parent=39 // pred_check_branch
        %257 = sbr.rel (%p255) target = $region44
      $region43: #{critic_forward.1} parent=39 // pred_region
        %s258 = smul.u32 32, %s14
        %p259 = scmp.lt.s32.totalorder %s258, 63
        %s260 = scalar_select %p259, %s258, 63
        %s261 = smul.addr %s260, 8
        %s262 = scalar_lea.vmem %s0, %s261
        %s263 = smul.u32 32, %s14
      $region44: #{critic_forward.1} parent=39 // pred_fallthru
        _
      // Predicated region
      $region45: #{critic_forward.1} parent=39 // pred_check
        %p264 = pneg %p60
      $region46: #{critic_forward.1} parent=39 // pred_check_branch
        %266 = sbr.rel (%p264) target = $region48
      $region47: #{critic_forward.1} parent=39 // pred_region
        %s267 = smul.u32 32, %s14
        %p268 = scmp.lt.s32.totalorder %s267, 63
        %s269 = scalar_select %p268, %s267, 63
        %s270 = smul.addr %s269, 8
        %s271 = scalar_lea.vmem %s1, %s270
        %s272 = smul.u32 32, %s14
      $region48: #{critic_forward.1} parent=39 // pred_fallthru
        _
    $region40: #{critic_forward.1} parent=5 // pred_fallthru
      _
    %p273 = scmp.le.s32.totalorder 1, %s14
    %p274 = scmp.lt.s32.totalorder %s14, 3
    %p275 = pnand %p273, %p274
    %p276 = pneg %p275
    // Predicated region
    $region49: #{critic_forward.1} parent=5 // pred_check
      _
    $region50: #{critic_forward.1} parent=5 // pred_check_branch
      %278 = sbr.rel (%p275) target = $region52
    $region51: #{critic_forward.1} parent=5 // pred_region
      %s279 = ssub.s32 %s14, 1
      %s280 = smul.u32 32, %s19
      %p281 = scmp.lt.s32.totalorder %s280, 63
      %s282 = scalar_select %p281, %s280, 63
      %s283 = smul.addr %s282, 8
      %s284 = scalar_lea.vmem %s0, %s283
      %p285 = pneg %p40
      %p286 = pneg %p37
      %s287 = smul.u32 32, %s19
      %p288 = scmp.lt.s32.totalorder %s287, 63
      %s289 = scalar_select %p288, %s287, 63
      %s290 = smul.addr %s289, 8
      %s291 = scalar_lea.vmem %s1, %s290
      %p292 = pneg %p66
      %p293 = pneg %p63
      %p294 = pneg %p87
      %p295 = pneg %p84
      %p296 = pneg %p108
      %p297 = pneg %p105
      %p298 = pneg %p129
      %p299 = pneg %p126
      %p300 = pneg %p150
      %p301 = pneg %p147
      %p302 = pneg %p171
      %p303 = pneg %p168
      %p304 = pneg %p192
      %p305 = pneg %p189
      %p306 = pneg %p218
      %p307 = pneg %p215
      %s308 = smul.u32 32, %s19
      %p309 = scmp.lt.s32.totalorder %s308, 63
      %s310 = scalar_select %p309, %s308, 63
      %s311 = smul.addr %s310, 8
      %s312 = scalar_lea.vmem %s8, %s311
      %s313 = smul.u32 32, %s19
      %p314 = scmp.lt.s32.totalorder %s313, 63
      %s315 = scalar_select %p314, %s313, 63
      %s316 = smul.addr %s315, 8
      %s317 = scalar_lea.vmem %s0, %s316
      %s318 = smul.u32 32, %s19
      %s319 = smul.u32 32, %s19
      %p320 = scmp.lt.s32.totalorder %s319, 63
      %s321 = scalar_select %p320, %s319, 63
      %s322 = smul.addr %s321, 8
      %s323 = scalar_lea.vmem %s1, %s322
      %s324 = smul.u32 32, %s19
      %s325 = smul.u32 32, %s19
      %p326 = scmp.lt.s32.totalorder %s325, 63
      %s327 = scalar_select %p326, %s325, 63
      %s328 = smul.addr %s327, 8
      %s329 = scalar_lea.vmem %s8, %s328
      %s330 = smul.u32 32, %s19
      %v332 = vld [vmem:[%s317] sm:$0xff]
      %v333 = vld [vmem:[%s317 + $0x8] sm:$0xff]
      %v334 = vld [vmem:[%s317 + $0x10] sm:$0xff]
      %v335 = vld [vmem:[%s317 + $0x18] sm:$0xff]
      %v336 = vld [vmem:[%s317 + $0x20] sm:$0xff]
      %v337 = vld [vmem:[%s317 + $0x28] sm:$0xff]
      %v338 = vld [vmem:[%s317 + $0x30] sm:$0xff]
      %v339 = vld [vmem:[%s317 + $0x38] sm:$0xff]
      %v340 = vld [vmem:[%s317 + $0x40] sm:$0xff]
      %v341 = vld [vmem:[%s317 + $0x48] sm:$0xff]
      %v342 = vld [vmem:[%s317 + $0x50] sm:$0xff]
      %v343 = vld [vmem:[%s317 + $0x58] sm:$0xff]
      %v344 = vld [vmem:[%s317 + $0x60] sm:$0xff]
      %v345 = vld [vmem:[%s317 + $0x68] sm:$0xff]
      %v346 = vld [vmem:[%s317 + $0x70] sm:$0xff]
      %v347 = vld [vmem:[%s317 + $0x78] sm:$0xff]
      %v348 = vld [vmem:[%s317 + $0x80] sm:$0xff]
      %v349 = vld [vmem:[%s317 + $0x88] sm:$0xff]
      %v350 = vld [vmem:[%s317 + $0x90] sm:$0xff]
      %v351 = vld [vmem:[%s317 + $0x98] sm:$0xff]
      %v352 = vld [vmem:[%s317 + $0xa0] sm:$0xff]
      %v353 = vld [vmem:[%s317 + $0xa8] sm:$0xff]
      %v354 = vld [vmem:[%s317 + $0xb0] sm:$0xff]
      %v355 = vld [vmem:[%s317 + $0xb8] sm:$0xff]
      %v356 = vld [vmem:[%s317 + $0xc0] sm:$0xff]
      %v357 = vld [vmem:[%s317 + $0xc8] sm:$0xff]
      %v358 = vld [vmem:[%s317 + $0xd0] sm:$0xff]
      %v359 = vld [vmem:[%s317 + $0xd8] sm:$0xff]
      %v360 = vld [vmem:[%s317 + $0xe0] sm:$0xff]
      %v361 = vld [vmem:[%s317 + $0xe8] sm:$0xff]
      %v362 = vld [vmem:[%s317 + $0xf0] sm:$0xff]
      %v363 = vld [vmem:[%s317 + $0xf8] sm:$0xff]
      %v364 = vpack.c.bf16 %v333, %v332
      %v365 = vpack.c.bf16 %v335, %v334
      %v366 = vpack.c.bf16 %v337, %v336
      %v367 = vpack.c.bf16 %v339, %v338
      %v368 = vpack.c.bf16 %v341, %v340
      %v369 = vpack.c.bf16 %v343, %v342
      %v370 = vpack.c.bf16 %v345, %v344
      %v371 = vpack.c.bf16 %v347, %v346
      %v372 = vpack.c.bf16 %v349, %v348
      %v373 = vpack.c.bf16 %v351, %v350
      %v374 = vpack.c.bf16 %v353, %v352
      %v375 = vpack.c.bf16 %v355, %v354
      %v376 = vpack.c.bf16 %v357, %v356
      %v377 = vpack.c.bf16 %v359, %v358
      %v378 = vpack.c.bf16 %v361, %v360
      %v379 = vpack.c.bf16 %v363, %v362
      %v380 = vld [vmem:[%s323] sm:$0xff]
      %v381 = vld [vmem:[%s323 + $0x8] sm:$0xff]
      %v382 = vld [vmem:[%s323 + $0x10] sm:$0xff]
      %v383 = vld [vmem:[%s323 + $0x18] sm:$0xff]
      %v384 = vld [vmem:[%s323 + $0x20] sm:$0xff]
      %v385 = vld [vmem:[%s323 + $0x28] sm:$0xff]
      %v386 = vld [vmem:[%s323 + $0x30] sm:$0xff]
      %v387 = vld [vmem:[%s323 + $0x38] sm:$0xff]
      %v388 = vld [vmem:[%s323 + $0x40] sm:$0xff]
      %v389 = vld [vmem:[%s323 + $0x48] sm:$0xff]
      %v390 = vld [vmem:[%s323 + $0x50] sm:$0xff]
      %v391 = vld [vmem:[%s323 + $0x58] sm:$0xff]
      %v392 = vld [vmem:[%s323 + $0x60] sm:$0xff]
      %v393 = vld [vmem:[%s323 + $0x68] sm:$0xff]
      %v394 = vld [vmem:[%s323 + $0x70] sm:$0xff]
      %v395 = vld [vmem:[%s323 + $0x78] sm:$0xff]
      %v396 = vld [vmem:[%s323 + $0x80] sm:$0xff]
      %v397 = vld [vmem:[%s323 + $0x88] sm:$0xff]
      %v398 = vld [vmem:[%s323 + $0x90] sm:$0xff]
      %v399 = vld [vmem:[%s323 + $0x98] sm:$0xff]
      %v400 = vld [vmem:[%s323 + $0xa0] sm:$0xff]
      %v401 = vld [vmem:[%s323 + $0xa8] sm:$0xff]
      %v402 = vld [vmem:[%s323 + $0xb0] sm:$0xff]
      %v403 = vld [vmem:[%s323 + $0xb8] sm:$0xff]
      %v404 = vld [vmem:[%s323 + $0xc0] sm:$0xff]
      %v405 = vld [vmem:[%s323 + $0xc8] sm:$0xff]
      %v406 = vld [vmem:[%s323 + $0xd0] sm:$0xff]
      %v407 = vld [vmem:[%s323 + $0xd8] sm:$0xff]
      %v408 = vld [vmem:[%s323 + $0xe0] sm:$0xff]
      %v409 = vld [vmem:[%s323 + $0xe8] sm:$0xff]
      %v410 = vld [vmem:[%s323 + $0xf0] sm:$0xff]
      %v411 = vld [vmem:[%s323 + $0xf8] sm:$0xff]
      %v412 = vpack.c.bf16 %v381, %v380
      %v413 = vpack.c.bf16 %v383, %v382
      %v414 = vpack.c.bf16 %v385, %v384
      %v415 = vpack.c.bf16 %v387, %v386
      %v416 = vpack.c.bf16 %v389, %v388
      %v417 = vpack.c.bf16 %v391, %v390
      %v418 = vpack.c.bf16 %v393, %v392
      %v419 = vpack.c.bf16 %v395, %v394
      %v420 = vpack.c.bf16 %v397, %v396
      %v421 = vpack.c.bf16 %v399, %v398
      %v422 = vpack.c.bf16 %v401, %v400
      %v423 = vpack.c.bf16 %v403, %v402
      %v424 = vpack.c.bf16 %v405, %v404
      %v425 = vpack.c.bf16 %v407, %v406
      %v426 = vpack.c.bf16 %v409, %v408
      %v427 = vpack.c.bf16 %v411, %v410
      %v428 = vld [vmem:[%s2] sm:$0xff]
      %v429 = vld [vmem:[%s2 + $0x8] sm:$0xf]
      %v430 = vld [vmem:[%s3] sm:$0x7]
      %v433 = vunpack.c.l.s4 1966171168
      %v434 = vunpack.c.0.s8 %v433
      %v435 = vlaneseq
      %v436 = vshrl.u32 %v435, 7
      %v437 = vsub.s32 %v434, %v436
      %v438 = vrot.slane %v430, %v437
      %v439 = vcombine.high %v438, %v438
      %v441 = vunpack.c.l.s4 1966171168
      %v442 = vunpack.c.0.s8 %v441
      %v443 = vlaneseq
      %v444 = vshrl.u32 %v443, 7
      %v445 = vsub.s32 %v442, %v444
      %v446 = vrot.slane %v438, %v445
      %v448 = vunpack.c.l.s4 1966171168
      %v449 = vunpack.c.0.s8 %v448
      %v450 = vlaneseq
      %v451 = vshrl.u32 %v450, 7
      %v452 = vsub.s32 %v449, %v451
      %v453 = vrot.slane %v439, %v452
      %v454 = vcombine.high %v446, %v446
      %vm455 = vcmask 15360
      %v457 = vsel %vm455, %v412, 0
      %v460 = vsel %vm455, %v413, 0
      %v463 = vsel %vm455, %v414, 0
      %v466 = vsel %vm455, %v415, 0
      %v469 = vsel %vm455, %v416, 0
      %v472 = vsel %vm455, %v417, 0
      %v475 = vsel %vm455, %v418, 0
      %v478 = vsel %vm455, %v419, 0
      %v481 = vsel %vm455, %v420, 0
      %v484 = vsel %vm455, %v421, 0
      %v487 = vsel %vm455, %v422, 0
      %v490 = vsel %vm455, %v423, 0
      %v493 = vsel %vm455, %v424, 0
      %v496 = vsel %vm455, %v425, 0
      %v499 = vsel %vm455, %v426, 0
      %v502 = vsel %vm455, %v427, 0
      %vm504 = vcmask 1040384
      %v506 = vsel %vm504, %v446, 0
      %v509 = vsel %vm504, %v453, 0
      %v512 = vsel %vm504, %v454, 0
      %514 = vmatprep.subr.bf16.mxu0 %v509
      %515 = vmatpush1.bf16.msra.mxu0 %v506
      %516 = vmatprep.subr.bf16.mxu0 0
      %517 = vmatpush1.bf16.msra.mxu0 0
      %518 = vmatprep.subr.bf16.mxu0 0
      %519 = vmatpush1.bf16.msra.mxu0 0
      %520 = vmatprep.subr.bf16.mxu0 0
      %521 = vmatpush1.bf16.msra.mxu0 0
      %522 = vmatprep.subr.bf16.mxu0 0
      %523 = vmatpush1.bf16.msra.mxu0 0
      %524 = vmatprep.subr.bf16.mxu0 0
      %525 = vmatpush1.bf16.msra.mxu0 0
      %526 = vmatprep.subr.bf16.mxu0 0
      %527 = vmatpush1.bf16.msra.mxu0 0
      %528 = vmatprep.subr.bf16.mxu0 0
      %529 = vmatpush1.bf16.msra.mxu0 0
      %530 = vmatprep.subr.bf16.mxu0 0
      %531 = vmatpush1.bf16.msra.mxu0 0
      %532 = vmatprep.subr.bf16.mxu0 0
      %533 = vmatpush1.bf16.msra.mxu0 0
      %534 = vmatprep.subr.bf16.mxu0 0
      %535 = vmatpush1.bf16.msra.mxu0 0
      %536 = vmatprep.subr.bf16.mxu0 0
      %537 = vmatpush1.bf16.msra.mxu0 0
      %538 = vmatprep.subr.bf16.mxu0 0
      %539 = vmatpush1.bf16.msra.mxu0 0
      %540 = vmatprep.subr.bf16.mxu0 0
      %541 = vmatpush1.bf16.msra.mxu0 0
      %542 = vmatprep.subr.bf16.mxu0 0
      %543 = vmatpush1.bf16.msra.mxu0 0
      %544 = vmatprep.subr.bf16.mxu0 0
      %545 = vmatpush1.bf16.msra.mxu0 0
      %546 = vmatprep.mubr.bf16.mxu0 0
      %547 = vmatmul.mubr.bf16.gmra.mrb[0].mxu0 %v457
      %v548 = vpop.f32.mrb[0].mxu0
      %v549 = vadd.f32 0.0, %v548
      %v550 = vpop.f32.mrb[0].mxu0
      %v551 = vadd.f32 0.0, %v550
      %v552 = vpop.f32.mrb[0].mxu0
      %v553 = vadd.f32 0.0, %v552
      %v554 = vpop.f32.mrb[0].mxu0
      %v555 = vadd.f32 0.0, %v554
      %556 = vmatprep.mubr.bf16.mxu0 0
      %557 = vmatmul.mubr.bf16.gmra.mrb[0].mxu0 %v460
      %v558 = vpop.f32.mrb[0].mxu0
      %v559 = vadd.f32 0.0, %v558
      %v560 = vpop.f32.mrb[0].mxu0
      %v561 = vadd.f32 0.0, %v560
      %v562 = vpop.f32.mrb[0].mxu0
      %v563 = vadd.f32 0.0, %v562
      %v564 = vpop.f32.mrb[0].mxu0
      %v565 = vadd.f32 0.0, %v564
      %566 = vmatprep.mubr.bf16.mxu0 0
      %567 = vmatmul.mubr.bf16.gmra.mrb[0].mxu0 %v463
      %v568 = vpop.f32.mrb[0].mxu0
      %v569 = vadd.f32 0.0, %v568
      %v570 = vpop.f32.mrb[0].mxu0
      %v571 = vadd.f32 0.0, %v570
      %v572 = vpop.f32.mrb[0].mxu0
      %v573 = vadd.f32 0.0, %v572
      %v574 = vpop.f32.mrb[0].mxu0
      %v575 = vadd.f32 0.0, %v574
      %576 = vmatprep.mubr.bf16.mxu0 0
      %577 = vmatmul.mubr.bf16.gmra.mrb[0].mxu0 %v466
      %v578 = vpop.f32.mrb[0].mxu0
      %v579 = vadd.f32 0.0, %v578
      %v580 = vpop.f32.mrb[0].mxu0
      %v581 = vadd.f32 0.0, %v580
      %v582 = vpop.f32.mrb[0].mxu0
      %v583 = vadd.f32 0.0, %v582
      %v584 = vpop.f32.mrb[0].mxu0
      %v585 = vadd.f32 0.0, %v584
      %586 = vmatprep.mubr.bf16.mxu0 0
      %587 = vmatmul.mubr.bf16.gmra.mrb[0].mxu0 %v469
      %v588 = vpop.f32.mrb[0].mxu0
      %v589 = vadd.f32 0.0, %v588
      %v590 = vpop.f32.mrb[0].mxu0
      %v591 = vadd.f32 0.0, %v590
      %v592 = vpop.f32.mrb[0].mxu0
      %v593 = vadd.f32 0.0, %v592
      %v594 = vpop.f32.mrb[0].mxu0
      %v595 = vadd.f32 0.0, %v594
      %596 = vmatprep.mubr.bf16.mxu0 0
      %597 = vmatmul.mubr.bf16.gmra.mrb[0].mxu0 %v472
      %v598 = vpop.f32.mrb[0].mxu0
      %v599 = vadd.f32 0.0, %v598
      %v600 = vpop.f32.mrb[0].mxu0
      %v601 = vadd.f32 0.0, %v600
      %v602 = vpop.f32.mrb[0].mxu0
      %v603 = vadd.f32 0.0, %v602
      %v604 = vpop.f32.mrb[0].mxu0
      %v605 = vadd.f32 0.0, %v604
      %606 = vmatprep.mubr.bf16.mxu0 0
      %607 = vmatmul.mubr.bf16.gmra.mrb[0].mxu0 %v475
      %v608 = vpop.f32.mrb[0].mxu0
      %v609 = vadd.f32 0.0, %v608
      %v610 = vpop.f32.mrb[0].mxu0
      %v611 = vadd.f32 0.0, %v610
      %v612 = vpop.f32.mrb[0].mxu0
      %v613 = vadd.f32 0.0, %v612
      %v614 = vpop.f32.mrb[0].mxu0
      %v615 = vadd.f32 0.0, %v614
      %616 = vmatprep.mubr.bf16.mxu0 0
      %617 = vmatmul.mubr.bf16.gmra.mrb[0].mxu0 %v478
      %v618 = vpop.f32.mrb[0].mxu0
      %v619 = vadd.f32 0.0, %v618
      %v620 = vpop.f32.mrb[0].mxu0
      %v621 = vadd.f32 0.0, %v620
      %v622 = vpop.f32.mrb[0].mxu0
      %v623 = vadd.f32 0.0, %v622
      %v624 = vpop.f32.mrb[0].mxu0
      %v625 = vadd.f32 0.0, %v624
      %626 = vmatprep.mubr.bf16.mxu0 0
      %627 = vmatmul.mubr.bf16.gmra.mrb[0].mxu0 %v481
      %v628 = vpop.f32.mrb[0].mxu0
      %v629 = vadd.f32 0.0, %v628
      %v630 = vpop.f32.mrb[0].mxu0
      %v631 = vadd.f32 0.0, %v630
      %v632 = vpop.f32.mrb[0].mxu0
      %v633 = vadd.f32 0.0, %v632
      %v634 = vpop.f32.mrb[0].mxu0
      %v635 = vadd.f32 0.0, %v634
      %636 = vmatprep.mubr.bf16.mxu0 0
      %637 = vmatmul.mubr.bf16.gmra.mrb[0].mxu0 %v484
      %v638 = vpop.f32.mrb[0].mxu0
      %v639 = vadd.f32 0.0, %v638
      %v640 = vpop.f32.mrb[0].mxu0
      %v641 = vadd.f32 0.0, %v640
      %v642 = vpop.f32.mrb[0].mxu0
      %v643 = vadd.f32 0.0, %v642
      %v644 = vpop.f32.mrb[0].mxu0
      %v645 = vadd.f32 0.0, %v644
      %646 = vmatprep.mubr.bf16.mxu0 0
      %647 = vmatmul.mubr.bf16.gmra.mrb[0].mxu0 %v487
      %v648 = vpop.f32.mrb[0].mxu0
      %v649 = vadd.f32 0.0, %v648
      %v650 = vpop.f32.mrb[0].mxu0
      %v651 = vadd.f32 0.0, %v650
      %v652 = vpop.f32.mrb[0].mxu0
      %v653 = vadd.f32 0.0, %v652
      %v654 = vpop.f32.mrb[0].mxu0
      %v655 = vadd.f32 0.0, %v654
      %656 = vmatprep.mubr.bf16.mxu0 0
      %657 = vmatmul.mubr.bf16.gmra.mrb[0].mxu0 %v490
      %v658 = vpop.f32.mrb[0].mxu0
      %v659 = vadd.f32 0.0, %v658
      %v660 = vpop.f32.mrb[0].mxu0
      %v661 = vadd.f32 0.0, %v660
      %v662 = vpop.f32.mrb[0].mxu0
      %v663 = vadd.f32 0.0, %v662
      %v664 = vpop.f32.mrb[0].mxu0
      %v665 = vadd.f32 0.0, %v664
      %666 = vmatprep.mubr.bf16.mxu0 0
      %667 = vmatmul.mubr.bf16.gmra.mrb[0].mxu0 %v493
      %v668 = vpop.f32.mrb[0].mxu0
      %v669 = vadd.f32 0.0, %v668
      %v670 = vpop.f32.mrb[0].mxu0
      %v671 = vadd.f32 0.0, %v670
      %v672 = vpop.f32.mrb[0].mxu0
      %v673 = vadd.f32 0.0, %v672
      %v674 = vpop.f32.mrb[0].mxu0
      %v675 = vadd.f32 0.0, %v674
      %676 = vmatprep.mubr.bf16.mxu0 0
      %677 = vmatmul.mubr.bf16.gmra.mrb[0].mxu0 %v496
      %v678 = vpop.f32.mrb[0].mxu0
      %v679 = vadd.f32 0.0, %v678
      %v680 = vpop.f32.mrb[0].mxu0
      %v681 = vadd.f32 0.0, %v680
      %v682 = vpop.f32.mrb[0].mxu0
      %v683 = vadd.f32 0.0, %v682
      %v684 = vpop.f32.mrb[0].mxu0
      %v685 = vadd.f32 0.0, %v684
      %686 = vmatprep.mubr.bf16.mxu0 0
      %687 = vmatmul.mubr.bf16.gmra.mrb[0].mxu0 %v499
      %v688 = vpop.f32.mrb[0].mxu0
      %v689 = vadd.f32 0.0, %v688
      %v690 = vpop.f32.mrb[0].mxu0
      %v691 = vadd.f32 0.0, %v690
      %v692 = vpop.f32.mrb[0].mxu0
      %v693 = vadd.f32 0.0, %v692
      %v694 = vpop.f32.mrb[0].mxu0
      %v695 = vadd.f32 0.0, %v694
      %696 = vmatprep.mubr.bf16.mxu0 0
      %697 = vmatmul.mubr.bf16.gmra.mrb[0].mxu0 %v502
      %v698 = vpop.f32.mrb[0].mxu0
      %v699 = vadd.f32 0.0, %v698
      %v700 = vpop.f32.mrb[0].mxu0
      %v701 = vadd.f32 0.0, %v700
      %v702 = vpop.f32.mrb[0].mxu0
      %v703 = vadd.f32 0.0, %v702
      %v704 = vpop.f32.mrb[0].mxu0
      %v705 = vadd.f32 0.0, %v704
      %706 = vdwg.mxu0
      %707 = vmatprep.subr.bf16.mxu0 0
      %708 = vmatpush1.bf16.msra.mxu0 %v512
      %709 = vmatprep.subr.bf16.mxu0 0
      %710 = vmatpush1.bf16.msra.mxu0 0
      %711 = vmatprep.subr.bf16.mxu0 0
      %712 = vmatpush1.bf16.msra.mxu0 0
      %713 = vmatprep.subr.bf16.mxu0 0
      %714 = vmatpush1.bf16.msra.mxu0 0
      %715 = vmatprep.subr.bf16.mxu0 0
      %716 = vmatpush1.bf16.msra.mxu0 0
      %717 = vmatprep.subr.bf16.mxu0 0
      %718 = vmatpush1.bf16.msra.mxu0 0
      %719 = vmatprep.subr.bf16.mxu0 0
      %720 = vmatpush1.bf16.msra.mxu0 0
      %721 = vmatprep.subr.bf16.mxu0 0
      %722 = vmatpush1.bf16.msra.mxu0 0
      %723 = vmatprep.subr.bf16.mxu0 0
      %724 = vmatpush1.bf16.msra.mxu0 0
      %725 = vmatprep.subr.bf16.mxu0 0
      %726 = vmatpush1.bf16.msra.mxu0 0
      %727 = vmatprep.subr.bf16.mxu0 0
      %728 = vmatpush1.bf16.msra.mxu0 0
      %729 = vmatprep.subr.bf16.mxu0 0
      %730 = vmatpush1.bf16.msra.mxu0 0
      %731 = vmatprep.subr.bf16.mxu0 0
      %732 = vmatpush1.bf16.msra.mxu0 0
      %733 = vmatprep.subr.bf16.mxu0 0
      %734 = vmatpush1.bf16.msra.mxu0 0
      %735 = vmatprep.subr.bf16.mxu0 0
      %736 = vmatpush1.bf16.msra.mxu0 0
      %737 = vmatprep.subr.bf16.mxu0 0
      %738 = vmatpush1.bf16.msra.mxu0 0
      %739 = vmatprep.mubr.bf16.mxu0 0
      %740 = vmatmul.mubr.bf16.gmra.mrb[0].mxu0 %v457
      %v741 = vpop.f32.mrb[0].mxu0
      %v742 = vadd.f32 0.0, %v741
      %v743 = vpop.f32.mrb[0].mxu0
      %v744 = vpop.f32.mrb[0].mxu0
      %v745 = vadd.f32 0.0, %v744
      %v746 = vpop.f32.mrb[0].mxu0
      %747 = vmatprep.mubr.bf16.mxu0 0
      %748 = vmatmul.mubr.bf16.gmra.mrb[0].mxu0 %v460
      %v749 = vpop.f32.mrb[0].mxu0
      %v750 = vadd.f32 0.0, %v749
      %v751 = vpop.f32.mrb[0].mxu0
      %v752 = vpop.f32.mrb[0].mxu0
      %v753 = vadd.f32 0.0, %v752
      %v754 = vpop.f32.mrb[0].mxu0
      %755 = vmatprep.mubr.bf16.mxu0 0
      %756 = vmatmul.mubr.bf16.gmra.mrb[0].mxu0 %v463
      %v757 = vpop.f32.mrb[0].mxu0
      %v758 = vadd.f32 0.0, %v757
      %v759 = vpop.f32.mrb[0].mxu0
      %v760 = vpop.f32.mrb[0].mxu0
      %v761 = vadd.f32 0.0, %v760
      %v762 = vpop.f32.mrb[0].mxu0
      %763 = vmatprep.mubr.bf16.mxu0 0
      %764 = vmatmul.mubr.bf16.gmra.mrb[0].mxu0 %v466
      %v765 = vpop.f32.mrb[0].mxu0
      %v766 = vadd.f32 0.0, %v765
      %v767 = vpop.f32.mrb[0].mxu0
      %v768 = vpop.f32.mrb[0].mxu0
      %v769 = vadd.f32 0.0, %v768
      %v770 = vpop.f32.mrb[0].mxu0
      %771 = vmatprep.mubr.bf16.mxu0 0
      %772 = vmatmul.mubr.bf16.gmra.mrb[0].mxu0 %v469
      %v773 = vpop.f32.mrb[0].mxu0
      %v774 = vadd.f32 0.0, %v773
      %v775 = vpop.f32.mrb[0].mxu0
      %v776 = vpop.f32.mrb[0].mxu0
      %v777 = vadd.f32 0.0, %v776
      %v778 = vpop.f32.mrb[0].mxu0
      %779 = vmatprep.mubr.bf16.mxu0 0
      %780 = vmatmul.mubr.bf16.gmra.mrb[0].mxu0 %v472
      %v781 = vpop.f32.mrb[0].mxu0
      %v782 = vadd.f32 0.0, %v781
      %v783 = vpop.f32.mrb[0].mxu0
      %v784 = vpop.f32.mrb[0].mxu0
      %v785 = vadd.f32 0.0, %v784
      %v786 = vpop.f32.mrb[0].mxu0
      %787 = vmatprep.mubr.bf16.mxu0 0
      %788 = vmatmul.mubr.bf16.gmra.mrb[0].mxu0 %v475
      %v789 = vpop.f32.mrb[0].mxu0
      %v790 = vadd.f32 0.0, %v789
      %v791 = vpop.f32.mrb[0].mxu0
      %v792 = vpop.f32.mrb[0].mxu0
      %v793 = vadd.f32 0.0, %v792
      %v794 = vpop.f32.mrb[0].mxu0
      %795 = vmatprep.mubr.bf16.mxu0 0
      %796 = vmatmul.mubr.bf16.gmra.mrb[0].mxu0 %v478
      %v797 = vpop.f32.mrb[0].mxu0
      %v798 = vadd.f32 0.0, %v797
      %v799 = vpop.f32.mrb[0].mxu0
      %v800 = vpop.f32.mrb[0].mxu0
      %v801 = vadd.f32 0.0, %v800
      %v802 = vpop.f32.mrb[0].mxu0
      %803 = vmatprep.mubr.bf16.mxu0 0
      %804 = vmatmul.mubr.bf16.gmra.mrb[0].mxu0 %v481
      %v805 = vpop.f32.mrb[0].mxu0
      %v806 = vadd.f32 0.0, %v805
      %v807 = vpop.f32.mrb[0].mxu0
      %v808 = vpop.f32.mrb[0].mxu0
      %v809 = vadd.f32 0.0, %v808
      %v810 = vpop.f32.mrb[0].mxu0
      %811 = vmatprep.mubr.bf16.mxu0 0
      %812 = vmatmul.mubr.bf16.gmra.mrb[0].mxu0 %v484
      %v813 = vpop.f32.mrb[0].mxu0
      %v814 = vadd.f32 0.0, %v813
      %v815 = vpop.f32.mrb[0].mxu0
      %v816 = vpop.f32.mrb[0].mxu0
      %v817 = vadd.f32 0.0, %v816
      %v818 = vpop.f32.mrb[0].mxu0
      %819 = vmatprep.mubr.bf16.mxu0 0
      %820 = vmatmul.mubr.bf16.gmra.mrb[0].mxu0 %v487
      %v821 = vpop.f32.mrb[0].mxu0
      %v822 = vadd.f32 0.0, %v821
      %v823 = vpop.f32.mrb[0].mxu0
      %v824 = vpop.f32.mrb[0].mxu0
      %v825 = vadd.f32 0.0, %v824
      %v826 = vpop.f32.mrb[0].mxu0
      %827 = vmatprep.mubr.bf16.mxu0 0
      %828 = vmatmul.mubr.bf16.gmra.mrb[0].mxu0 %v490
      %v829 = vpop.f32.mrb[0].mxu0
      %v830 = vadd.f32 0.0, %v829
      %v831 = vpop.f32.mrb[0].mxu0
      %v832 = vpop.f32.mrb[0].mxu0
      %v833 = vadd.f32 0.0, %v832
      %v834 = vpop.f32.mrb[0].mxu0
      %835 = vmatprep.mubr.bf16.mxu0 0
      %836 = vmatmul.mubr.bf16.gmra.mrb[0].mxu0 %v493
      %v837 = vpop.f32.mrb[0].mxu0
      %v838 = vadd.f32 0.0, %v837
      %v839 = vpop.f32.mrb[0].mxu0
      %v840 = vpop.f32.mrb[0].mxu0
      %v841 = vadd.f32 0.0, %v840
      %v842 = vpop.f32.mrb[0].mxu0
      %843 = vmatprep.mubr.bf16.mxu0 0
      %844 = vmatmul.mubr.bf16.gmra.mrb[0].mxu0 %v496
      %v845 = vpop.f32.mrb[0].mxu0
      %v846 = vadd.f32 0.0, %v845
      %v847 = vpop.f32.mrb[0].mxu0
      %v848 = vpop.f32.mrb[0].mxu0
      %v849 = vadd.f32 0.0, %v848
      %v850 = vpop.f32.mrb[0].mxu0
      %851 = vmatprep.mubr.bf16.mxu0 0
      %852 = vmatmul.mubr.bf16.gmra.mrb[0].mxu0 %v499
      %v853 = vpop.f32.mrb[0].mxu0
      %v854 = vadd.f32 0.0, %v853
      %v855 = vpop.f32.mrb[0].mxu0
      %v856 = vpop.f32.mrb[0].mxu0
      %v857 = vadd.f32 0.0, %v856
      %v858 = vpop.f32.mrb[0].mxu0
      %859 = vmatprep.mubr.bf16.mxu0 0
      %860 = vmatmul.mubr.bf16.gmra.mrb[0].mxu0 %v502
      %v861 = vpop.f32.mrb[0].mxu0
      %v862 = vadd.f32 0.0, %v861
      %v863 = vpop.f32.mrb[0].mxu0
      %v864 = vpop.f32.mrb[0].mxu0
      %v865 = vadd.f32 0.0, %v864
      %v866 = vpop.f32.mrb[0].mxu0
      %867 = vdwg.mxu0
      %v870 = vunpack.c.l.b16 %v428
      %v871 = vunpack.c.h.b16 %v428
      %v872 = vunpack.c.l.b16 %v429
      %v873 = vpack.c.b16 %v870, %v870
      %v874 = vpack.c.b16 %v871, %v871
      %v875 = vpack.c.b16 %v872, %v872
      %vm876 = vcmask 64512
      %v878 = vsel %vm876, %v364, 0
      %v881 = vsel %vm876, %v365, 0
      %v884 = vsel %vm876, %v366, 0
      %v887 = vsel %vm876, %v367, 0
      %v890 = vsel %vm876, %v368, 0
      %v893 = vsel %vm876, %v369, 0
      %v896 = vsel %vm876, %v370, 0
      %v899 = vsel %vm876, %v371, 0
      %v902 = vsel %vm876, %v372, 0
      %v905 = vsel %vm876, %v373, 0
      %v908 = vsel %vm876, %v374, 0
      %v911 = vsel %vm876, %v375, 0
      %v914 = vsel %vm876, %v376, 0
      %v917 = vsel %vm876, %v377, 0
      %v920 = vsel %vm876, %v378, 0
      %v923 = vsel %vm876, %v379, 0
      %vm925 = vcmask 1043456
      %v927 = vsel %vm925, %v873, 0
      %v930 = vsel %vm925, %v874, 0
      %v933 = vsel %vm925, %v875, 0
      %935 = vmatprep.subr.bf16.mxu0 %v930
      %936 = vmatpush1.bf16.msra.mxu0 %v927
      %937 = vmatprep.subr.bf16.mxu0 0
      %938 = vmatpush1.bf16.msra.mxu0 0
      %939 = vmatprep.subr.bf16.mxu0 0
      %940 = vmatpush1.bf16.msra.mxu0 0
      %941 = vmatprep.subr.bf16.mxu0 0
      %942 = vmatpush1.bf16.msra.mxu0 0
      %943 = vmatprep.subr.bf16.mxu0 0
      %944 = vmatpush1.bf16.msra.mxu0 0
      %945 = vmatprep.subr.bf16.mxu0 0
      %946 = vmatpush1.bf16.msra.mxu0 0
      %947 = vmatprep.subr.bf16.mxu0 0
      %948 = vmatpush1.bf16.msra.mxu0 0
      %949 = vmatprep.subr.bf16.mxu0 0
      %950 = vmatpush1.bf16.msra.mxu0 0
      %951 = vmatprep.subr.bf16.mxu0 0
      %952 = vmatpush1.bf16.msra.mxu0 0
      %953 = vmatprep.subr.bf16.mxu0 0
      %954 = vmatpush1.bf16.msra.mxu0 0
      %955 = vmatprep.subr.bf16.mxu0 0
      %956 = vmatpush1.bf16.msra.mxu0 0
      %957 = vmatprep.subr.bf16.mxu0 0
      %958 = vmatpush1.bf16.msra.mxu0 0
      %959 = vmatprep.subr.bf16.mxu0 0
      %960 = vmatpush1.bf16.msra.mxu0 0
      %961 = vmatprep.subr.bf16.mxu0 0
      %962 = vmatpush1.bf16.msra.mxu0 0
      %963 = vmatprep.subr.bf16.mxu0 0
      %964 = vmatpush1.bf16.msra.mxu0 0
      %965 = vmatprep.subr.bf16.mxu0 0
      %966 = vmatpush1.bf16.msra.mxu0 0
      %967 = vmatprep.mubr.bf16.mxu0 0
      %968 = vmatmul.mubr.bf16.gmra.mrb[0].mxu0 %v878
      %v969 = vpop.f32.mrb[0].mxu0
      %v970 = vadd.f32 %v549, %v969
      %v971 = vpop.f32.mrb[0].mxu0
      %v972 = vadd.f32 %v551, %v971
      %v973 = vpop.f32.mrb[0].mxu0
      %v974 = vadd.f32 %v553, %v973
      %v975 = vpop.f32.mrb[0].mxu0
      %v976 = vadd.f32 %v555, %v975
      %977 = vmatprep.mubr.bf16.mxu0 0
      %978 = vmatmul.mubr.bf16.gmra.mrb[0].mxu0 %v881
      %v979 = vpop.f32.mrb[0].mxu0
      %v980 = vadd.f32 %v559, %v979
      %v981 = vpop.f32.mrb[0].mxu0
      %v982 = vadd.f32 %v561, %v981
      %v983 = vpop.f32.mrb[0].mxu0
      %v984 = vadd.f32 %v563, %v983
      %v985 = vpop.f32.mrb[0].mxu0
      %v986 = vadd.f32 %v565, %v985
      %987 = vmatprep.mubr.bf16.mxu0 0
      %988 = vmatmul.mubr.bf16.gmra.mrb[0].mxu0 %v884
      %v989 = vpop.f32.mrb[0].mxu0
      %v990 = vadd.f32 %v569, %v989
      %v991 = vpop.f32.mrb[0].mxu0
      %v992 = vadd.f32 %v571, %v991
      %v993 = vpop.f32.mrb[0].mxu0
      %v994 = vadd.f32 %v573, %v993
      %v995 = vpop.f32.mrb[0].mxu0
      %v996 = vadd.f32 %v575, %v995
      %997 = vmatprep.mubr.bf16.mxu0 0
      %998 = vmatmul.mubr.bf16.gmra.mrb[0].mxu0 %v887
      %v999 = vpop.f32.mrb[0].mxu0
      %v1000 = vadd.f32 %v579, %v999
      %v1001 = vpop.f32.mrb[0].mxu0
      %v1002 = vadd.f32 %v581, %v1001
      %v1003 = vpop.f32.mrb[0].mxu0
      %v1004 = vadd.f32 %v583, %v1003
      %v1005 = vpop.f32.mrb[0].mxu0
      %v1006 = vadd.f32 %v585, %v1005
      %1007 = vmatprep.mubr.bf16.mxu0 0
      %1008 = vmatmul.mubr.bf16.gmra.mrb[0].mxu0 %v890
      %v1009 = vpop.f32.mrb[0].mxu0
      %v1010 = vadd.f32 %v589, %v1009
      %v1011 = vpop.f32.mrb[0].mxu0
      %v1012 = vadd.f32 %v591, %v1011
      %v1013 = vpop.f32.mrb[0].mxu0
      %v1014 = vadd.f32 %v593, %v1013
      %v1015 = vpop.f32.mrb[0].mxu0
      %v1016 = vadd.f32 %v595, %v1015
      %1017 = vmatprep.mubr.bf16.mxu0 0
      %1018 = vmatmul.mubr.bf16.gmra.mrb[0].mxu0 %v893
      %v1019 = vpop.f32.mrb[0].mxu0
      %v1020 = vadd.f32 %v599, %v1019
      %v1021 = vpop.f32.mrb[0].mxu0
      %v1022 = vadd.f32 %v601, %v1021
      %v1023 = vpop.f32.mrb[0].mxu0
      %v1024 = vadd.f32 %v603, %v1023
      %v1025 = vpop.f32.mrb[0].mxu0
      %v1026 = vadd.f32 %v605, %v1025
      %1027 = vmatprep.mubr.bf16.mxu0 0
      %1028 = vmatmul.mubr.bf16.gmra.mrb[0].mxu0 %v896
      %v1029 = vpop.f32.mrb[0].mxu0
      %v1030 = vadd.f32 %v609, %v1029
      %v1031 = vpop.f32.mrb[0].mxu0
      %v1032 = vadd.f32 %v611, %v1031
      %v1033 = vpop.f32.mrb[0].mxu0
      %v1034 = vadd.f32 %v613, %v1033
      %v1035 = vpop.f32.mrb[0].mxu0
      %v1036 = vadd.f32 %v615, %v1035
      %1037 = vmatprep.mubr.bf16.mxu0 0
      %1038 = vmatmul.mubr.bf16.gmra.mrb[0].mxu0 %v899
      %v1039 = vpop.f32.mrb[0].mxu0
      %v1040 = vadd.f32 %v619, %v1039
      %v1041 = vpop.f32.mrb[0].mxu0
      %v1042 = vadd.f32 %v621, %v1041
      %v1043 = vpop.f32.mrb[0].mxu0
      %v1044 = vadd.f32 %v623, %v1043
      %v1045 = vpop.f32.mrb[0].mxu0
      %v1046 = vadd.f32 %v625, %v1045
      %1047 = vmatprep.mubr.bf16.mxu0 0
      %1048 = vmatmul.mubr.bf16.gmra.mrb[0].mxu0 %v902
      %v1049 = vpop.f32.mrb[0].mxu0
      %v1050 = vadd.f32 %v629, %v1049
      %v1051 = vpop.f32.mrb[0].mxu0
      %v1052 = vadd.f32 %v631, %v1051
      %v1053 = vpop.f32.mrb[0].mxu0
      %v1054 = vadd.f32 %v633, %v1053
      %v1055 = vpop.f32.mrb[0].mxu0
      %v1056 = vadd.f32 %v635, %v1055
      %1057 = vmatprep.mubr.bf16.mxu0 0
      %1058 = vmatmul.mubr.bf16.gmra.mrb[0].mxu0 %v905
      %v1059 = vpop.f32.mrb[0].mxu0
      %v1060 = vadd.f32 %v639, %v1059
      %v1061 = vpop.f32.mrb[0].mxu0
      %v1062 = vadd.f32 %v641, %v1061
      %v1063 = vpop.f32.mrb[0].mxu0
      %v1064 = vadd.f32 %v643, %v1063
      %v1065 = vpop.f32.mrb[0].mxu0
      %v1066 = vadd.f32 %v645, %v1065
      %1067 = vmatprep.mubr.bf16.mxu0 0
      %1068 = vmatmul.mubr.bf16.gmra.mrb[0].mxu0 %v908
      %v1069 = vpop.f32.mrb[0].mxu0
      %v1070 = vadd.f32 %v649, %v1069
      %v1071 = vpop.f32.mrb[0].mxu0
      %v1072 = vadd.f32 %v651, %v1071
      %v1073 = vpop.f32.mrb[0].mxu0
      %v1074 = vadd.f32 %v653, %v1073
      %v1075 = vpop.f32.mrb[0].mxu0
      %v1076 = vadd.f32 %v655, %v1075
      %1077 = vmatprep.mubr.bf16.mxu0 0
      %1078 = vmatmul.mubr.bf16.gmra.mrb[0].mxu0 %v911
      %v1079 = vpop.f32.mrb[0].mxu0
      %v1080 = vadd.f32 %v659, %v1079
      %v1081 = vpop.f32.mrb[0].mxu0
      %v1082 = vadd.f32 %v661, %v1081
      %v1083 = vpop.f32.mrb[0].mxu0
      %v1084 = vadd.f32 %v663, %v1083
      %v1085 = vpop.f32.mrb[0].mxu0
      %v1086 = vadd.f32 %v665, %v1085
      %1087 = vmatprep.mubr.bf16.mxu0 0
      %1088 = vmatmul.mubr.bf16.gmra.mrb[0].mxu0 %v914
      %v1089 = vpop.f32.mrb[0].mxu0
      %v1090 = vadd.f32 %v669, %v1089
      %v1091 = vpop.f32.mrb[0].mxu0
      %v1092 = vadd.f32 %v671, %v1091
      %v1093 = vpop.f32.mrb[0].mxu0
      %v1094 = vadd.f32 %v673, %v1093
      %v1095 = vpop.f32.mrb[0].mxu0
      %v1096 = vadd.f32 %v675, %v1095
      %1097 = vmatprep.mubr.bf16.mxu0 0
      %1098 = vmatmul.mubr.bf16.gmra.mrb[0].mxu0 %v917
      %v1099 = vpop.f32.mrb[0].mxu0
      %v1100 = vadd.f32 %v679, %v1099
      %v1101 = vpop.f32.mrb[0].mxu0
      %v1102 = vadd.f32 %v681, %v1101
      %v1103 = vpop.f32.mrb[0].mxu0
      %v1104 = vadd.f32 %v683, %v1103
      %v1105 = vpop.f32.mrb[0].mxu0
      %v1106 = vadd.f32 %v685, %v1105
      %1107 = vmatprep.mubr.bf16.mxu0 0
      %1108 = vmatmul.mubr.bf16.gmra.mrb[0].mxu0 %v920
      %v1109 = vpop.f32.mrb[0].mxu0
      %v1110 = vadd.f32 %v689, %v1109
      %v1111 = vpop.f32.mrb[0].mxu0
      %v1112 = vadd.f32 %v691, %v1111
      %v1113 = vpop.f32.mrb[0].mxu0
      %v1114 = vadd.f32 %v693, %v1113
      %v1115 = vpop.f32.mrb[0].mxu0
      %v1116 = vadd.f32 %v695, %v1115
      %1117 = vmatprep.mubr.bf16.mxu0 0
      %1118 = vmatmul.mubr.bf16.gmra.mrb[0].mxu0 %v923
      %v1119 = vpop.f32.mrb[0].mxu0
      %v1120 = vadd.f32 %v699, %v1119
      %v1121 = vpop.f32.mrb[0].mxu0
      %v1122 = vadd.f32 %v701, %v1121
      %v1123 = vpop.f32.mrb[0].mxu0
      %v1124 = vadd.f32 %v703, %v1123
      %v1125 = vpop.f32.mrb[0].mxu0
      %v1126 = vadd.f32 %v705, %v1125
      %1127 = vdwg.mxu0
      %1128 = vmatprep.subr.bf16.mxu0 0
      %1129 = vmatpush1.bf16.msra.mxu0 %v933
      %1130 = vmatprep.subr.bf16.mxu0 0
      %1131 = vmatpush1.bf16.msra.mxu0 0
      %1132 = vmatprep.subr.bf16.mxu0 0
      %1133 = vmatpush1.bf16.msra.mxu0 0
      %1134 = vmatprep.subr.bf16.mxu0 0
      %1135 = vmatpush1.bf16.msra.mxu0 0
      %1136 = vmatprep.subr.bf16.mxu0 0
      %1137 = vmatpush1.bf16.msra.mxu0 0
      %1138 = vmatprep.subr.bf16.mxu0 0
      %1139 = vmatpush1.bf16.msra.mxu0 0
      %1140 = vmatprep.subr.bf16.mxu0 0
      %1141 = vmatpush1.bf16.msra.mxu0 0
      %1142 = vmatprep.subr.bf16.mxu0 0
      %1143 = vmatpush1.bf16.msra.mxu0 0
      %1144 = vmatprep.subr.bf16.mxu0 0
      %1145 = vmatpush1.bf16.msra.mxu0 0
      %1146 = vmatprep.subr.bf16.mxu0 0
      %1147 = vmatpush1.bf16.msra.mxu0 0
      %1148 = vmatprep.subr.bf16.mxu0 0
      %1149 = vmatpush1.bf16.msra.mxu0 0
      %1150 = vmatprep.subr.bf16.mxu0 0
      %1151 = vmatpush1.bf16.msra.mxu0 0
      %1152 = vmatprep.subr.bf16.mxu0 0
      %1153 = vmatpush1.bf16.msra.mxu0 0
      %1154 = vmatprep.subr.bf16.mxu0 0
      %1155 = vmatpush1.bf16.msra.mxu0 0
      %1156 = vmatprep.subr.bf16.mxu0 0
      %1157 = vmatpush1.bf16.msra.mxu0 0
      %1158 = vmatprep.subr.bf16.mxu0 0
      %1159 = vmatpush1.bf16.msra.mxu0 0
      %1160 = vmatprep.mubr.bf16.mxu0 0
      %1161 = vmatmul.mubr.bf16.gmra.mrb[0].mxu0 %v878
      %v1162 = vpop.f32.mrb[0].mxu0
      %v1163 = vadd.f32 %v742, %v1162
      %v1164 = vpop.f32.mrb[0].mxu0
      %v1165 = vpop.f32.mrb[0].mxu0
      %v1166 = vadd.f32 %v745, %v1165
      %v1167 = vpop.f32.mrb[0].mxu0
      %1168 = vmatprep.mubr.bf16.mxu0 0
      %1169 = vmatmul.mubr.bf16.gmra.mrb[0].mxu0 %v881
      %v1170 = vpop.f32.mrb[0].mxu0
      %v1171 = vadd.f32 %v750, %v1170
      %v1172 = vpop.f32.mrb[0].mxu0
      %v1173 = vpop.f32.mrb[0].mxu0
      %v1174 = vadd.f32 %v753, %v1173
      %v1175 = vpop.f32.mrb[0].mxu0
      %1176 = vmatprep.mubr.bf16.mxu0 0
      %1177 = vmatmul.mubr.bf16.gmra.mrb[0].mxu0 %v884
      %v1178 = vpop.f32.mrb[0].mxu0
      %v1179 = vadd.f32 %v758, %v1178
      %v1180 = vpop.f32.mrb[0].mxu0
      %v1181 = vpop.f32.mrb[0].mxu0
      %v1182 = vadd.f32 %v761, %v1181
      %v1183 = vpop.f32.mrb[0].mxu0
      %1184 = vmatprep.mubr.bf16.mxu0 0
      %1185 = vmatmul.mubr.bf16.gmra.mrb[0].mxu0 %v887
      %v1186 = vpop.f32.mrb[0].mxu0
      %v1187 = vadd.f32 %v766, %v1186
      %v1188 = vpop.f32.mrb[0].mxu0
      %v1189 = vpop.f32.mrb[0].mxu0
      %v1190 = vadd.f32 %v769, %v1189
      %v1191 = vpop.f32.mrb[0].mxu0
      %1192 = vmatprep.mubr.bf16.mxu0 0
      %1193 = vmatmul.mubr.bf16.gmra.mrb[0].mxu0 %v890
      %v1194 = vpop.f32.mrb[0].mxu0
      %v1195 = vadd.f32 %v774, %v1194
      %v1196 = vpop.f32.mrb[0].mxu0
      %v1197 = vpop.f32.mrb[0].mxu0
      %v1198 = vadd.f32 %v777, %v1197
      %v1199 = vpop.f32.mrb[0].mxu0
      %1200 = vmatprep.mubr.bf16.mxu0 0
      %1201 = vmatmul.mubr.bf16.gmra.mrb[0].mxu0 %v893
      %v1202 = vpop.f32.mrb[0].mxu0
      %v1203 = vadd.f32 %v782, %v1202
      %v1204 = vpop.f32.mrb[0].mxu0
      %v1205 = vpop.f32.mrb[0].mxu0
      %v1206 = vadd.f32 %v785, %v1205
      %v1207 = vpop.f32.mrb[0].mxu0
      %1208 = vmatprep.mubr.bf16.mxu0 0
      %1209 = vmatmul.mubr.bf16.gmra.mrb[0].mxu0 %v896
      %v1210 = vpop.f32.mrb[0].mxu0
      %v1211 = vadd.f32 %v790, %v1210
      %v1212 = vpop.f32.mrb[0].mxu0
      %v1213 = vpop.f32.mrb[0].mxu0
      %v1214 = vadd.f32 %v793, %v1213
      %v1215 = vpop.f32.mrb[0].mxu0
      %1216 = vmatprep.mubr.bf16.mxu0 0
      %1217 = vmatmul.mubr.bf16.gmra.mrb[0].mxu0 %v899
      %v1218 = vpop.f32.mrb[0].mxu0
      %v1219 = vadd.f32 %v798, %v1218
      %v1220 = vpop.f32.mrb[0].mxu0
      %v1221 = vpop.f32.mrb[0].mxu0
      %v1222 = vadd.f32 %v801, %v1221
      %v1223 = vpop.f32.mrb[0].mxu0
      %1224 = vmatprep.mubr.bf16.mxu0 0
      %1225 = vmatmul.mubr.bf16.gmra.mrb[0].mxu0 %v902
      %v1226 = vpop.f32.mrb[0].mxu0
      %v1227 = vadd.f32 %v806, %v1226
      %v1228 = vpop.f32.mrb[0].mxu0
      %v1229 = vpop.f32.mrb[0].mxu0
      %v1230 = vadd.f32 %v809, %v1229
      %v1231 = vpop.f32.mrb[0].mxu0
      %1232 = vmatprep.mubr.bf16.mxu0 0
      %1233 = vmatmul.mubr.bf16.gmra.mrb[0].mxu0 %v905
      %v1234 = vpop.f32.mrb[0].mxu0
      %v1235 = vadd.f32 %v814, %v1234
      %v1236 = vpop.f32.mrb[0].mxu0
      %v1237 = vpop.f32.mrb[0].mxu0
      %v1238 = vadd.f32 %v817, %v1237
      %v1239 = vpop.f32.mrb[0].mxu0
      %1240 = vmatprep.mubr.bf16.mxu0 0
      %1241 = vmatmul.mubr.bf16.gmra.mrb[0].mxu0 %v908
      %v1242 = vpop.f32.mrb[0].mxu0
      %v1243 = vadd.f32 %v822, %v1242
      %v1244 = vpop.f32.mrb[0].mxu0
      %v1245 = vpop.f32.mrb[0].mxu0
      %v1246 = vadd.f32 %v825, %v1245
      %v1247 = vpop.f32.mrb[0].mxu0
      %1248 = vmatprep.mubr.bf16.mxu0 0
      %1249 = vmatmul.mubr.bf16.gmra.mrb[0].mxu0 %v911
      %v1250 = vpop.f32.mrb[0].mxu0
      %v1251 = vadd.f32 %v830, %v1250
      %v1252 = vpop.f32.mrb[0].mxu0
      %v1253 = vpop.f32.mrb[0].mxu0
      %v1254 = vadd.f32 %v833, %v1253
      %v1255 = vpop.f32.mrb[0].mxu0
      %1256 = vmatprep.mubr.bf16.mxu0 0
      %1257 = vmatmul.mubr.bf16.gmra.mrb[0].mxu0 %v914
      %v1258 = vpop.f32.mrb[0].mxu0
      %v1259 = vadd.f32 %v838, %v1258
      %v1260 = vpop.f32.mrb[0].mxu0
      %v1261 = vpop.f32.mrb[0].mxu0
      %v1262 = vadd.f32 %v841, %v1261
      %v1263 = vpop.f32.mrb[0].mxu0
      %1264 = vmatprep.mubr.bf16.mxu0 0
      %1265 = vmatmul.mubr.bf16.gmra.mrb[0].mxu0 %v917
      %v1266 = vpop.f32.mrb[0].mxu0
      %v1267 = vadd.f32 %v846, %v1266
      %v1268 = vpop.f32.mrb[0].mxu0
      %v1269 = vpop.f32.mrb[0].mxu0
      %v1270 = vadd.f32 %v849, %v1269
      %v1271 = vpop.f32.mrb[0].mxu0
      %1272 = vmatprep.mubr.bf16.mxu0 0
      %1273 = vmatmul.mubr.bf16.gmra.mrb[0].mxu0 %v920
      %v1274 = vpop.f32.mrb[0].mxu0
      %v1275 = vadd.f32 %v854, %v1274
      %v1276 = vpop.f32.mrb[0].mxu0
      %v1277 = vpop.f32.mrb[0].mxu0
      %v1278 = vadd.f32 %v857, %v1277
      %v1279 = vpop.f32.mrb[0].mxu0
      %1280 = vmatprep.mubr.bf16.mxu0 0
      %1281 = vmatmul.mubr.bf16.gmra.mrb[0].mxu0 %v923
      %v1282 = vpop.f32.mrb[0].mxu0
      %v1283 = vadd.f32 %v862, %v1282
      %v1284 = vpop.f32.mrb[0].mxu0
      %v1285 = vpop.f32.mrb[0].mxu0
      %v1286 = vadd.f32 %v865, %v1285
      %v1287 = vpop.f32.mrb[0].mxu0
      %1288 = vdwg.mxu0
      %v1289 = vld [vmem:[%s7] ss:$8 sm:$0x7]
      %v1291 = vlaneseq
      %v1292 = vshrl.u32 %v1291, 7
      %v1293 = vsub.s32 0, %v1292
      %v1294 = vrot.slane %v1289, %v1293
      %v1295 = vlaneseq
      %v1296 = vshrl.u32 %v1295, 7
      %v1297 = vsub.s32 1, %v1296
      %v1298 = vrot.slane %v1289, %v1297
      %v1299 = vlaneseq
      %v1300 = vshrl.u32 %v1299, 7
      %v1301 = vsub.s32 2, %v1300
      %v1302 = vrot.slane %v1289, %v1301
      %v1306 = vadd.f32 %v970, %v1294
      %v1307 = vadd.f32 %v972, %v1298
      %v1308 = vadd.f32 %v1163, %v1302
      %v1309 = vadd.f32 %v974, %v1294
      %v1310 = vadd.f32 %v976, %v1298
      %v1311 = vadd.f32 %v1166, %v1302
      %v1312 = vadd.f32 %v980, %v1294
      %v1313 = vadd.f32 %v982, %v1298
      %v1314 = vadd.f32 %v1171, %v1302
      %v1315 = vadd.f32 %v984, %v1294
      %v1316 = vadd.f32 %v986, %v1298
      %v1317 = vadd.f32 %v1174, %v1302
      %v1318 = vadd.f32 %v990, %v1294
      %v1319 = vadd.f32 %v992, %v1298
      %v1320 = vadd.f32 %v1179, %v1302
      %v1321 = vadd.f32 %v994, %v1294
      %v1322 = vadd.f32 %v996, %v1298
      %v1323 = vadd.f32 %v1182, %v1302
      %v1324 = vadd.f32 %v1000, %v1294
      %v1325 = vadd.f32 %v1002, %v1298
      %v1326 = vadd.f32 %v1187, %v1302
      %v1327 = vadd.f32 %v1004, %v1294
      %v1328 = vadd.f32 %v1006, %v1298
      %v1329 = vadd.f32 %v1190, %v1302
      %v1330 = vadd.f32 %v1010, %v1294
      %v1331 = vadd.f32 %v1012, %v1298
      %v1332 = vadd.f32 %v1195, %v1302
      %v1333 = vadd.f32 %v1014, %v1294
      %v1334 = vadd.f32 %v1016, %v1298
      %v1335 = vadd.f32 %v1198, %v1302
      %v1336 = vadd.f32 %v1020, %v1294
      %v1337 = vadd.f32 %v1022, %v1298
      %v1338 = vadd.f32 %v1203, %v1302
      %v1339 = vadd.f32 %v1024, %v1294
      %v1340 = vadd.f32 %v1026, %v1298
      %v1341 = vadd.f32 %v1206, %v1302
      %v1342 = vadd.f32 %v1030, %v1294
      %v1343 = vadd.f32 %v1032, %v1298
      %v1344 = vadd.f32 %v1211, %v1302
      %v1345 = vadd.f32 %v1034, %v1294
      %v1346 = vadd.f32 %v1036, %v1298
      %v1347 = vadd.f32 %v1214, %v1302
      %v1348 = vadd.f32 %v1040, %v1294
      %v1349 = vadd.f32 %v1042, %v1298
      %v1350 = vadd.f32 %v1219, %v1302
      %v1351 = vadd.f32 %v1044, %v1294
      %v1352 = vadd.f32 %v1046, %v1298
      %v1353 = vadd.f32 %v1222, %v1302
      %v1354 = vadd.f32 %v1050, %v1294
      %v1355 = vadd.f32 %v1052, %v1298
      %v1356 = vadd.f32 %v1227, %v1302
      %v1357 = vadd.f32 %v1054, %v1294
      %v1358 = vadd.f32 %v1056, %v1298
      %v1359 = vadd.f32 %v1230, %v1302
      %v1360 = vadd.f32 %v1060, %v1294
      %v1361 = vadd.f32 %v1062, %v1298
      %v1362 = vadd.f32 %v1235, %v1302
      %v1363 = vadd.f32 %v1064, %v1294
      %v1364 = vadd.f32 %v1066, %v1298
      %v1365 = vadd.f32 %v1238, %v1302
      %v1366 = vadd.f32 %v1070, %v1294
      %v1367 = vadd.f32 %v1072, %v1298
      %v1368 = vadd.f32 %v1243, %v1302
      %v1369 = vadd.f32 %v1074, %v1294
      %v1370 = vadd.f32 %v1076, %v1298
      %v1371 = vadd.f32 %v1246, %v1302
      %v1372 = vadd.f32 %v1080, %v1294
      %v1373 = vadd.f32 %v1082, %v1298
      %v1374 = vadd.f32 %v1251, %v1302
      %v1375 = vadd.f32 %v1084, %v1294
      %v1376 = vadd.f32 %v1086, %v1298
      %v1377 = vadd.f32 %v1254, %v1302
      %v1378 = vadd.f32 %v1090, %v1294
      %v1379 = vadd.f32 %v1092, %v1298
      %v1380 = vadd.f32 %v1259, %v1302
      %v1381 = vadd.f32 %v1094, %v1294
      %v1382 = vadd.f32 %v1096, %v1298
      %v1383 = vadd.f32 %v1262, %v1302
      %v1384 = vadd.f32 %v1100, %v1294
      %v1385 = vadd.f32 %v1102, %v1298
      %v1386 = vadd.f32 %v1267, %v1302
      %v1387 = vadd.f32 %v1104, %v1294
      %v1388 = vadd.f32 %v1106, %v1298
      %v1389 = vadd.f32 %v1270, %v1302
      %v1390 = vadd.f32 %v1110, %v1294
      %v1391 = vadd.f32 %v1112, %v1298
      %v1392 = vadd.f32 %v1275, %v1302
      %v1393 = vadd.f32 %v1114, %v1294
      %v1394 = vadd.f32 %v1116, %v1298
      %v1395 = vadd.f32 %v1278, %v1302
      %v1396 = vadd.f32 %v1120, %v1294
      %v1397 = vadd.f32 %v1122, %v1298
      %v1398 = vadd.f32 %v1283, %v1302
      %v1399 = vadd.f32 %v1124, %v1294
      %v1400 = vadd.f32 %v1126, %v1298
      %v1401 = vadd.f32 %v1286, %v1302
      %v1402 = vmax.f32 %v1306, 0.0
      %v1403 = vmax.f32 %v1307, 0.0
      %v1404 = vmax.f32 %v1308, 0.0
      %v1405 = vmax.f32 %v1309, 0.0
      %v1406 = vmax.f32 %v1310, 0.0
      %v1407 = vmax.f32 %v1311, 0.0
      %v1408 = vmax.f32 %v1312, 0.0
      %v1409 = vmax.f32 %v1313, 0.0
      %v1410 = vmax.f32 %v1314, 0.0
      %v1411 = vmax.f32 %v1315, 0.0
      %v1412 = vmax.f32 %v1316, 0.0
      %v1413 = vmax.f32 %v1317, 0.0
      %v1414 = vmax.f32 %v1318, 0.0
      %v1415 = vmax.f32 %v1319, 0.0
      %v1416 = vmax.f32 %v1320, 0.0
      %v1417 = vmax.f32 %v1321, 0.0
      %v1418 = vmax.f32 %v1322, 0.0
      %v1419 = vmax.f32 %v1323, 0.0
      %v1420 = vmax.f32 %v1324, 0.0
      %v1421 = vmax.f32 %v1325, 0.0
      %v1422 = vmax.f32 %v1326, 0.0
      %v1423 = vmax.f32 %v1327, 0.0
      %v1424 = vmax.f32 %v1328, 0.0
      %v1425 = vmax.f32 %v1329, 0.0
      %v1426 = vmax.f32 %v1330, 0.0
      %v1427 = vmax.f32 %v1331, 0.0
      %v1428 = vmax.f32 %v1332, 0.0
      %v1429 = vmax.f32 %v1333, 0.0
      %v1430 = vmax.f32 %v1334, 0.0
      %v1431 = vmax.f32 %v1335, 0.0
      %v1432 = vmax.f32 %v1336, 0.0
      %v1433 = vmax.f32 %v1337, 0.0
      %v1434 = vmax.f32 %v1338, 0.0
      %v1435 = vmax.f32 %v1339, 0.0
      %v1436 = vmax.f32 %v1340, 0.0
      %v1437 = vmax.f32 %v1341, 0.0
      %v1438 = vmax.f32 %v1342, 0.0
      %v1439 = vmax.f32 %v1343, 0.0
      %v1440 = vmax.f32 %v1344, 0.0
      %v1441 = vmax.f32 %v1345, 0.0
      %v1442 = vmax.f32 %v1346, 0.0
      %v1443 = vmax.f32 %v1347, 0.0
      %v1444 = vmax.f32 %v1348, 0.0
      %v1445 = vmax.f32 %v1349, 0.0
      %v1446 = vmax.f32 %v1350, 0.0
      %v1447 = vmax.f32 %v1351, 0.0
      %v1448 = vmax.f32 %v1352, 0.0
      %v1449 = vmax.f32 %v1353, 0.0
      %v1450 = vmax.f32 %v1354, 0.0
      %v1451 = vmax.f32 %v1355, 0.0
      %v1452 = vmax.f32 %v1356, 0.0
      %v1453 = vmax.f32 %v1357, 0.0
      %v1454 = vmax.f32 %v1358, 0.0
      %v1455 = vmax.f32 %v1359, 0.0
      %v1456 = vmax.f32 %v1360, 0.0
      %v1457 = vmax.f32 %v1361, 0.0
      %v1458 = vmax.f32 %v1362, 0.0
      %v1459 = vmax.f32 %v1363, 0.0
      %v1460 = vmax.f32 %v1364, 0.0
      %v1461 = vmax.f32 %v1365, 0.0
      %v1462 = vmax.f32 %v1366, 0.0
      %v1463 = vmax.f32 %v1367, 0.0
      %v1464 = vmax.f32 %v1368, 0.0
      %v1465 = vmax.f32 %v1369, 0.0
      %v1466 = vmax.f32 %v1370, 0.0
      %v1467 = vmax.f32 %v1371, 0.0
      %v1468 = vmax.f32 %v1372, 0.0
      %v1469 = vmax.f32 %v1373, 0.0
      %v1470 = vmax.f32 %v1374, 0.0
      %v1471 = vmax.f32 %v1375, 0.0
      %v1472 = vmax.f32 %v1376, 0.0
      %v1473 = vmax.f32 %v1377, 0.0
      %v1474 = vmax.f32 %v1378, 0.0
      %v1475 = vmax.f32 %v1379, 0.0
      %v1476 = vmax.f32 %v1380, 0.0
      %v1477 = vmax.f32 %v1381, 0.0
      %v1478 = vmax.f32 %v1382, 0.0
      %v1479 = vmax.f32 %v1383, 0.0
      %v1480 = vmax.f32 %v1384, 0.0
      %v1481 = vmax.f32 %v1385, 0.0
      %v1482 = vmax.f32 %v1386, 0.0
      %v1483 = vmax.f32 %v1387, 0.0
      %v1484 = vmax.f32 %v1388, 0.0
      %v1485 = vmax.f32 %v1389, 0.0
      %v1486 = vmax.f32 %v1390, 0.0
      %v1487 = vmax.f32 %v1391, 0.0
      %v1488 = vmax.f32 %v1392, 0.0
      %v1489 = vmax.f32 %v1393, 0.0
      %v1490 = vmax.f32 %v1394, 0.0
      %v1491 = vmax.f32 %v1395, 0.0
      %v1492 = vmax.f32 %v1396, 0.0
      %v1493 = vmax.f32 %v1397, 0.0
      %v1494 = vmax.f32 %v1398, 0.0
      %v1495 = vmax.f32 %v1399, 0.0
      %v1496 = vmax.f32 %v1400, 0.0
      %v1497 = vmax.f32 %v1401, 0.0
      %v1498 = vpack.c.bf16 %v1405, %v1402
      %v1499 = vpack.c.bf16 %v1406, %v1403
      %v1500 = vpack.c.bf16 %v1407, %v1404
      %v1501 = vpack.c.bf16 %v1411, %v1408
      %v1502 = vpack.c.bf16 %v1412, %v1409
      %v1503 = vpack.c.bf16 %v1413, %v1410
      %v1504 = vpack.c.bf16 %v1417, %v1414
      %v1505 = vpack.c.bf16 %v1418, %v1415
      %v1506 = vpack.c.bf16 %v1419, %v1416
      %v1507 = vpack.c.bf16 %v1423, %v1420
      %v1508 = vpack.c.bf16 %v1424, %v1421
      %v1509 = vpack.c.bf16 %v1425, %v1422
      %v1510 = vpack.c.bf16 %v1429, %v1426
      %v1511 = vpack.c.bf16 %v1430, %v1427
      %v1512 = vpack.c.bf16 %v1431, %v1428
      %v1513 = vpack.c.bf16 %v1435, %v1432
      %v1514 = vpack.c.bf16 %v1436, %v1433
      %v1515 = vpack.c.bf16 %v1437, %v1434
      %v1516 = vpack.c.bf16 %v1441, %v1438
      %v1517 = vpack.c.bf16 %v1442, %v1439
      %v1518 = vpack.c.bf16 %v1443, %v1440
      %v1519 = vpack.c.bf16 %v1447, %v1444
      %v1520 = vpack.c.bf16 %v1448, %v1445
      %v1521 = vpack.c.bf16 %v1449, %v1446
      %v1522 = vpack.c.bf16 %v1453, %v1450
      %v1523 = vpack.c.bf16 %v1454, %v1451
      %v1524 = vpack.c.bf16 %v1455, %v1452
      %v1525 = vpack.c.bf16 %v1459, %v1456
      %v1526 = vpack.c.bf16 %v1460, %v1457
      %v1527 = vpack.c.bf16 %v1461, %v1458
      %v1528 = vpack.c.bf16 %v1465, %v1462
      %v1529 = vpack.c.bf16 %v1466, %v1463
      %v1530 = vpack.c.bf16 %v1467, %v1464
      %v1531 = vpack.c.bf16 %v1471, %v1468
      %v1532 = vpack.c.bf16 %v1472, %v1469
      %v1533 = vpack.c.bf16 %v1473, %v1470
      %v1534 = vpack.c.bf16 %v1477, %v1474
      %v1535 = vpack.c.bf16 %v1478, %v1475
      %v1536 = vpack.c.bf16 %v1479, %v1476
      %v1537 = vpack.c.bf16 %v1483, %v1480
      %v1538 = vpack.c.bf16 %v1484, %v1481
      %v1539 = vpack.c.bf16 %v1485, %v1482
      %v1540 = vpack.c.bf16 %v1489, %v1486
      %v1541 = vpack.c.bf16 %v1490, %v1487
      %v1542 = vpack.c.bf16 %v1491, %v1488
      %v1543 = vpack.c.bf16 %v1495, %v1492
      %v1544 = vpack.c.bf16 %v1496, %v1493
      %v1545 = vpack.c.bf16 %v1497, %v1494
      %v1546 = vld [vmem:[%s4] sm:$0xff]
      %v1547 = vld [vmem:[%s4 + $0x8] sm:$0xff]
      %v1548 = vld [vmem:[%s4 + $0x10] sm:$0xff]
      %v1549 = vld [vmem:[%s4 + $0x18] sm:$0xff]
      %v1550 = vld [vmem:[%s4 + $0x20] sm:$0xff]
      %v1551 = vld [vmem:[%s4 + $0x28] sm:$0xff]
      %v1552 = vld [vmem:[%s4 + $0x30] sm:$0xff]
      %v1553 = vld [vmem:[%s4 + $0x38] sm:$0xff]
      %v1554 = vld [vmem:[%s4 + $0x40] sm:$0xff]
      %v1555 = vld [vmem:[%s4 + $0x48] sm:$0xff]
      %v1556 = vld [vmem:[%s4 + $0x50] sm:$0xff]
      %v1557 = vld [vmem:[%s4 + $0x58] sm:$0xff]
      %v1558 = vld [vmem:[%s4 + $0x60] sm:$0xff]
      %v1559 = vld [vmem:[%s4 + $0x68] sm:$0xff]
      %v1560 = vld [vmem:[%s4 + $0x70] sm:$0xff]
      %v1561 = vld [vmem:[%s4 + $0x78] sm:$0xff]
      %v1562 = vld [vmem:[%s4 + $0x80] sm:$0xff]
      %v1563 = vld [vmem:[%s4 + $0x88] sm:$0xff]
      %v1564 = vld [vmem:[%s4 + $0x90] sm:$0xff]
      %v1565 = vld [vmem:[%s4 + $0x98] sm:$0xff]
      %v1566 = vld [vmem:[%s4 + $0xa0] sm:$0xff]
      %v1567 = vld [vmem:[%s4 + $0xa8] sm:$0xff]
      %v1568 = vld [vmem:[%s4 + $0xb0] sm:$0xff]
      %v1569 = vld [vmem:[%s4 + $0xb8] sm:$0xff]
      %v1570 = vld [vmem:[%s4 + $0xc0] sm:$0xff]
      %v1571 = vld [vmem:[%s4 + $0xc8] sm:$0xff]
      %v1572 = vld [vmem:[%s4 + $0xd0] sm:$0xff]
      %v1573 = vld [vmem:[%s4 + $0xd8] sm:$0xff]
      %v1574 = vld [vmem:[%s4 + $0xe0] sm:$0xff]
      %v1575 = vld [vmem:[%s4 + $0xe8] sm:$0xff]
      %v1576 = vld [vmem:[%s4 + $0xf0] sm:$0xff]
      %v1577 = vld [vmem:[%s4 + $0xf8] sm:$0xff]
      %v1578 = vld [vmem:[%s4 + $0x100] sm:$0xff]
      %v1579 = vld [vmem:[%s4 + $0x108] sm:$0xff]
      %v1580 = vld [vmem:[%s4 + $0x110] sm:$0xff]
      %v1581 = vld [vmem:[%s4 + $0x118] sm:$0xff]
      %v1582 = vld [vmem:[%s4 + $0x120] sm:$0xff]
      %v1583 = vld [vmem:[%s4 + $0x128] sm:$0xff]
      %v1584 = vld [vmem:[%s4 + $0x130] sm:$0xff]
      %v1585 = vld [vmem:[%s4 + $0x138] sm:$0xff]
      %v1586 = vld [vmem:[%s4 + $0x140] sm:$0xff]
      %v1587 = vld [vmem:[%s4 + $0x148] sm:$0xff]
      %v1588 = vld [vmem:[%s4 + $0x150] sm:$0xff]
      %v1589 = vld [vmem:[%s4 + $0x158] sm:$0xff]
      %v1590 = vld [vmem:[%s4 + $0x160] sm:$0xff]
      %v1591 = vld [vmem:[%s4 + $0x168] sm:$0xff]
      %v1592 = vld [vmem:[%s4 + $0x170] sm:$0xff]
      %v1593 = vld [vmem:[%s4 + $0x178] sm:$0xff]
      %v1594 = vld [vmem:[%s4 + $0x180] sm:$0xff]
      %v1595 = vld [vmem:[%s4 + $0x188] sm:$0xff]
      %v1596 = vld [vmem:[%s4 + $0x190] sm:$0xff]
      %v1597 = vld [vmem:[%s4 + $0x198] sm:$0xff]
      %v1598 = vld [vmem:[%s4 + $0x1a0] sm:$0xff]
      %v1599 = vld [vmem:[%s4 + $0x1a8] sm:$0xff]
      %v1600 = vld [vmem:[%s4 + $0x1b0] sm:$0xff]
      %v1601 = vld [vmem:[%s4 + $0x1b8] sm:$0xff]
      %v1602 = vld [vmem:[%s4 + $0x1c0] sm:$0xff]
      %v1603 = vld [vmem:[%s4 + $0x1c8] sm:$0xff]
      %v1604 = vld [vmem:[%s4 + $0x1d0] sm:$0xff]
      %v1605 = vld [vmem:[%s4 + $0x1d8] sm:$0xff]
      %v1606 = vld [vmem:[%s4 + $0x1e0] sm:$0xff]
      %v1607 = vld [vmem:[%s4 + $0x1e8] sm:$0xff]
      %v1608 = vld [vmem:[%s4 + $0x1f0] sm:$0xff]
      %v1609 = vld [vmem:[%s4 + $0x1f8] sm:$0xff]
      %v1610 = vld [vmem:[%s4 + $0x200] sm:$0xff]
      %v1611 = vld [vmem:[%s4 + $0x208] sm:$0xff]
      %v1612 = vld [vmem:[%s4 + $0x210] sm:$0xff]
      %v1613 = vld [vmem:[%s4 + $0x218] sm:$0xff]
      %v1614 = vld [vmem:[%s4 + $0x220] sm:$0xff]
      %v1615 = vld [vmem:[%s4 + $0x228] sm:$0xff]
      %v1616 = vld [vmem:[%s4 + $0x230] sm:$0xff]
      %v1617 = vld [vmem:[%s4 + $0x238] sm:$0xff]
      %v1618 = vld [vmem:[%s4 + $0x240] sm:$0xff]
      %v1619 = vld [vmem:[%s4 + $0x248] sm:$0xff]
      %v1620 = vld [vmem:[%s4 + $0x250] sm:$0xff]
      %v1621 = vld [vmem:[%s4 + $0x258] sm:$0xff]
      %v1622 = vld [vmem:[%s4 + $0x260] sm:$0xff]
      %v1623 = vld [vmem:[%s4 + $0x268] sm:$0xff]
      %v1624 = vld [vmem:[%s4 + $0x270] sm:$0xff]
      %v1625 = vld [vmem:[%s4 + $0x278] sm:$0xff]
      %v1626 = vld [vmem:[%s4 + $0x280] sm:$0xff]
      %v1627 = vld [vmem:[%s4 + $0x288] sm:$0xff]
      %v1628 = vld [vmem:[%s4 + $0x290] sm:$0xff]
      %v1629 = vld [vmem:[%s4 + $0x298] sm:$0xff]
      %v1630 = vld [vmem:[%s4 + $0x2a0] sm:$0xff]
      %v1631 = vld [vmem:[%s4 + $0x2a8] sm:$0xff]
      %v1632 = vld [vmem:[%s4 + $0x2b0] sm:$0xff]
      %v1633 = vld [vmem:[%s4 + $0x2b8] sm:$0xff]
      %v1634 = vld [vmem:[%s4 + $0x2c0] sm:$0xff]
      %v1635 = vld [vmem:[%s4 + $0x2c8] sm:$0xff]
      %v1636 = vld [vmem:[%s4 + $0x2d0] sm:$0xff]
      %v1637 = vld [vmem:[%s4 + $0x2d8] sm:$0xff]
      %v1638 = vld [vmem:[%s4 + $0x2e0] sm:$0xff]
      %v1639 = vld [vmem:[%s4 + $0x2e8] sm:$0xff]
      %v1640 = vld [vmem:[%s4 + $0x2f0] sm:$0xff]
      %v1641 = vld [vmem:[%s4 + $0x2f8] sm:$0xff]
      %s1642 = scalar_lea.vmem %s7, 1
      %v1643 = vld [vmem:[%s1642] ss:$8 sm:$0xf]
      %v1645 = vlaneseq
      %v1646 = vshrl.u32 %v1645, 7
      %v1647 = vsub.s32 0, %v1646
      %v1648 = vrot.slane %v1643, %v1647
      %v1649 = vlaneseq
      %v1650 = vshrl.u32 %v1649, 7
      %v1651 = vsub.s32 1, %v1650
      %v1652 = vrot.slane %v1643, %v1651
      %v1653 = vlaneseq
      %v1654 = vshrl.u32 %v1653, 7
      %v1655 = vsub.s32 2, %v1654
      %v1656 = vrot.slane %v1643, %v1655
      %v1657 = vlaneseq
      %v1658 = vshrl.u32 %v1657, 7
      %v1659 = vsub.s32 3, %v1658
      %v1660 = vrot.slane %v1643, %v1659
      %v1761 = vunpack.c.l.b16 %v1546
      %v1762 = vunpack.c.h.b16 %v1546
      %v1763 = vunpack.c.l.b16 %v1547
      %v1764 = vunpack.c.h.b16 %v1547
      %v1765 = vunpack.c.l.b16 %v1548
      %v1766 = vunpack.c.h.b16 %v1548
      %v1767 = vunpack.c.l.b16 %v1549
      %v1768 = vunpack.c.h.b16 %v1549
      %v1769 = vunpack.c.l.b16 %v1550
      %v1770 = vunpack.c.h.b16 %v1550
      %v1771 = vunpack.c.l.b16 %v1551
      %v1772 = vunpack.c.h.b16 %v1551
      %v1773 = vunpack.c.l.b16 %v1552
      %v1774 = vunpack.c.h.b16 %v1552
      %v1775 = vunpack.c.l.b16 %v1553
      %v1776 = vunpack.c.h.b16 %v1553
      %v1777 = vunpack.c.l.b16 %v1554
      %v1778 = vunpack.c.h.b16 %v1554
      %v1779 = vunpack.c.l.b16 %v1555
      %v1780 = vunpack.c.h.b16 %v1555
      %v1781 = vunpack.c.l.b16 %v1556
      %v1782 = vunpack.c.h.b16 %v1556
      %v1783 = vunpack.c.l.b16 %v1557
      %v1784 = vunpack.c.h.b16 %v1557
      %v1785 = vunpack.c.l.b16 %v1558
      %v1786 = vunpack.c.h.b16 %v1558
      %v1787 = vunpack.c.l.b16 %v1559
      %v1788 = vunpack.c.h.b16 %v1559
      %v1789 = vunpack.c.l.b16 %v1560
      %v1790 = vunpack.c.h.b16 %v1560
      %v1791 = vunpack.c.l.b16 %v1561
      %v1792 = vunpack.c.h.b16 %v1561
      %v1793 = vunpack.c.l.b16 %v1562
      %v1794 = vunpack.c.h.b16 %v1562
      %v1795 = vunpack.c.l.b16 %v1563
      %v1796 = vunpack.c.h.b16 %v1563
      %v1797 = vunpack.c.l.b16 %v1564
      %v1798 = vunpack.c.h.b16 %v1564
      %v1799 = vunpack.c.l.b16 %v1565
      %v1800 = vunpack.c.h.b16 %v1565
      %v1801 = vunpack.c.l.b16 %v1566
      %v1802 = vunpack.c.h.b16 %v1566
      %v1803 = vunpack.c.l.b16 %v1567
      %v1804 = vunpack.c.h.b16 %v1567
      %v1805 = vunpack.c.l.b16 %v1568
      %v1806 = vunpack.c.h.b16 %v1568
      %v1807 = vunpack.c.l.b16 %v1569
      %v1808 = vunpack.c.h.b16 %v1569
      %v1809 = vunpack.c.l.b16 %v1570
      %v1810 = vunpack.c.h.b16 %v1570
      %v1811 = vunpack.c.l.b16 %v1571
      %v1812 = vunpack.c.h.b16 %v1571
      %v1813 = vunpack.c.l.b16 %v1572
      %v1814 = vunpack.c.h.b16 %v1572
      %v1815 = vunpack.c.l.b16 %v1573
      %v1816 = vunpack.c.h.b16 %v1573
      %v1817 = vunpack.c.l.b16 %v1574
      %v1818 = vunpack.c.h.b16 %v1574
      %v1819 = vunpack.c.l.b16 %v1575
      %v1820 = vunpack.c.h.b16 %v1575
      %v1821 = vunpack.c.l.b16 %v1576
      %v1822 = vunpack.c.h.b16 %v1576
      %v1823 = vunpack.c.l.b16 %v1577
      %v1824 = vunpack.c.h.b16 %v1577
      %v1825 = vunpack.c.l.b16 %v1578
      %v1826 = vunpack.c.h.b16 %v1578
      %v1827 = vunpack.c.l.b16 %v1579
      %v1828 = vunpack.c.h.b16 %v1579
      %v1829 = vunpack.c.l.b16 %v1580
      %v1830 = vunpack.c.h.b16 %v1580
      %v1831 = vunpack.c.l.b16 %v1581
      %v1832 = vunpack.c.h.b16 %v1581
      %v1833 = vunpack.c.l.b16 %v1582
      %v1834 = vunpack.c.h.b16 %v1582
      %v1835 = vunpack.c.l.b16 %v1583
      %v1836 = vunpack.c.h.b16 %v1583
      %v1837 = vunpack.c.l.b16 %v1584
      %v1838 = vunpack.c.h.b16 %v1584
      %v1839 = vunpack.c.l.b16 %v1585
      %v1840 = vunpack.c.h.b16 %v1585
      %v1841 = vunpack.c.l.b16 %v1586
      %v1842 = vunpack.c.h.b16 %v1586
      %v1843 = vunpack.c.l.b16 %v1587
      %v1844 = vunpack.c.h.b16 %v1587
      %v1845 = vunpack.c.l.b16 %v1588
      %v1846 = vunpack.c.h.b16 %v1588
      %v1847 = vunpack.c.l.b16 %v1589
      %v1848 = vunpack.c.h.b16 %v1589
      %v1849 = vunpack.c.l.b16 %v1590
      %v1850 = vunpack.c.h.b16 %v1590
      %v1851 = vunpack.c.l.b16 %v1591
      %v1852 = vunpack.c.h.b16 %v1591
      %v1853 = vunpack.c.l.b16 %v1592
      %v1854 = vunpack.c.h.b16 %v1592
      %v1855 = vunpack.c.l.b16 %v1593
      %v1856 = vunpack.c.h.b16 %v1593
      %v1857 = vunpack.c.l.b16 %v1594
      %v1858 = vunpack.c.h.b16 %v1594
      %v1859 = vunpack.c.l.b16 %v1595
      %v1860 = vunpack.c.h.b16 %v1595
      %v1861 = vunpack.c.l.b16 %v1596
      %v1862 = vunpack.c.h.b16 %v1596
      %v1863 = vunpack.c.l.b16 %v1597
      %v1864 = vunpack.c.h.b16 %v1597
      %v1865 = vunpack.c.l.b16 %v1598
      %v1866 = vunpack.c.h.b16 %v1598
      %v1867 = vunpack.c.l.b16 %v1599
      %v1868 = vunpack.c.h.b16 %v1599
      %v1869 = vunpack.c.l.b16 %v1600
      %v1870 = vunpack.c.h.b16 %v1600
      %v1871 = vunpack.c.l.b16 %v1601
      %v1872 = vunpack.c.h.b16 %v1601
      %v1873 = vunpack.c.l.b16 %v1602
      %v1874 = vunpack.c.h.b16 %v1602
      %v1875 = vunpack.c.l.b16 %v1603
      %v1876 = vunpack.c.h.b16 %v1603
      %v1877 = vunpack.c.l.b16 %v1604
      %v1878 = vunpack.c.h.b16 %v1604
      %v1879 = vunpack.c.l.b16 %v1605
      %v1880 = vunpack.c.h.b16 %v1605
      %v1881 = vunpack.c.l.b16 %v1606
      %v1882 = vunpack.c.h.b16 %v1606
      %v1883 = vunpack.c.l.b16 %v1607
      %v1884 = vunpack.c.h.b16 %v1607
      %v1885 = vunpack.c.l.b16 %v1608
      %v1886 = vunpack.c.h.b16 %v1608
      %v1887 = vunpack.c.l.b16 %v1609
      %v1888 = vunpack.c.h.b16 %v1609
      %v1889 = vunpack.c.l.b16 %v1610
      %v1890 = vunpack.c.h.b16 %v1610
      %v1891 = vunpack.c.l.b16 %v1611
      %v1892 = vunpack.c.h.b16 %v1611
      %v1893 = vunpack.c.l.b16 %v1612
      %v1894 = vunpack.c.h.b16 %v1612
      %v1895 = vunpack.c.l.b16 %v1613
      %v1896 = vunpack.c.h.b16 %v1613
      %v1897 = vunpack.c.l.b16 %v1614
      %v1898 = vunpack.c.h.b16 %v1614
      %v1899 = vunpack.c.l.b16 %v1615
      %v1900 = vunpack.c.h.b16 %v1615
      %v1901 = vunpack.c.l.b16 %v1616
      %v1902 = vunpack.c.h.b16 %v1616
      %v1903 = vunpack.c.l.b16 %v1617
      %v1904 = vunpack.c.h.b16 %v1617
      %v1905 = vunpack.c.l.b16 %v1618
      %v1906 = vunpack.c.h.b16 %v1618
      %v1907 = vunpack.c.l.b16 %v1619
      %v1908 = vunpack.c.h.b16 %v1619
      %v1909 = vunpack.c.l.b16 %v1620
      %v1910 = vunpack.c.h.b16 %v1620
      %v1911 = vunpack.c.l.b16 %v1621
      %v1912 = vunpack.c.h.b16 %v1621
      %v1913 = vunpack.c.l.b16 %v1622
      %v1914 = vunpack.c.h.b16 %v1622
      %v1915 = vunpack.c.l.b16 %v1623
      %v1916 = vunpack.c.h.b16 %v1623
      %v1917 = vunpack.c.l.b16 %v1624
      %v1918 = vunpack.c.h.b16 %v1624
      %v1919 = vunpack.c.l.b16 %v1625
      %v1920 = vunpack.c.h.b16 %v1625
      %v1921 = vunpack.c.l.b16 %v1626
      %v1922 = vunpack.c.h.b16 %v1626
      %v1923 = vunpack.c.l.b16 %v1627
      %v1924 = vunpack.c.h.b16 %v1627
      %v1925 = vunpack.c.l.b16 %v1628
      %v1926 = vunpack.c.h.b16 %v1628
      %v1927 = vunpack.c.l.b16 %v1629
      %v1928 = vunpack.c.h.b16 %v1629
      %v1929 = vunpack.c.l.b16 %v1630
      %v1930 = vunpack.c.h.b16 %v1630
      %v1931 = vunpack.c.l.b16 %v1631
      %v1932 = vunpack.c.h.b16 %v1631
      %v1933 = vunpack.c.l.b16 %v1632
      %v1934 = vunpack.c.h.b16 %v1632
      %v1935 = vunpack.c.l.b16 %v1633
      %v1936 = vunpack.c.h.b16 %v1633
      %v1937 = vunpack.c.l.b16 %v1634
      %v1938 = vunpack.c.h.b16 %v1634
      %v1939 = vunpack.c.l.b16 %v1635
      %v1940 = vunpack.c.h.b16 %v1635
      %v1941 = vunpack.c.l.b16 %v1636
      %v1942 = vunpack.c.h.b16 %v1636
      %v1943 = vunpack.c.l.b16 %v1637
      %v1944 = vunpack.c.h.b16 %v1637
      %v1945 = vunpack.c.l.b16 %v1638
      %v1946 = vunpack.c.h.b16 %v1638
      %v1947 = vunpack.c.l.b16 %v1639
      %v1948 = vunpack.c.h.b16 %v1639
      %v1949 = vunpack.c.l.b16 %v1640
      %v1950 = vunpack.c.h.b16 %v1640
      %v1951 = vunpack.c.l.b16 %v1641
      %v1952 = vunpack.c.h.b16 %v1641
      %v1953 = vpack.c.b16 %v1765, %v1761
      %v1954 = vpack.c.b16 %v1766, %v1762
      %v1955 = vpack.c.b16 %v1767, %v1763
      %v1956 = vpack.c.b16 %v1768, %v1764
      %v1957 = vpack.c.b16 %v1773, %v1769
      %v1958 = vpack.c.b16 %v1774, %v1770
      %v1959 = vpack.c.b16 %v1775, %v1771
      %v1960 = vpack.c.b16 %v1776, %v1772
      %v1961 = vpack.c.b16 %v1781, %v1777
      %v1962 = vpack.c.b16 %v1782, %v1778
      %v1963 = vpack.c.b16 %v1783, %v1779
      %v1964 = vpack.c.b16 %v1784, %v1780
      %v1965 = vpack.c.b16 %v1789, %v1785
      %v1966 = vpack.c.b16 %v1790, %v1786
      %v1967 = vpack.c.b16 %v1791, %v1787
      %v1968 = vpack.c.b16 %v1792, %v1788
      %v1969 = vpack.c.b16 %v1797, %v1793
      %v1970 = vpack.c.b16 %v1798, %v1794
      %v1971 = vpack.c.b16 %v1799, %v1795
      %v1972 = vpack.c.b16 %v1800, %v1796
      %v1973 = vpack.c.b16 %v1805, %v1801
      %v1974 = vpack.c.b16 %v1806, %v1802
      %v1975 = vpack.c.b16 %v1807, %v1803
      %v1976 = vpack.c.b16 %v1808, %v1804
      %v1977 = vpack.c.b16 %v1813, %v1809
      %v1978 = vpack.c.b16 %v1814, %v1810
      %v1979 = vpack.c.b16 %v1815, %v1811
      %v1980 = vpack.c.b16 %v1816, %v1812
      %v1981 = vpack.c.b16 %v1821, %v1817
      %v1982 = vpack.c.b16 %v1822, %v1818
      %v1983 = vpack.c.b16 %v1823, %v1819
      %v1984 = vpack.c.b16 %v1824, %v1820
      %v1985 = vpack.c.b16 %v1829, %v1825
      %v1986 = vpack.c.b16 %v1830, %v1826
      %v1987 = vpack.c.b16 %v1831, %v1827
      %v1988 = vpack.c.b16 %v1832, %v1828
      %v1989 = vpack.c.b16 %v1837, %v1833
      %v1990 = vpack.c.b16 %v1838, %v1834
      %v1991 = vpack.c.b16 %v1839, %v1835
      %v1992 = vpack.c.b16 %v1840, %v1836
      %v1993 = vpack.c.b16 %v1845, %v1841
      %v1994 = vpack.c.b16 %v1846, %v1842
      %v1995 = vpack.c.b16 %v1847, %v1843
      %v1996 = vpack.c.b16 %v1848, %v1844
      %v1997 = vpack.c.b16 %v1853, %v1849
      %v1998 = vpack.c.b16 %v1854, %v1850
      %v1999 = vpack.c.b16 %v1855, %v1851
      %v2000 = vpack.c.b16 %v1856, %v1852
      %v2001 = vpack.c.b16 %v1861, %v1857
      %v2002 = vpack.c.b16 %v1862, %v1858
      %v2003 = vpack.c.b16 %v1863, %v1859
      %v2004 = vpack.c.b16 %v1864, %v1860
      %v2005 = vpack.c.b16 %v1869, %v1865
      %v2006 = vpack.c.b16 %v1870, %v1866
      %v2007 = vpack.c.b16 %v1871, %v1867
      %v2008 = vpack.c.b16 %v1872, %v1868
      %v2009 = vpack.c.b16 %v1877, %v1873
      %v2010 = vpack.c.b16 %v1878, %v1874
      %v2011 = vpack.c.b16 %v1879, %v1875
      %v2012 = vpack.c.b16 %v1880, %v1876
      %v2013 = vpack.c.b16 %v1885, %v1881
      %v2014 = vpack.c.b16 %v1886, %v1882
      %v2015 = vpack.c.b16 %v1887, %v1883
      %v2016 = vpack.c.b16 %v1888, %v1884
      %v2017 = vpack.c.b16 %v1893, %v1889
      %v2018 = vpack.c.b16 %v1894, %v1890
      %v2019 = vpack.c.b16 %v1895, %v1891
      %v2020 = vpack.c.b16 %v1896, %v1892
      %v2021 = vpack.c.b16 %v1901, %v1897
      %v2022 = vpack.c.b16 %v1902, %v1898
      %v2023 = vpack.c.b16 %v1903, %v1899
      %v2024 = vpack.c.b16 %v1904, %v1900
      %v2025 = vpack.c.b16 %v1909, %v1905
      %v2026 = vpack.c.b16 %v1910, %v1906
      %v2027 = vpack.c.b16 %v1911, %v1907
      %v2028 = vpack.c.b16 %v1912, %v1908
      %v2029 = vpack.c.b16 %v1917, %v1913
      %v2030 = vpack.c.b16 %v1918, %v1914
      %v2031 = vpack.c.b16 %v1919, %v1915
      %v2032 = vpack.c.b16 %v1920, %v1916
      %v2033 = vpack.c.b16 %v1925, %v1921
      %v2034 = vpack.c.b16 %v1926, %v1922
      %v2035 = vpack.c.b16 %v1927, %v1923
      %v2036 = vpack.c.b16 %v1928, %v1924
      %v2037 = vpack.c.b16 %v1933, %v1929
      %v2038 = vpack.c.b16 %v1934, %v1930
      %v2039 = vpack.c.b16 %v1935, %v1931
      %v2040 = vpack.c.b16 %v1936, %v1932
      %v2041 = vpack.c.b16 %v1941, %v1937
      %v2042 = vpack.c.b16 %v1942, %v1938
      %v2043 = vpack.c.b16 %v1943, %v1939
      %v2044 = vpack.c.b16 %v1944, %v1940
      %v2045 = vpack.c.b16 %v1949, %v1945
      %v2046 = vpack.c.b16 %v1950, %v1946
      %v2047 = vpack.c.b16 %v1951, %v1947
      %v2048 = vpack.c.b16 %v1952, %v1948
      %2145 = vmatprep.subr.bf16.mxu0 %v1954
      %2146 = vmatpush1.bf16.msra.mxu0 %v1953
      %2147 = vmatprep.subr.bf16.mxu0 %v1958
      %2148 = vmatpush1.bf16.msra.mxu0 %v1957
      %2149 = vmatprep.subr.bf16.mxu0 %v1962
      %2150 = vmatpush1.bf16.msra.mxu0 %v1961
      %2151 = vmatprep.subr.bf16.mxu0 %v1966
      %2152 = vmatpush1.bf16.msra.mxu0 %v1965
      %2153 = vmatprep.subr.bf16.mxu0 %v1970
      %2154 = vmatpush1.bf16.msra.mxu0 %v1969
      %2155 = vmatprep.subr.bf16.mxu0 %v1974
      %2156 = vmatpush1.bf16.msra.mxu0 %v1973
      %2157 = vmatprep.subr.bf16.mxu0 %v1978
      %2158 = vmatpush1.bf16.msra.mxu0 %v1977
      %2159 = vmatprep.subr.bf16.mxu0 %v1982
      %2160 = vmatpush1.bf16.msra.mxu0 %v1981
      %2161 = vmatprep.subr.bf16.mxu0 %v1986
      %2162 = vmatpush1.bf16.msra.mxu0 %v1985
      %2163 = vmatprep.subr.bf16.mxu0 %v1990
      %2164 = vmatpush1.bf16.msra.mxu0 %v1989
      %2165 = vmatprep.subr.bf16.mxu0 %v1994
      %2166 = vmatpush1.bf16.msra.mxu0 %v1993
      %2167 = vmatprep.subr.bf16.mxu0 %v1998
      %2168 = vmatpush1.bf16.msra.mxu0 %v1997
      %2169 = vmatprep.subr.bf16.mxu0 %v2002
      %2170 = vmatpush1.bf16.msra.mxu0 %v2001
      %2171 = vmatprep.subr.bf16.mxu0 %v2006
      %2172 = vmatpush1.bf16.msra.mxu0 %v2005
      %2173 = vmatprep.subr.bf16.mxu0 %v2010
      %2174 = vmatpush1.bf16.msra.mxu0 %v2009
      %2175 = vmatprep.subr.bf16.mxu0 %v2014
      %2176 = vmatpush1.bf16.msra.mxu0 %v2013
      %2177 = vmatprep.mubr.bf16.mxu0 %v1499
      %2178 = vmatmul.mubr.bf16.gmra.mrb[0].mxu0 %v1498
      %v2179 = vpop.f32.mrb[0].mxu0
      %v2180 = vadd.f32 %v1648, %v2179
      %v2181 = vpop.f32.mrb[0].mxu0
      %v2182 = vadd.f32 %v1652, %v2181
      %v2183 = vpop.f32.mrb[0].mxu0
      %v2184 = vadd.f32 %v1648, %v2183
      %v2185 = vpop.f32.mrb[0].mxu0
      %v2186 = vadd.f32 %v1652, %v2185
      %2187 = vmatprep.mubr.bf16.mxu0 %v1502
      %2188 = vmatmul.mubr.bf16.gmra.mrb[0].mxu0 %v1501
      %v2189 = vpop.f32.mrb[0].mxu0
      %v2190 = vadd.f32 %v1648, %v2189
      %v2191 = vpop.f32.mrb[0].mxu0
      %v2192 = vadd.f32 %v1652, %v2191
      %v2193 = vpop.f32.mrb[0].mxu0
      %v2194 = vadd.f32 %v1648, %v2193
      %v2195 = vpop.f32.mrb[0].mxu0
      %v2196 = vadd.f32 %v1652, %v2195
      %2197 = vmatprep.mubr.bf16.mxu0 %v1505
      %2198 = vmatmul.mubr.bf16.gmra.mrb[0].mxu0 %v1504
      %v2199 = vpop.f32.mrb[0].mxu0
      %v2200 = vadd.f32 %v1648, %v2199
      %v2201 = vpop.f32.mrb[0].mxu0
      %v2202 = vadd.f32 %v1652, %v2201
      %v2203 = vpop.f32.mrb[0].mxu0
      %v2204 = vadd.f32 %v1648, %v2203
      %v2205 = vpop.f32.mrb[0].mxu0
      %v2206 = vadd.f32 %v1652, %v2205
      %2207 = vmatprep.mubr.bf16.mxu0 %v1508
      %2208 = vmatmul.mubr.bf16.gmra.mrb[0].mxu0 %v1507
      %v2209 = vpop.f32.mrb[0].mxu0
      %v2210 = vadd.f32 %v1648, %v2209
      %v2211 = vpop.f32.mrb[0].mxu0
      %v2212 = vadd.f32 %v1652, %v2211
      %v2213 = vpop.f32.mrb[0].mxu0
      %v2214 = vadd.f32 %v1648, %v2213
      %v2215 = vpop.f32.mrb[0].mxu0
      %v2216 = vadd.f32 %v1652, %v2215
      %2217 = vmatprep.mubr.bf16.mxu0 %v1511
      %2218 = vmatmul.mubr.bf16.gmra.mrb[0].mxu0 %v1510
      %v2219 = vpop.f32.mrb[0].mxu0
      %v2220 = vadd.f32 %v1648, %v2219
      %v2221 = vpop.f32.mrb[0].mxu0
      %v2222 = vadd.f32 %v1652, %v2221
      %v2223 = vpop.f32.mrb[0].mxu0
      %v2224 = vadd.f32 %v1648, %v2223
      %v2225 = vpop.f32.mrb[0].mxu0
      %v2226 = vadd.f32 %v1652, %v2225
      %2227 = vmatprep.mubr.bf16.mxu0 %v1514
      %2228 = vmatmul.mubr.bf16.gmra.mrb[0].mxu0 %v1513
      %v2229 = vpop.f32.mrb[0].mxu0
      %v2230 = vadd.f32 %v1648, %v2229
      %v2231 = vpop.f32.mrb[0].mxu0
      %v2232 = vadd.f32 %v1652, %v2231
      %v2233 = vpop.f32.mrb[0].mxu0
      %v2234 = vadd.f32 %v1648, %v2233
      %v2235 = vpop.f32.mrb[0].mxu0
      %v2236 = vadd.f32 %v1652, %v2235
      %2237 = vmatprep.mubr.bf16.mxu0 %v1517
      %2238 = vmatmul.mubr.bf16.gmra.mrb[0].mxu0 %v1516
      %v2239 = vpop.f32.mrb[0].mxu0
      %v2240 = vadd.f32 %v1648, %v2239
      %v2241 = vpop.f32.mrb[0].mxu0
      %v2242 = vadd.f32 %v1652, %v2241
      %v2243 = vpop.f32.mrb[0].mxu0
      %v2244 = vadd.f32 %v1648, %v2243
      %v2245 = vpop.f32.mrb[0].mxu0
      %v2246 = vadd.f32 %v1652, %v2245
      %2247 = vmatprep.mubr.bf16.mxu0 %v1520
      %2248 = vmatmul.mubr.bf16.gmra.mrb[0].mxu0 %v1519
      %v2249 = vpop.f32.mrb[0].mxu0
      %v2250 = vadd.f32 %v1648, %v2249
      %v2251 = vpop.f32.mrb[0].mxu0
      %v2252 = vadd.f32 %v1652, %v2251
      %v2253 = vpop.f32.mrb[0].mxu0
      %v2254 = vadd.f32 %v1648, %v2253
      %v2255 = vpop.f32.mrb[0].mxu0
      %v2256 = vadd.f32 %v1652, %v2255
      %2257 = vmatprep.mubr.bf16.mxu0 %v1523
      %2258 = vmatmul.mubr.bf16.gmra.mrb[0].mxu0 %v1522
      %v2259 = vpop.f32.mrb[0].mxu0
      %v2260 = vadd.f32 %v1648, %v2259
      %v2261 = vpop.f32.mrb[0].mxu0
      %v2262 = vadd.f32 %v1652, %v2261
      %v2263 = vpop.f32.mrb[0].mxu0
      %v2264 = vadd.f32 %v1648, %v2263
      %v2265 = vpop.f32.mrb[0].mxu0
      %v2266 = vadd.f32 %v1652, %v2265
      %2267 = vmatprep.mubr.bf16.mxu0 %v1526
      %2268 = vmatmul.mubr.bf16.gmra.mrb[0].mxu0 %v1525
      %v2269 = vpop.f32.mrb[0].mxu0
      %v2270 = vadd.f32 %v1648, %v2269
      %v2271 = vpop.f32.mrb[0].mxu0
      %v2272 = vadd.f32 %v1652, %v2271
      %v2273 = vpop.f32.mrb[0].mxu0
      %v2274 = vadd.f32 %v1648, %v2273
      %v2275 = vpop.f32.mrb[0].mxu0
      %v2276 = vadd.f32 %v1652, %v2275
      %2277 = vmatprep.mubr.bf16.mxu0 %v1529
      %2278 = vmatmul.mubr.bf16.gmra.mrb[0].mxu0 %v1528
      %v2279 = vpop.f32.mrb[0].mxu0
      %v2280 = vadd.f32 %v1648, %v2279
      %v2281 = vpop.f32.mrb[0].mxu0
      %v2282 = vadd.f32 %v1652, %v2281
      %v2283 = vpop.f32.mrb[0].mxu0
      %v2284 = vadd.f32 %v1648, %v2283
      %v2285 = vpop.f32.mrb[0].mxu0
      %v2286 = vadd.f32 %v1652, %v2285
      %2287 = vmatprep.mubr.bf16.mxu0 %v1532
      %2288 = vmatmul.mubr.bf16.gmra.mrb[0].mxu0 %v1531
      %v2289 = vpop.f32.mrb[0].mxu0
      %v2290 = vadd.f32 %v1648, %v2289
      %v2291 = vpop.f32.mrb[0].mxu0
      %v2292 = vadd.f32 %v1652, %v2291
      %v2293 = vpop.f32.mrb[0].mxu0
      %v2294 = vadd.f32 %v1648, %v2293
      %v2295 = vpop.f32.mrb[0].mxu0
      %v2296 = vadd.f32 %v1652, %v2295
      %2297 = vmatprep.mubr.bf16.mxu0 %v1535
      %2298 = vmatmul.mubr.bf16.gmra.mrb[0].mxu0 %v1534
      %v2299 = vpop.f32.mrb[0].mxu0
      %v2300 = vadd.f32 %v1648, %v2299
      %v2301 = vpop.f32.mrb[0].mxu0
      %v2302 = vadd.f32 %v1652, %v2301
      %v2303 = vpop.f32.mrb[0].mxu0
      %v2304 = vadd.f32 %v1648, %v2303
      %v2305 = vpop.f32.mrb[0].mxu0
      %v2306 = vadd.f32 %v1652, %v2305
      %2307 = vmatprep.mubr.bf16.mxu0 %v1538
      %2308 = vmatmul.mubr.bf16.gmra.mrb[0].mxu0 %v1537
      %v2309 = vpop.f32.mrb[0].mxu0
      %v2310 = vadd.f32 %v1648, %v2309
      %v2311 = vpop.f32.mrb[0].mxu0
      %v2312 = vadd.f32 %v1652, %v2311
      %v2313 = vpop.f32.mrb[0].mxu0
      %v2314 = vadd.f32 %v1648, %v2313
      %v2315 = vpop.f32.mrb[0].mxu0
      %v2316 = vadd.f32 %v1652, %v2315
      %2317 = vmatprep.mubr.bf16.mxu0 %v1541
      %2318 = vmatmul.mubr.bf16.gmra.mrb[0].mxu0 %v1540
      %v2319 = vpop.f32.mrb[0].mxu0
      %v2320 = vadd.f32 %v1648, %v2319
      %v2321 = vpop.f32.mrb[0].mxu0
      %v2322 = vadd.f32 %v1652, %v2321
      %v2323 = vpop.f32.mrb[0].mxu0
      %v2324 = vadd.f32 %v1648, %v2323
      %v2325 = vpop.f32.mrb[0].mxu0
      %v2326 = vadd.f32 %v1652, %v2325
      %2327 = vmatprep.mubr.bf16.mxu0 %v1544
      %2328 = vmatmul.mubr.bf16.gmra.mrb[0].mxu0 %v1543
      %v2329 = vpop.f32.mrb[0].mxu0
      %v2330 = vadd.f32 %v1648, %v2329
      %v2331 = vpop.f32.mrb[0].mxu0
      %v2332 = vadd.f32 %v1652, %v2331
      %v2333 = vpop.f32.mrb[0].mxu0
      %v2334 = vadd.f32 %v1648, %v2333
      %v2335 = vpop.f32.mrb[0].mxu0
      %v2336 = vadd.f32 %v1652, %v2335
      %2337 = vdwg.mxu0
      %2338 = vmatprep.subr.bf16.mxu0 %v2018
      %2339 = vmatpush1.bf16.msra.mxu0 %v2017
      %2340 = vmatprep.subr.bf16.mxu0 %v2022
      %2341 = vmatpush1.bf16.msra.mxu0 %v2021
      %2342 = vmatprep.subr.bf16.mxu0 %v2026
      %2343 = vmatpush1.bf16.msra.mxu0 %v2025
      %2344 = vmatprep.subr.bf16.mxu0 %v2030
      %2345 = vmatpush1.bf16.msra.mxu0 %v2029
      %2346 = vmatprep.subr.bf16.mxu0 %v2034
      %2347 = vmatpush1.bf16.msra.mxu0 %v2033
      %2348 = vmatprep.subr.bf16.mxu0 %v2038
      %2349 = vmatpush1.bf16.msra.mxu0 %v2037
      %2350 = vmatprep.subr.bf16.mxu0 %v2042
      %2351 = vmatpush1.bf16.msra.mxu0 %v2041
      %2352 = vmatprep.subr.bf16.mxu0 %v2046
      %2353 = vmatpush1.bf16.msra.mxu0 %v2045
      %2354 = vmatprep.subr.bf16.mxu0 0
      %2355 = vmatpush1.bf16.msra.mxu0 0
      %2356 = vmatprep.subr.bf16.mxu0 0
      %2357 = vmatpush1.bf16.msra.mxu0 0
      %2358 = vmatprep.subr.bf16.mxu0 0
      %2359 = vmatpush1.bf16.msra.mxu0 0
      %2360 = vmatprep.subr.bf16.mxu0 0
      %2361 = vmatpush1.bf16.msra.mxu0 0
      %2362 = vmatprep.subr.bf16.mxu0 0
      %2363 = vmatpush1.bf16.msra.mxu0 0
      %2364 = vmatprep.subr.bf16.mxu0 0
      %2365 = vmatpush1.bf16.msra.mxu0 0
      %2366 = vmatprep.subr.bf16.mxu0 0
      %2367 = vmatpush1.bf16.msra.mxu0 0
      %2368 = vmatprep.subr.bf16.mxu0 0
      %2369 = vmatpush1.bf16.msra.mxu0 0
      %2370 = vmatprep.mubr.bf16.mxu0 0
      %2371 = vmatmul.mubr.bf16.gmra.mrb[0].mxu0 %v1500
      %v2372 = vpop.f32.mrb[0].mxu0
      %v2373 = vadd.f32 %v2180, %v2372
      %v2374 = vpop.f32.mrb[0].mxu0
      %v2375 = vadd.f32 %v2182, %v2374
      %v2376 = vpop.f32.mrb[0].mxu0
      %v2377 = vadd.f32 %v2184, %v2376
      %v2378 = vpop.f32.mrb[0].mxu0
      %v2379 = vadd.f32 %v2186, %v2378
      %2380 = vmatprep.mubr.bf16.mxu0 0
      %2381 = vmatmul.mubr.bf16.gmra.mrb[0].mxu0 %v1503
      %v2382 = vpop.f32.mrb[0].mxu0
      %v2383 = vadd.f32 %v2190, %v2382
      %v2384 = vpop.f32.mrb[0].mxu0
      %v2385 = vadd.f32 %v2192, %v2384
      %v2386 = vpop.f32.mrb[0].mxu0
      %v2387 = vadd.f32 %v2194, %v2386
      %v2388 = vpop.f32.mrb[0].mxu0
      %v2389 = vadd.f32 %v2196, %v2388
      %2390 = vmatprep.mubr.bf16.mxu0 0
      %2391 = vmatmul.mubr.bf16.gmra.mrb[0].mxu0 %v1506
      %v2392 = vpop.f32.mrb[0].mxu0
      %v2393 = vadd.f32 %v2200, %v2392
      %v2394 = vpop.f32.mrb[0].mxu0
      %v2395 = vadd.f32 %v2202, %v2394
      %v2396 = vpop.f32.mrb[0].mxu0
      %v2397 = vadd.f32 %v2204, %v2396
      %v2398 = vpop.f32.mrb[0].mxu0
      %v2399 = vadd.f32 %v2206, %v2398
      %2400 = vmatprep.mubr.bf16.mxu0 0
      %2401 = vmatmul.mubr.bf16.gmra.mrb[0].mxu0 %v1509
      %v2402 = vpop.f32.mrb[0].mxu0
      %v2403 = vadd.f32 %v2210, %v2402
      %v2404 = vpop.f32.mrb[0].mxu0
      %v2405 = vadd.f32 %v2212, %v2404
      %v2406 = vpop.f32.mrb[0].mxu0
      %v2407 = vadd.f32 %v2214, %v2406
      %v2408 = vpop.f32.mrb[0].mxu0
      %v2409 = vadd.f32 %v2216, %v2408
      %2410 = vmatprep.mubr.bf16.mxu0 0
      %2411 = vmatmul.mubr.bf16.gmra.mrb[0].mxu0 %v1512
      %v2412 = vpop.f32.mrb[0].mxu0
      %v2413 = vadd.f32 %v2220, %v2412
      %v2414 = vpop.f32.mrb[0].mxu0
      %v2415 = vadd.f32 %v2222, %v2414
      %v2416 = vpop.f32.mrb[0].mxu0
      %v2417 = vadd.f32 %v2224, %v2416
      %v2418 = vpop.f32.mrb[0].mxu0
      %v2419 = vadd.f32 %v2226, %v2418
      %2420 = vmatprep.mubr.bf16.mxu0 0
      %2421 = vmatmul.mubr.bf16.gmra.mrb[0].mxu0 %v1515
      %v2422 = vpop.f32.mrb[0].mxu0
      %v2423 = vadd.f32 %v2230, %v2422
      %v2424 = vpop.f32.mrb[0].mxu0
      %v2425 = vadd.f32 %v2232, %v2424
      %v2426 = vpop.f32.mrb[0].mxu0
      %v2427 = vadd.f32 %v2234, %v2426
      %v2428 = vpop.f32.mrb[0].mxu0
      %v2429 = vadd.f32 %v2236, %v2428
      %2430 = vmatprep.mubr.bf16.mxu0 0
      %2431 = vmatmul.mubr.bf16.gmra.mrb[0].mxu0 %v1518
      %v2432 = vpop.f32.mrb[0].mxu0
      %v2433 = vadd.f32 %v2240, %v2432
      %v2434 = vpop.f32.mrb[0].mxu0
      %v2435 = vadd.f32 %v2242, %v2434
      %v2436 = vpop.f32.mrb[0].mxu0
      %v2437 = vadd.f32 %v2244, %v2436
      %v2438 = vpop.f32.mrb[0].mxu0
      %v2439 = vadd.f32 %v2246, %v2438
      %2440 = vmatprep.mubr.bf16.mxu0 0
      %2441 = vmatmul.mubr.bf16.gmra.mrb[0].mxu0 %v1521
      %v2442 = vpop.f32.mrb[0].mxu0
      %v2443 = vadd.f32 %v2250, %v2442
      %v2444 = vpop.f32.mrb[0].mxu0
      %v2445 = vadd.f32 %v2252, %v2444
      %v2446 = vpop.f32.mrb[0].mxu0
      %v2447 = vadd.f32 %v2254, %v2446
      %v2448 = vpop.f32.mrb[0].mxu0
      %v2449 = vadd.f32 %v2256, %v2448
      %2450 = vmatprep.mubr.bf16.mxu0 0
      %2451 = vmatmul.mubr.bf16.gmra.mrb[0].mxu0 %v1524
      %v2452 = vpop.f32.mrb[0].mxu0
      %v2453 = vadd.f32 %v2260, %v2452
      %v2454 = vpop.f32.mrb[0].mxu0
      %v2455 = vadd.f32 %v2262, %v2454
      %v2456 = vpop.f32.mrb[0].mxu0
      %v2457 = vadd.f32 %v2264, %v2456
      %v2458 = vpop.f32.mrb[0].mxu0
      %v2459 = vadd.f32 %v2266, %v2458
      %2460 = vmatprep.mubr.bf16.mxu0 0
      %2461 = vmatmul.mubr.bf16.gmra.mrb[0].mxu0 %v1527
      %v2462 = vpop.f32.mrb[0].mxu0
      %v2463 = vadd.f32 %v2270, %v2462
      %v2464 = vpop.f32.mrb[0].mxu0
      %v2465 = vadd.f32 %v2272, %v2464
      %v2466 = vpop.f32.mrb[0].mxu0
      %v2467 = vadd.f32 %v2274, %v2466
      %v2468 = vpop.f32.mrb[0].mxu0
      %v2469 = vadd.f32 %v2276, %v2468
      %2470 = vmatprep.mubr.bf16.mxu0 0
      %2471 = vmatmul.mubr.bf16.gmra.mrb[0].mxu0 %v1530
      %v2472 = vpop.f32.mrb[0].mxu0
      %v2473 = vadd.f32 %v2280, %v2472
      %v2474 = vpop.f32.mrb[0].mxu0
      %v2475 = vadd.f32 %v2282, %v2474
      %v2476 = vpop.f32.mrb[0].mxu0
      %v2477 = vadd.f32 %v2284, %v2476
      %v2478 = vpop.f32.mrb[0].mxu0
      %v2479 = vadd.f32 %v2286, %v2478
      %2480 = vmatprep.mubr.bf16.mxu0 0
      %2481 = vmatmul.mubr.bf16.gmra.mrb[0].mxu0 %v1533
      %v2482 = vpop.f32.mrb[0].mxu0
      %v2483 = vadd.f32 %v2290, %v2482
      %v2484 = vpop.f32.mrb[0].mxu0
      %v2485 = vadd.f32 %v2292, %v2484
      %v2486 = vpop.f32.mrb[0].mxu0
      %v2487 = vadd.f32 %v2294, %v2486
      %v2488 = vpop.f32.mrb[0].mxu0
      %v2489 = vadd.f32 %v2296, %v2488
      %2490 = vmatprep.mubr.bf16.mxu0 0
      %2491 = vmatmul.mubr.bf16.gmra.mrb[0].mxu0 %v1536
      %v2492 = vpop.f32.mrb[0].mxu0
      %v2493 = vadd.f32 %v2300, %v2492
      %v2494 = vpop.f32.mrb[0].mxu0
      %v2495 = vadd.f32 %v2302, %v2494
      %v2496 = vpop.f32.mrb[0].mxu0
      %v2497 = vadd.f32 %v2304, %v2496
      %v2498 = vpop.f32.mrb[0].mxu0
      %v2499 = vadd.f32 %v2306, %v2498
      %2500 = vmatprep.mubr.bf16.mxu0 0
      %2501 = vmatmul.mubr.bf16.gmra.mrb[0].mxu0 %v1539
      %v2502 = vpop.f32.mrb[0].mxu0
      %v2503 = vadd.f32 %v2310, %v2502
      %v2504 = vpop.f32.mrb[0].mxu0
      %v2505 = vadd.f32 %v2312, %v2504
      %v2506 = vpop.f32.mrb[0].mxu0
      %v2507 = vadd.f32 %v2314, %v2506
      %v2508 = vpop.f32.mrb[0].mxu0
      %v2509 = vadd.f32 %v2316, %v2508
      %2510 = vmatprep.mubr.bf16.mxu0 0
      %2511 = vmatmul.mubr.bf16.gmra.mrb[0].mxu0 %v1542
      %v2512 = vpop.f32.mrb[0].mxu0
      %v2513 = vadd.f32 %v2320, %v2512
      %v2514 = vpop.f32.mrb[0].mxu0
      %v2515 = vadd.f32 %v2322, %v2514
      %v2516 = vpop.f32.mrb[0].mxu0
      %v2517 = vadd.f32 %v2324, %v2516
      %v2518 = vpop.f32.mrb[0].mxu0
      %v2519 = vadd.f32 %v2326, %v2518
      %2520 = vmatprep.mubr.bf16.mxu0 0
      %2521 = vmatmul.mubr.bf16.gmra.mrb[0].mxu0 %v1545
      %v2522 = vpop.f32.mrb[0].mxu0
      %v2523 = vadd.f32 %v2330, %v2522
      %v2524 = vpop.f32.mrb[0].mxu0
      %v2525 = vadd.f32 %v2332, %v2524
      %v2526 = vpop.f32.mrb[0].mxu0
      %v2527 = vadd.f32 %v2334, %v2526
      %v2528 = vpop.f32.mrb[0].mxu0
      %v2529 = vadd.f32 %v2336, %v2528
      %2530 = vdwg.mxu0
      %2531 = vmatprep.subr.bf16.mxu0 %v1956
      %2532 = vmatpush1.bf16.msra.mxu0 %v1955
      %2533 = vmatprep.subr.bf16.mxu0 %v1960
      %2534 = vmatpush1.bf16.msra.mxu0 %v1959
      %2535 = vmatprep.subr.bf16.mxu0 %v1964
      %2536 = vmatpush1.bf16.msra.mxu0 %v1963
      %2537 = vmatprep.subr.bf16.mxu0 %v1968
      %2538 = vmatpush1.bf16.msra.mxu0 %v1967
      %2539 = vmatprep.subr.bf16.mxu0 %v1972
      %2540 = vmatpush1.bf16.msra.mxu0 %v1971
      %2541 = vmatprep.subr.bf16.mxu0 %v1976
      %2542 = vmatpush1.bf16.msra.mxu0 %v1975
      %2543 = vmatprep.subr.bf16.mxu0 %v1980
      %2544 = vmatpush1.bf16.msra.mxu0 %v1979
      %2545 = vmatprep.subr.bf16.mxu0 %v1984
      %2546 = vmatpush1.bf16.msra.mxu0 %v1983
      %2547 = vmatprep.subr.bf16.mxu0 %v1988
      %2548 = vmatpush1.bf16.msra.mxu0 %v1987
      %2549 = vmatprep.subr.bf16.mxu0 %v1992
      %2550 = vmatpush1.bf16.msra.mxu0 %v1991
      %2551 = vmatprep.subr.bf16.mxu0 %v1996
      %2552 = vmatpush1.bf16.msra.mxu0 %v1995
      %2553 = vmatprep.subr.bf16.mxu0 %v2000
      %2554 = vmatpush1.bf16.msra.mxu0 %v1999
      %2555 = vmatprep.subr.bf16.mxu0 %v2004
      %2556 = vmatpush1.bf16.msra.mxu0 %v2003
      %2557 = vmatprep.subr.bf16.mxu0 %v2008
      %2558 = vmatpush1.bf16.msra.mxu0 %v2007
      %2559 = vmatprep.subr.bf16.mxu0 %v2012
      %2560 = vmatpush1.bf16.msra.mxu0 %v2011
      %2561 = vmatprep.subr.bf16.mxu0 %v2016
      %2562 = vmatpush1.bf16.msra.mxu0 %v2015
      %2563 = vmatprep.mubr.bf16.mxu0 %v1499
      %2564 = vmatmul.mubr.bf16.gmra.mrb[0].mxu0 %v1498
      %v2565 = vpop.f32.mrb[0].mxu0
      %v2566 = vadd.f32 %v1656, %v2565
      %v2567 = vpop.f32.mrb[0].mxu0
      %v2568 = vadd.f32 %v1660, %v2567
      %v2569 = vpop.f32.mrb[0].mxu0
      %v2570 = vadd.f32 %v1656, %v2569
      %v2571 = vpop.f32.mrb[0].mxu0
      %v2572 = vadd.f32 %v1660, %v2571
      %2573 = vmatprep.mubr.bf16.mxu0 %v1502
      %2574 = vmatmul.mubr.bf16.gmra.mrb[0].mxu0 %v1501
      %v2575 = vpop.f32.mrb[0].mxu0
      %v2576 = vadd.f32 %v1656, %v2575
      %v2577 = vpop.f32.mrb[0].mxu0
      %v2578 = vadd.f32 %v1660, %v2577
      %v2579 = vpop.f32.mrb[0].mxu0
      %v2580 = vadd.f32 %v1656, %v2579
      %v2581 = vpop.f32.mrb[0].mxu0
      %v2582 = vadd.f32 %v1660, %v2581
      %2583 = vmatprep.mubr.bf16.mxu0 %v1505
      %2584 = vmatmul.mubr.bf16.gmra.mrb[0].mxu0 %v1504
      %v2585 = vpop.f32.mrb[0].mxu0
      %v2586 = vadd.f32 %v1656, %v2585
      %v2587 = vpop.f32.mrb[0].mxu0
      %v2588 = vadd.f32 %v1660, %v2587
      %v2589 = vpop.f32.mrb[0].mxu0
      %v2590 = vadd.f32 %v1656, %v2589
      %v2591 = vpop.f32.mrb[0].mxu0
      %v2592 = vadd.f32 %v1660, %v2591
      %2593 = vmatprep.mubr.bf16.mxu0 %v1508
      %2594 = vmatmul.mubr.bf16.gmra.mrb[0].mxu0 %v1507
      %v2595 = vpop.f32.mrb[0].mxu0
      %v2596 = vadd.f32 %v1656, %v2595
      %v2597 = vpop.f32.mrb[0].mxu0
      %v2598 = vadd.f32 %v1660, %v2597
      %v2599 = vpop.f32.mrb[0].mxu0
      %v2600 = vadd.f32 %v1656, %v2599
      %v2601 = vpop.f32.mrb[0].mxu0
      %v2602 = vadd.f32 %v1660, %v2601
      %2603 = vmatprep.mubr.bf16.mxu0 %v1511
      %2604 = vmatmul.mubr.bf16.gmra.mrb[0].mxu0 %v1510
      %v2605 = vpop.f32.mrb[0].mxu0
      %v2606 = vadd.f32 %v1656, %v2605
      %v2607 = vpop.f32.mrb[0].mxu0
      %v2608 = vadd.f32 %v1660, %v2607
      %v2609 = vpop.f32.mrb[0].mxu0
      %v2610 = vadd.f32 %v1656, %v2609
      %v2611 = vpop.f32.mrb[0].mxu0
      %v2612 = vadd.f32 %v1660, %v2611
      %2613 = vmatprep.mubr.bf16.mxu0 %v1514
      %2614 = vmatmul.mubr.bf16.gmra.mrb[0].mxu0 %v1513
      %v2615 = vpop.f32.mrb[0].mxu0
      %v2616 = vadd.f32 %v1656, %v2615
      %v2617 = vpop.f32.mrb[0].mxu0
      %v2618 = vadd.f32 %v1660, %v2617
      %v2619 = vpop.f32.mrb[0].mxu0
      %v2620 = vadd.f32 %v1656, %v2619
      %v2621 = vpop.f32.mrb[0].mxu0
      %v2622 = vadd.f32 %v1660, %v2621
      %2623 = vmatprep.mubr.bf16.mxu0 %v1517
      %2624 = vmatmul.mubr.bf16.gmra.mrb[0].mxu0 %v1516
      %v2625 = vpop.f32.mrb[0].mxu0
      %v2626 = vadd.f32 %v1656, %v2625
      %v2627 = vpop.f32.mrb[0].mxu0
      %v2628 = vadd.f32 %v1660, %v2627
      %v2629 = vpop.f32.mrb[0].mxu0
      %v2630 = vadd.f32 %v1656, %v2629
      %v2631 = vpop.f32.mrb[0].mxu0
      %v2632 = vadd.f32 %v1660, %v2631
      %2633 = vmatprep.mubr.bf16.mxu0 %v1520
      %2634 = vmatmul.mubr.bf16.gmra.mrb[0].mxu0 %v1519
      %v2635 = vpop.f32.mrb[0].mxu0
      %v2636 = vadd.f32 %v1656, %v2635
      %v2637 = vpop.f32.mrb[0].mxu0
      %v2638 = vadd.f32 %v1660, %v2637
      %v2639 = vpop.f32.mrb[0].mxu0
      %v2640 = vadd.f32 %v1656, %v2639
      %v2641 = vpop.f32.mrb[0].mxu0
      %v2642 = vadd.f32 %v1660, %v2641
      %2643 = vmatprep.mubr.bf16.mxu0 %v1523
      %2644 = vmatmul.mubr.bf16.gmra.mrb[0].mxu0 %v1522
      %v2645 = vpop.f32.mrb[0].mxu0
      %v2646 = vadd.f32 %v1656, %v2645
      %v2647 = vpop.f32.mrb[0].mxu0
      %v2648 = vadd.f32 %v1660, %v2647
      %v2649 = vpop.f32.mrb[0].mxu0
      %v2650 = vadd.f32 %v1656, %v2649
      %v2651 = vpop.f32.mrb[0].mxu0
      %v2652 = vadd.f32 %v1660, %v2651
      %2653 = vmatprep.mubr.bf16.mxu0 %v1526
      %2654 = vmatmul.mubr.bf16.gmra.mrb[0].mxu0 %v1525
      %v2655 = vpop.f32.mrb[0].mxu0
      %v2656 = vadd.f32 %v1656, %v2655
      %v2657 = vpop.f32.mrb[0].mxu0
      %v2658 = vadd.f32 %v1660, %v2657
      %v2659 = vpop.f32.mrb[0].mxu0
      %v2660 = vadd.f32 %v1656, %v2659
      %v2661 = vpop.f32.mrb[0].mxu0
      %v2662 = vadd.f32 %v1660, %v2661
      %2663 = vmatprep.mubr.bf16.mxu0 %v1529
      %2664 = vmatmul.mubr.bf16.gmra.mrb[0].mxu0 %v1528
      %v2665 = vpop.f32.mrb[0].mxu0
      %v2666 = vadd.f32 %v1656, %v2665
      %v2667 = vpop.f32.mrb[0].mxu0
      %v2668 = vadd.f32 %v1660, %v2667
      %v2669 = vpop.f32.mrb[0].mxu0
      %v2670 = vadd.f32 %v1656, %v2669
      %v2671 = vpop.f32.mrb[0].mxu0
      %v2672 = vadd.f32 %v1660, %v2671
      %2673 = vmatprep.mubr.bf16.mxu0 %v1532
      %2674 = vmatmul.mubr.bf16.gmra.mrb[0].mxu0 %v1531
      %v2675 = vpop.f32.mrb[0].mxu0
      %v2676 = vadd.f32 %v1656, %v2675
      %v2677 = vpop.f32.mrb[0].mxu0
      %v2678 = vadd.f32 %v1660, %v2677
      %v2679 = vpop.f32.mrb[0].mxu0
      %v2680 = vadd.f32 %v1656, %v2679
      %v2681 = vpop.f32.mrb[0].mxu0
      %v2682 = vadd.f32 %v1660, %v2681
      %2683 = vmatprep.mubr.bf16.mxu0 %v1535
      %2684 = vmatmul.mubr.bf16.gmra.mrb[0].mxu0 %v1534
      %v2685 = vpop.f32.mrb[0].mxu0
      %v2686 = vadd.f32 %v1656, %v2685
      %v2687 = vpop.f32.mrb[0].mxu0
      %v2688 = vadd.f32 %v1660, %v2687
      %v2689 = vpop.f32.mrb[0].mxu0
      %v2690 = vadd.f32 %v1656, %v2689
      %v2691 = vpop.f32.mrb[0].mxu0
      %v2692 = vadd.f32 %v1660, %v2691
      %2693 = vmatprep.mubr.bf16.mxu0 %v1538
      %2694 = vmatmul.mubr.bf16.gmra.mrb[0].mxu0 %v1537
      %v2695 = vpop.f32.mrb[0].mxu0
      %v2696 = vadd.f32 %v1656, %v2695
      %v2697 = vpop.f32.mrb[0].mxu0
      %v2698 = vadd.f32 %v1660, %v2697
      %v2699 = vpop.f32.mrb[0].mxu0
      %v2700 = vadd.f32 %v1656, %v2699
      %v2701 = vpop.f32.mrb[0].mxu0
      %v2702 = vadd.f32 %v1660, %v2701
      %2703 = vmatprep.mubr.bf16.mxu0 %v1541
      %2704 = vmatmul.mubr.bf16.gmra.mrb[0].mxu0 %v1540
      %v2705 = vpop.f32.mrb[0].mxu0
      %v2706 = vadd.f32 %v1656, %v2705
      %v2707 = vpop.f32.mrb[0].mxu0
      %v2708 = vadd.f32 %v1660, %v2707
      %v2709 = vpop.f32.mrb[0].mxu0
      %v2710 = vadd.f32 %v1656, %v2709
      %v2711 = vpop.f32.mrb[0].mxu0
      %v2712 = vadd.f32 %v1660, %v2711
      %2713 = vmatprep.mubr.bf16.mxu0 %v1544
      %2714 = vmatmul.mubr.bf16.gmra.mrb[0].mxu0 %v1543
      %v2715 = vpop.f32.mrb[0].mxu0
      %v2716 = vadd.f32 %v1656, %v2715
      %v2717 = vpop.f32.mrb[0].mxu0
      %v2718 = vadd.f32 %v1660, %v2717
      %v2719 = vpop.f32.mrb[0].mxu0
      %v2720 = vadd.f32 %v1656, %v2719
      %v2721 = vpop.f32.mrb[0].mxu0
      %v2722 = vadd.f32 %v1660, %v2721
      %2723 = vdwg.mxu0
      %2724 = vmatprep.subr.bf16.mxu0 %v2020
      %2725 = vmatpush1.bf16.msra.mxu0 %v2019
      %2726 = vmatprep.subr.bf16.mxu0 %v2024
      %2727 = vmatpush1.bf16.msra.mxu0 %v2023
      %2728 = vmatprep.subr.bf16.mxu0 %v2028
      %2729 = vmatpush1.bf16.msra.mxu0 %v2027
      %2730 = vmatprep.subr.bf16.mxu0 %v2032
      %2731 = vmatpush1.bf16.msra.mxu0 %v2031
      %2732 = vmatprep.subr.bf16.mxu0 %v2036
      %2733 = vmatpush1.bf16.msra.mxu0 %v2035
      %2734 = vmatprep.subr.bf16.mxu0 %v2040
      %2735 = vmatpush1.bf16.msra.mxu0 %v2039
      %2736 = vmatprep.subr.bf16.mxu0 %v2044
      %2737 = vmatpush1.bf16.msra.mxu0 %v2043
      %2738 = vmatprep.subr.bf16.mxu0 %v2048
      %2739 = vmatpush1.bf16.msra.mxu0 %v2047
      %2740 = vmatprep.subr.bf16.mxu0 0
      %2741 = vmatpush1.bf16.msra.mxu0 0
      %2742 = vmatprep.subr.bf16.mxu0 0
      %2743 = vmatpush1.bf16.msra.mxu0 0
      %2744 = vmatprep.subr.bf16.mxu0 0
      %2745 = vmatpush1.bf16.msra.mxu0 0
      %2746 = vmatprep.subr.bf16.mxu0 0
      %2747 = vmatpush1.bf16.msra.mxu0 0
      %2748 = vmatprep.subr.bf16.mxu0 0
      %2749 = vmatpush1.bf16.msra.mxu0 0
      %2750 = vmatprep.subr.bf16.mxu0 0
      %2751 = vmatpush1.bf16.msra.mxu0 0
      %2752 = vmatprep.subr.bf16.mxu0 0
      %2753 = vmatpush1.bf16.msra.mxu0 0
      %2754 = vmatprep.subr.bf16.mxu0 0
      %2755 = vmatpush1.bf16.msra.mxu0 0
      %2756 = vmatprep.mubr.bf16.mxu0 0
      %2757 = vmatmul.mubr.bf16.gmra.mrb[0].mxu0 %v1500
      %v2758 = vpop.f32.mrb[0].mxu0
      %v2759 = vadd.f32 %v2566, %v2758
      %v2760 = vpop.f32.mrb[0].mxu0
      %v2761 = vadd.f32 %v2568, %v2760
      %v2762 = vpop.f32.mrb[0].mxu0
      %v2763 = vadd.f32 %v2570, %v2762
      %v2764 = vpop.f32.mrb[0].mxu0
      %v2765 = vadd.f32 %v2572, %v2764
      %2766 = vmatprep.mubr.bf16.mxu0 0
      %2767 = vmatmul.mubr.bf16.gmra.mrb[0].mxu0 %v1503
      %v2768 = vpop.f32.mrb[0].mxu0
      %v2769 = vadd.f32 %v2576, %v2768
      %v2770 = vpop.f32.mrb[0].mxu0
      %v2771 = vadd.f32 %v2578, %v2770
      %v2772 = vpop.f32.mrb[0].mxu0
      %v2773 = vadd.f32 %v2580, %v2772
      %v2774 = vpop.f32.mrb[0].mxu0
      %v2775 = vadd.f32 %v2582, %v2774
      %2776 = vmatprep.mubr.bf16.mxu0 0
      %2777 = vmatmul.mubr.bf16.gmra.mrb[0].mxu0 %v1506
      %v2778 = vpop.f32.mrb[0].mxu0
      %v2779 = vadd.f32 %v2586, %v2778
      %v2780 = vpop.f32.mrb[0].mxu0
      %v2781 = vadd.f32 %v2588, %v2780
      %v2782 = vpop.f32.mrb[0].mxu0
      %v2783 = vadd.f32 %v2590, %v2782
      %v2784 = vpop.f32.mrb[0].mxu0
      %v2785 = vadd.f32 %v2592, %v2784
      %2786 = vmatprep.mubr.bf16.mxu0 0
      %2787 = vmatmul.mubr.bf16.gmra.mrb[0].mxu0 %v1509
      %v2788 = vpop.f32.mrb[0].mxu0
      %v2789 = vadd.f32 %v2596, %v2788
      %v2790 = vpop.f32.mrb[0].mxu0
      %v2791 = vadd.f32 %v2598, %v2790
      %v2792 = vpop.f32.mrb[0].mxu0
      %v2793 = vadd.f32 %v2600, %v2792
      %v2794 = vpop.f32.mrb[0].mxu0
      %v2795 = vadd.f32 %v2602, %v2794
      %2796 = vmatprep.mubr.bf16.mxu0 0
      %2797 = vmatmul.mubr.bf16.gmra.mrb[0].mxu0 %v1512
      %v2798 = vpop.f32.mrb[0].mxu0
      %v2799 = vadd.f32 %v2606, %v2798
      %v2800 = vpop.f32.mrb[0].mxu0
      %v2801 = vadd.f32 %v2608, %v2800
      %v2802 = vpop.f32.mrb[0].mxu0
      %v2803 = vadd.f32 %v2610, %v2802
      %v2804 = vpop.f32.mrb[0].mxu0
      %v2805 = vadd.f32 %v2612, %v2804
      %2806 = vmatprep.mubr.bf16.mxu0 0
      %2807 = vmatmul.mubr.bf16.gmra.mrb[0].mxu0 %v1515
      %v2808 = vpop.f32.mrb[0].mxu0
      %v2809 = vadd.f32 %v2616, %v2808
      %v2810 = vpop.f32.mrb[0].mxu0
      %v2811 = vadd.f32 %v2618, %v2810
      %v2812 = vpop.f32.mrb[0].mxu0
      %v2813 = vadd.f32 %v2620, %v2812
      %v2814 = vpop.f32.mrb[0].mxu0
      %v2815 = vadd.f32 %v2622, %v2814
      %2816 = vmatprep.mubr.bf16.mxu0 0
      %2817 = vmatmul.mubr.bf16.gmra.mrb[0].mxu0 %v1518
      %v2818 = vpop.f32.mrb[0].mxu0
      %v2819 = vadd.f32 %v2626, %v2818
      %v2820 = vpop.f32.mrb[0].mxu0
      %v2821 = vadd.f32 %v2628, %v2820
      %v2822 = vpop.f32.mrb[0].mxu0
      %v2823 = vadd.f32 %v2630, %v2822
      %v2824 = vpop.f32.mrb[0].mxu0
      %v2825 = vadd.f32 %v2632, %v2824
      %2826 = vmatprep.mubr.bf16.mxu0 0
      %2827 = vmatmul.mubr.bf16.gmra.mrb[0].mxu0 %v1521
      %v2828 = vpop.f32.mrb[0].mxu0
      %v2829 = vadd.f32 %v2636, %v2828
      %v2830 = vpop.f32.mrb[0].mxu0
      %v2831 = vadd.f32 %v2638, %v2830
      %v2832 = vpop.f32.mrb[0].mxu0
      %v2833 = vadd.f32 %v2640, %v2832
      %v2834 = vpop.f32.mrb[0].mxu0
      %v2835 = vadd.f32 %v2642, %v2834
      %2836 = vmatprep.mubr.bf16.mxu0 0
      %2837 = vmatmul.mubr.bf16.gmra.mrb[0].mxu0 %v1524
      %v2838 = vpop.f32.mrb[0].mxu0
      %v2839 = vadd.f32 %v2646, %v2838
      %v2840 = vpop.f32.mrb[0].mxu0
      %v2841 = vadd.f32 %v2648, %v2840
      %v2842 = vpop.f32.mrb[0].mxu0
      %v2843 = vadd.f32 %v2650, %v2842
      %v2844 = vpop.f32.mrb[0].mxu0
      %v2845 = vadd.f32 %v2652, %v2844
      %2846 = vmatprep.mubr.bf16.mxu0 0
      %2847 = vmatmul.mubr.bf16.gmra.mrb[0].mxu0 %v1527
      %v2848 = vpop.f32.mrb[0].mxu0
      %v2849 = vadd.f32 %v2656, %v2848
      %v2850 = vpop.f32.mrb[0].mxu0
      %v2851 = vadd.f32 %v2658, %v2850
      %v2852 = vpop.f32.mrb[0].mxu0
      %v2853 = vadd.f32 %v2660, %v2852
      %v2854 = vpop.f32.mrb[0].mxu0
      %v2855 = vadd.f32 %v2662, %v2854
      %2856 = vmatprep.mubr.bf16.mxu0 0
      %2857 = vmatmul.mubr.bf16.gmra.mrb[0].mxu0 %v1530
      %v2858 = vpop.f32.mrb[0].mxu0
      %v2859 = vadd.f32 %v2666, %v2858
      %v2860 = vpop.f32.mrb[0].mxu0
      %v2861 = vadd.f32 %v2668, %v2860
      %v2862 = vpop.f32.mrb[0].mxu0
      %v2863 = vadd.f32 %v2670, %v2862
      %v2864 = vpop.f32.mrb[0].mxu0
      %v2865 = vadd.f32 %v2672, %v2864
      %2866 = vmatprep.mubr.bf16.mxu0 0
      %2867 = vmatmul.mubr.bf16.gmra.mrb[0].mxu0 %v1533
      %v2868 = vpop.f32.mrb[0].mxu0
      %v2869 = vadd.f32 %v2676, %v2868
      %v2870 = vpop.f32.mrb[0].mxu0
      %v2871 = vadd.f32 %v2678, %v2870
      %v2872 = vpop.f32.mrb[0].mxu0
      %v2873 = vadd.f32 %v2680, %v2872
      %v2874 = vpop.f32.mrb[0].mxu0
      %v2875 = vadd.f32 %v2682, %v2874
      %2876 = vmatprep.mubr.bf16.mxu0 0
      %2877 = vmatmul.mubr.bf16.gmra.mrb[0].mxu0 %v1536
      %v2878 = vpop.f32.mrb[0].mxu0
      %v2879 = vadd.f32 %v2686, %v2878
      %v2880 = vpop.f32.mrb[0].mxu0
      %v2881 = vadd.f32 %v2688, %v2880
      %v2882 = vpop.f32.mrb[0].mxu0
      %v2883 = vadd.f32 %v2690, %v2882
      %v2884 = vpop.f32.mrb[0].mxu0
      %v2885 = vadd.f32 %v2692, %v2884
      %2886 = vmatprep.mubr.bf16.mxu0 0
      %2887 = vmatmul.mubr.bf16.gmra.mrb[0].mxu0 %v1539
      %v2888 = vpop.f32.mrb[0].mxu0
      %v2889 = vadd.f32 %v2696, %v2888
      %v2890 = vpop.f32.mrb[0].mxu0
      %v2891 = vadd.f32 %v2698, %v2890
      %v2892 = vpop.f32.mrb[0].mxu0
      %v2893 = vadd.f32 %v2700, %v2892
      %v2894 = vpop.f32.mrb[0].mxu0
      %v2895 = vadd.f32 %v2702, %v2894
      %2896 = vmatprep.mubr.bf16.mxu0 0
      %2897 = vmatmul.mubr.bf16.gmra.mrb[0].mxu0 %v1542
      %v2898 = vpop.f32.mrb[0].mxu0
      %v2899 = vadd.f32 %v2706, %v2898
      %v2900 = vpop.f32.mrb[0].mxu0
      %v2901 = vadd.f32 %v2708, %v2900
      %v2902 = vpop.f32.mrb[0].mxu0
      %v2903 = vadd.f32 %v2710, %v2902
      %v2904 = vpop.f32.mrb[0].mxu0
      %v2905 = vadd.f32 %v2712, %v2904
      %2906 = vmatprep.mubr.bf16.mxu0 0
      %2907 = vmatmul.mubr.bf16.gmra.mrb[0].mxu0 %v1545
      %v2908 = vpop.f32.mrb[0].mxu0
      %v2909 = vadd.f32 %v2716, %v2908
      %v2910 = vpop.f32.mrb[0].mxu0
      %v2911 = vadd.f32 %v2718, %v2910
      %v2912 = vpop.f32.mrb[0].mxu0
      %v2913 = vadd.f32 %v2720, %v2912
      %v2914 = vpop.f32.mrb[0].mxu0
      %v2915 = vadd.f32 %v2722, %v2914
      %2916 = vdwg.mxu0
      %v2917 = vmax.f32 %v2373, 0.0
      %v2918 = vmax.f32 %v2375, 0.0
      %v2919 = vmax.f32 %v2759, 0.0
      %v2920 = vmax.f32 %v2761, 0.0
      %v2921 = vmax.f32 %v2377, 0.0
      %v2922 = vmax.f32 %v2379, 0.0
      %v2923 = vmax.f32 %v2763, 0.0
      %v2924 = vmax.f32 %v2765, 0.0
      %v2925 = vmax.f32 %v2383, 0.0
      %v2926 = vmax.f32 %v2385, 0.0
      %v2927 = vmax.f32 %v2769, 0.0
      %v2928 = vmax.f32 %v2771, 0.0
      %v2929 = vmax.f32 %v2387, 0.0
      %v2930 = vmax.f32 %v2389, 0.0
      %v2931 = vmax.f32 %v2773, 0.0
      %v2932 = vmax.f32 %v2775, 0.0
      %v2933 = vmax.f32 %v2393, 0.0
      %v2934 = vmax.f32 %v2395, 0.0
      %v2935 = vmax.f32 %v2779, 0.0
      %v2936 = vmax.f32 %v2781, 0.0
      %v2937 = vmax.f32 %v2397, 0.0
      %v2938 = vmax.f32 %v2399, 0.0
      %v2939 = vmax.f32 %v2783, 0.0
      %v2940 = vmax.f32 %v2785, 0.0
      %v2941 = vmax.f32 %v2403, 0.0
      %v2942 = vmax.f32 %v2405, 0.0
      %v2943 = vmax.f32 %v2789, 0.0
      %v2944 = vmax.f32 %v2791, 0.0
      %v2945 = vmax.f32 %v2407, 0.0
      %v2946 = vmax.f32 %v2409, 0.0
      %v2947 = vmax.f32 %v2793, 0.0
      %v2948 = vmax.f32 %v2795, 0.0
      %v2949 = vmax.f32 %v2413, 0.0
      %v2950 = vmax.f32 %v2415, 0.0
      %v2951 = vmax.f32 %v2799, 0.0
      %v2952 = vmax.f32 %v2801, 0.0
      %v2953 = vmax.f32 %v2417, 0.0
      %v2954 = vmax.f32 %v2419, 0.0
      %v2955 = vmax.f32 %v2803, 0.0
      %v2956 = vmax.f32 %v2805, 0.0
      %v2957 = vmax.f32 %v2423, 0.0
      %v2958 = vmax.f32 %v2425, 0.0
      %v2959 = vmax.f32 %v2809, 0.0
      %v2960 = vmax.f32 %v2811, 0.0
      %v2961 = vmax.f32 %v2427, 0.0
      %v2962 = vmax.f32 %v2429, 0.0
      %v2963 = vmax.f32 %v2813, 0.0
      %v2964 = vmax.f32 %v2815, 0.0
      %v2965 = vmax.f32 %v2433, 0.0
      %v2966 = vmax.f32 %v2435, 0.0
      %v2967 = vmax.f32 %v2819, 0.0
      %v2968 = vmax.f32 %v2821, 0.0
      %v2969 = vmax.f32 %v2437, 0.0
      %v2970 = vmax.f32 %v2439, 0.0
      %v2971 = vmax.f32 %v2823, 0.0
      %v2972 = vmax.f32 %v2825, 0.0
      %v2973 = vmax.f32 %v2443, 0.0
      %v2974 = vmax.f32 %v2445, 0.0
      %v2975 = vmax.f32 %v2829, 0.0
      %v2976 = vmax.f32 %v2831, 0.0
      %v2977 = vmax.f32 %v2447, 0.0
      %v2978 = vmax.f32 %v2449, 0.0
      %v2979 = vmax.f32 %v2833, 0.0
      %v2980 = vmax.f32 %v2835, 0.0
      %v2981 = vmax.f32 %v2453, 0.0
      %v2982 = vmax.f32 %v2455, 0.0
      %v2983 = vmax.f32 %v2839, 0.0
      %v2984 = vmax.f32 %v2841, 0.0
      %v2985 = vmax.f32 %v2457, 0.0
      %v2986 = vmax.f32 %v2459, 0.0
      %v2987 = vmax.f32 %v2843, 0.0
      %v2988 = vmax.f32 %v2845, 0.0
      %v2989 = vmax.f32 %v2463, 0.0
      %v2990 = vmax.f32 %v2465, 0.0
      %v2991 = vmax.f32 %v2849, 0.0
      %v2992 = vmax.f32 %v2851, 0.0
      %v2993 = vmax.f32 %v2467, 0.0
      %v2994 = vmax.f32 %v2469, 0.0
      %v2995 = vmax.f32 %v2853, 0.0
      %v2996 = vmax.f32 %v2855, 0.0
      %v2997 = vmax.f32 %v2473, 0.0
      %v2998 = vmax.f32 %v2475, 0.0
      %v2999 = vmax.f32 %v2859, 0.0
      %v3000 = vmax.f32 %v2861, 0.0
      %v3001 = vmax.f32 %v2477, 0.0
      %v3002 = vmax.f32 %v2479, 0.0
      %v3003 = vmax.f32 %v2863, 0.0
      %v3004 = vmax.f32 %v2865, 0.0
      %v3005 = vmax.f32 %v2483, 0.0
      %v3006 = vmax.f32 %v2485, 0.0
      %v3007 = vmax.f32 %v2869, 0.0
      %v3008 = vmax.f32 %v2871, 0.0
      %v3009 = vmax.f32 %v2487, 0.0
      %v3010 = vmax.f32 %v2489, 0.0
      %v3011 = vmax.f32 %v2873, 0.0
      %v3012 = vmax.f32 %v2875, 0.0
      %v3013 = vmax.f32 %v2493, 0.0
      %v3014 = vmax.f32 %v2495, 0.0
      %v3015 = vmax.f32 %v2879, 0.0
      %v3016 = vmax.f32 %v2881, 0.0
      %v3017 = vmax.f32 %v2497, 0.0
      %v3018 = vmax.f32 %v2499, 0.0
      %v3019 = vmax.f32 %v2883, 0.0
      %v3020 = vmax.f32 %v2885, 0.0
      %v3021 = vmax.f32 %v2503, 0.0
      %v3022 = vmax.f32 %v2505, 0.0
      %v3023 = vmax.f32 %v2889, 0.0
      %v3024 = vmax.f32 %v2891, 0.0
      %v3025 = vmax.f32 %v2507, 0.0
      %v3026 = vmax.f32 %v2509, 0.0
      %v3027 = vmax.f32 %v2893, 0.0
      %v3028 = vmax.f32 %v2895, 0.0
      %v3029 = vmax.f32 %v2513, 0.0
      %v3030 = vmax.f32 %v2515, 0.0
      %v3031 = vmax.f32 %v2899, 0.0
      %v3032 = vmax.f32 %v2901, 0.0
      %v3033 = vmax.f32 %v2517, 0.0
      %v3034 = vmax.f32 %v2519, 0.0
      %v3035 = vmax.f32 %v2903, 0.0
      %v3036 = vmax.f32 %v2905, 0.0
      %v3037 = vmax.f32 %v2523, 0.0
      %v3038 = vmax.f32 %v2525, 0.0
      %v3039 = vmax.f32 %v2909, 0.0
      %v3040 = vmax.f32 %v2911, 0.0
      %v3041 = vmax.f32 %v2527, 0.0
      %v3042 = vmax.f32 %v2529, 0.0
      %v3043 = vmax.f32 %v2913, 0.0
      %v3044 = vmax.f32 %v2915, 0.0
      %v3045 = vpack.c.bf16 %v2921, %v2917
      %v3046 = vpack.c.bf16 %v2922, %v2918
      %v3047 = vpack.c.bf16 %v2923, %v2919
      %v3048 = vpack.c.bf16 %v2924, %v2920
      %v3049 = vpack.c.bf16 %v2929, %v2925
      %v3050 = vpack.c.bf16 %v2930, %v2926
      %v3051 = vpack.c.bf16 %v2931, %v2927
      %v3052 = vpack.c.bf16 %v2932, %v2928
      %v3053 = vpack.c.bf16 %v2937, %v2933
      %v3054 = vpack.c.bf16 %v2938, %v2934
      %v3055 = vpack.c.bf16 %v2939, %v2935
      %v3056 = vpack.c.bf16 %v2940, %v2936
      %v3057 = vpack.c.bf16 %v2945, %v2941
      %v3058 = vpack.c.bf16 %v2946, %v2942
      %v3059 = vpack.c.bf16 %v2947, %v2943
      %v3060 = vpack.c.bf16 %v2948, %v2944
      %v3061 = vpack.c.bf16 %v2953, %v2949
      %v3062 = vpack.c.bf16 %v2954, %v2950
      %v3063 = vpack.c.bf16 %v2955, %v2951
      %v3064 = vpack.c.bf16 %v2956, %v2952
      %v3065 = vpack.c.bf16 %v2961, %v2957
      %v3066 = vpack.c.bf16 %v2962, %v2958
      %v3067 = vpack.c.bf16 %v2963, %v2959
      %v3068 = vpack.c.bf16 %v2964, %v2960
      %v3069 = vpack.c.bf16 %v2969, %v2965
      %v3070 = vpack.c.bf16 %v2970, %v2966
      %v3071 = vpack.c.bf16 %v2971, %v2967
      %v3072 = vpack.c.bf16 %v2972, %v2968
      %v3073 = vpack.c.bf16 %v2977, %v2973
      %v3074 = vpack.c.bf16 %v2978, %v2974
      %v3075 = vpack.c.bf16 %v2979, %v2975
      %v3076 = vpack.c.bf16 %v2980, %v2976
      %v3077 = vpack.c.bf16 %v2985, %v2981
      %v3078 = vpack.c.bf16 %v2986, %v2982
      %v3079 = vpack.c.bf16 %v2987, %v2983
      %v3080 = vpack.c.bf16 %v2988, %v2984
      %v3081 = vpack.c.bf16 %v2993, %v2989
      %v3082 = vpack.c.bf16 %v2994, %v2990
      %v3083 = vpack.c.bf16 %v2995, %v2991
      %v3084 = vpack.c.bf16 %v2996, %v2992
      %v3085 = vpack.c.bf16 %v3001, %v2997
      %v3086 = vpack.c.bf16 %v3002, %v2998
      %v3087 = vpack.c.bf16 %v3003, %v2999
      %v3088 = vpack.c.bf16 %v3004, %v3000
      %v3089 = vpack.c.bf16 %v3009, %v3005
      %v3090 = vpack.c.bf16 %v3010, %v3006
      %v3091 = vpack.c.bf16 %v3011, %v3007
      %v3092 = vpack.c.bf16 %v3012, %v3008
      %v3093 = vpack.c.bf16 %v3017, %v3013
      %v3094 = vpack.c.bf16 %v3018, %v3014
      %v3095 = vpack.c.bf16 %v3019, %v3015
      %v3096 = vpack.c.bf16 %v3020, %v3016
      %v3097 = vpack.c.bf16 %v3025, %v3021
      %v3098 = vpack.c.bf16 %v3026, %v3022
      %v3099 = vpack.c.bf16 %v3027, %v3023
      %v3100 = vpack.c.bf16 %v3028, %v3024
      %v3101 = vpack.c.bf16 %v3033, %v3029
      %v3102 = vpack.c.bf16 %v3034, %v3030
      %v3103 = vpack.c.bf16 %v3035, %v3031
      %v3104 = vpack.c.bf16 %v3036, %v3032
      %v3105 = vpack.c.bf16 %v3041, %v3037
      %v3106 = vpack.c.bf16 %v3042, %v3038
      %v3107 = vpack.c.bf16 %v3043, %v3039
      %v3108 = vpack.c.bf16 %v3044, %v3040
      %v3109 = vld [vmem:[%s5] sm:$0xff]
      %v3110 = vld [vmem:[%s5 + $0x8] sm:$0xff]
      %v3111 = vld [vmem:[%s5 + $0x10] sm:$0xff]
      %v3112 = vld [vmem:[%s5 + $0x18] sm:$0xff]
      %v3113 = vld [vmem:[%s5 + $0x20] sm:$0xff]
      %v3114 = vld [vmem:[%s5 + $0x28] sm:$0xff]
      %v3115 = vld [vmem:[%s5 + $0x30] sm:$0xff]
      %v3116 = vld [vmem:[%s5 + $0x38] sm:$0xff]
      %v3117 = vld [vmem:[%s5 + $0x40] sm:$0xff]
      %v3118 = vld [vmem:[%s5 + $0x48] sm:$0xff]
      %v3119 = vld [vmem:[%s5 + $0x50] sm:$0xff]
      %v3120 = vld [vmem:[%s5 + $0x58] sm:$0xff]
      %v3121 = vld [vmem:[%s5 + $0x60] sm:$0xff]
      %v3122 = vld [vmem:[%s5 + $0x68] sm:$0xff]
      %v3123 = vld [vmem:[%s5 + $0x70] sm:$0xff]
      %v3124 = vld [vmem:[%s5 + $0x78] sm:$0xff]
      %v3125 = vld [vmem:[%s5 + $0x80] sm:$0xff]
      %v3126 = vld [vmem:[%s5 + $0x88] sm:$0xff]
      %v3127 = vld [vmem:[%s5 + $0x90] sm:$0xff]
      %v3128 = vld [vmem:[%s5 + $0x98] sm:$0xff]
      %v3129 = vld [vmem:[%s5 + $0xa0] sm:$0xff]
      %v3130 = vld [vmem:[%s5 + $0xa8] sm:$0xff]
      %v3131 = vld [vmem:[%s5 + $0xb0] sm:$0xff]
      %v3132 = vld [vmem:[%s5 + $0xb8] sm:$0xff]
      %v3133 = vld [vmem:[%s5 + $0xc0] sm:$0xff]
      %v3134 = vld [vmem:[%s5 + $0xc8] sm:$0xff]
      %v3135 = vld [vmem:[%s5 + $0xd0] sm:$0xff]
      %v3136 = vld [vmem:[%s5 + $0xd8] sm:$0xff]
      %v3137 = vld [vmem:[%s5 + $0xe0] sm:$0xff]
      %v3138 = vld [vmem:[%s5 + $0xe8] sm:$0xff]
      %v3139 = vld [vmem:[%s5 + $0xf0] sm:$0xff]
      %v3140 = vld [vmem:[%s5 + $0xf8] sm:$0xff]
      %v3141 = vld [vmem:[%s5 + $0x100] sm:$0xff]
      %v3142 = vld [vmem:[%s5 + $0x108] sm:$0xff]
      %v3143 = vld [vmem:[%s5 + $0x110] sm:$0xff]
      %v3144 = vld [vmem:[%s5 + $0x118] sm:$0xff]
      %v3145 = vld [vmem:[%s5 + $0x120] sm:$0xff]
      %v3146 = vld [vmem:[%s5 + $0x128] sm:$0xff]
      %v3147 = vld [vmem:[%s5 + $0x130] sm:$0xff]
      %v3148 = vld [vmem:[%s5 + $0x138] sm:$0xff]
      %v3149 = vld [vmem:[%s5 + $0x140] sm:$0xff]
      %v3150 = vld [vmem:[%s5 + $0x148] sm:$0xff]
      %v3151 = vld [vmem:[%s5 + $0x150] sm:$0xff]
      %v3152 = vld [vmem:[%s5 + $0x158] sm:$0xff]
      %v3153 = vld [vmem:[%s5 + $0x160] sm:$0xff]
      %v3154 = vld [vmem:[%s5 + $0x168] sm:$0xff]
      %v3155 = vld [vmem:[%s5 + $0x170] sm:$0xff]
      %v3156 = vld [vmem:[%s5 + $0x178] sm:$0xff]
      %v3157 = vld [vmem:[%s5 + $0x180] sm:$0xff]
      %v3158 = vld [vmem:[%s5 + $0x188] sm:$0xff]
      %v3159 = vld [vmem:[%s5 + $0x190] sm:$0xff]
      %v3160 = vld [vmem:[%s5 + $0x198] sm:$0xff]
      %v3161 = vld [vmem:[%s5 + $0x1a0] sm:$0xff]
      %v3162 = vld [vmem:[%s5 + $0x1a8] sm:$0xff]
      %v3163 = vld [vmem:[%s5 + $0x1b0] sm:$0xff]
      %v3164 = vld [vmem:[%s5 + $0x1b8] sm:$0xff]
      %v3165 = vld [vmem:[%s5 + $0x1c0] sm:$0xff]
      %v3166 = vld [vmem:[%s5 + $0x1c8] sm:$0xff]
      %v3167 = vld [vmem:[%s5 + $0x1d0] sm:$0xff]
      %v3168 = vld [vmem:[%s5 + $0x1d8] sm:$0xff]
      %v3169 = vld [vmem:[%s5 + $0x1e0] sm:$0xff]
      %v3170 = vld [vmem:[%s5 + $0x1e8] sm:$0xff]
      %v3171 = vld [vmem:[%s5 + $0x1f0] sm:$0xff]
      %v3172 = vld [vmem:[%s5 + $0x1f8] sm:$0xff]
      %v3173 = vld [vmem:[%s5 + $0x200] sm:$0xff]
      %v3174 = vld [vmem:[%s5 + $0x208] sm:$0xff]
      %v3175 = vld [vmem:[%s5 + $0x210] sm:$0xff]
      %v3176 = vld [vmem:[%s5 + $0x218] sm:$0xff]
      %v3177 = vld [vmem:[%s5 + $0x220] sm:$0xff]
      %v3178 = vld [vmem:[%s5 + $0x228] sm:$0xff]
      %v3179 = vld [vmem:[%s5 + $0x230] sm:$0xff]
      %v3180 = vld [vmem:[%s5 + $0x238] sm:$0xff]
      %v3181 = vld [vmem:[%s5 + $0x240] sm:$0xff]
      %v3182 = vld [vmem:[%s5 + $0x248] sm:$0xff]
      %v3183 = vld [vmem:[%s5 + $0x250] sm:$0xff]
      %v3184 = vld [vmem:[%s5 + $0x258] sm:$0xff]
      %v3185 = vld [vmem:[%s5 + $0x260] sm:$0xff]
      %v3186 = vld [vmem:[%s5 + $0x268] sm:$0xff]
      %v3187 = vld [vmem:[%s5 + $0x270] sm:$0xff]
      %v3188 = vld [vmem:[%s5 + $0x278] sm:$0xff]
      %v3189 = vld [vmem:[%s5 + $0x280] sm:$0xff]
      %v3190 = vld [vmem:[%s5 + $0x288] sm:$0xff]
      %v3191 = vld [vmem:[%s5 + $0x290] sm:$0xff]
      %v3192 = vld [vmem:[%s5 + $0x298] sm:$0xff]
      %v3193 = vld [vmem:[%s5 + $0x2a0] sm:$0xff]
      %v3194 = vld [vmem:[%s5 + $0x2a8] sm:$0xff]
      %v3195 = vld [vmem:[%s5 + $0x2b0] sm:$0xff]
      %v3196 = vld [vmem:[%s5 + $0x2b8] sm:$0xff]
      %v3197 = vld [vmem:[%s5 + $0x2c0] sm:$0xff]
      %v3198 = vld [vmem:[%s5 + $0x2c8] sm:$0xff]
      %v3199 = vld [vmem:[%s5 + $0x2d0] sm:$0xff]
      %v3200 = vld [vmem:[%s5 + $0x2d8] sm:$0xff]
      %v3201 = vld [vmem:[%s5 + $0x2e0] sm:$0xff]
      %v3202 = vld [vmem:[%s5 + $0x2e8] sm:$0xff]
      %v3203 = vld [vmem:[%s5 + $0x2f0] sm:$0xff]
      %v3204 = vld [vmem:[%s5 + $0x2f8] sm:$0xff]
      %v3205 = vld [vmem:[%s5 + $0x300] sm:$0xff]
      %v3206 = vld [vmem:[%s5 + $0x308] sm:$0xff]
      %v3207 = vld [vmem:[%s5 + $0x310] sm:$0xff]
      %v3208 = vld [vmem:[%s5 + $0x318] sm:$0xff]
      %v3209 = vld [vmem:[%s5 + $0x320] sm:$0xff]
      %v3210 = vld [vmem:[%s5 + $0x328] sm:$0xff]
      %v3211 = vld [vmem:[%s5 + $0x330] sm:$0xff]
      %v3212 = vld [vmem:[%s5 + $0x338] sm:$0xff]
      %v3213 = vld [vmem:[%s5 + $0x340] sm:$0xff]
      %v3214 = vld [vmem:[%s5 + $0x348] sm:$0xff]
      %v3215 = vld [vmem:[%s5 + $0x350] sm:$0xff]
      %v3216 = vld [vmem:[%s5 + $0x358] sm:$0xff]
      %v3217 = vld [vmem:[%s5 + $0x360] sm:$0xff]
      %v3218 = vld [vmem:[%s5 + $0x368] sm:$0xff]
      %v3219 = vld [vmem:[%s5 + $0x370] sm:$0xff]
      %v3220 = vld [vmem:[%s5 + $0x378] sm:$0xff]
      %v3221 = vld [vmem:[%s5 + $0x380] sm:$0xff]
      %v3222 = vld [vmem:[%s5 + $0x388] sm:$0xff]
      %v3223 = vld [vmem:[%s5 + $0x390] sm:$0xff]
      %v3224 = vld [vmem:[%s5 + $0x398] sm:$0xff]
      %v3225 = vld [vmem:[%s5 + $0x3a0] sm:$0xff]
      %v3226 = vld [vmem:[%s5 + $0x3a8] sm:$0xff]
      %v3227 = vld [vmem:[%s5 + $0x3b0] sm:$0xff]
      %v3228 = vld [vmem:[%s5 + $0x3b8] sm:$0xff]
      %v3229 = vld [vmem:[%s5 + $0x3c0] sm:$0xff]
      %v3230 = vld [vmem:[%s5 + $0x3c8] sm:$0xff]
      %v3231 = vld [vmem:[%s5 + $0x3d0] sm:$0xff]
      %v3232 = vld [vmem:[%s5 + $0x3d8] sm:$0xff]
      %v3233 = vld [vmem:[%s5 + $0x3e0] sm:$0xff]
      %v3234 = vld [vmem:[%s5 + $0x3e8] sm:$0xff]
      %v3235 = vld [vmem:[%s5 + $0x3f0] sm:$0xff]
      %v3236 = vld [vmem:[%s5 + $0x3f8] sm:$0xff]
      %s3237 = scalar_lea.vmem %s7, 2
      %v3238 = vld [vmem:[%s3237] ss:$8 sm:$0xf]
      %v3240 = vlaneseq
      %v3241 = vshrl.u32 %v3240, 7
      %v3242 = vsub.s32 0, %v3241
      %v3243 = vrot.slane %v3238, %v3242
      %v3244 = vlaneseq
      %v3245 = vshrl.u32 %v3244, 7
      %v3246 = vsub.s32 1, %v3245
      %v3247 = vrot.slane %v3238, %v3246
      %v3248 = vlaneseq
      %v3249 = vshrl.u32 %v3248, 7
      %v3250 = vsub.s32 2, %v3249
      %v3251 = vrot.slane %v3238, %v3250
      %v3252 = vlaneseq
      %v3253 = vshrl.u32 %v3252, 7
      %v3254 = vsub.s32 3, %v3253
      %v3255 = vrot.slane %v3238, %v3254
      %v3388 = vunpack.c.l.b16 %v3109
      %v3389 = vunpack.c.h.b16 %v3109
      %v3390 = vunpack.c.l.b16 %v3110
      %v3391 = vunpack.c.h.b16 %v3110
      %v3392 = vunpack.c.l.b16 %v3111
      %v3393 = vunpack.c.h.b16 %v3111
      %v3394 = vunpack.c.l.b16 %v3112
      %v3395 = vunpack.c.h.b16 %v3112
      %v3396 = vunpack.c.l.b16 %v3113
      %v3397 = vunpack.c.h.b16 %v3113
      %v3398 = vunpack.c.l.b16 %v3114
      %v3399 = vunpack.c.h.b16 %v3114
      %v3400 = vunpack.c.l.b16 %v3115
      %v3401 = vunpack.c.h.b16 %v3115
      %v3402 = vunpack.c.l.b16 %v3116
      %v3403 = vunpack.c.h.b16 %v3116
      %v3404 = vunpack.c.l.b16 %v3117
      %v3405 = vunpack.c.h.b16 %v3117
      %v3406 = vunpack.c.l.b16 %v3118
      %v3407 = vunpack.c.h.b16 %v3118
      %v3408 = vunpack.c.l.b16 %v3119
      %v3409 = vunpack.c.h.b16 %v3119
      %v3410 = vunpack.c.l.b16 %v3120
      %v3411 = vunpack.c.h.b16 %v3120
      %v3412 = vunpack.c.l.b16 %v3121
      %v3413 = vunpack.c.h.b16 %v3121
      %v3414 = vunpack.c.l.b16 %v3122
      %v3415 = vunpack.c.h.b16 %v3122
      %v3416 = vunpack.c.l.b16 %v3123
      %v3417 = vunpack.c.h.b16 %v3123
      %v3418 = vunpack.c.l.b16 %v3124
      %v3419 = vunpack.c.h.b16 %v3124
      %v3420 = vunpack.c.l.b16 %v3125
      %v3421 = vunpack.c.h.b16 %v3125
      %v3422 = vunpack.c.l.b16 %v3126
      %v3423 = vunpack.c.h.b16 %v3126
      %v3424 = vunpack.c.l.b16 %v3127
      %v3425 = vunpack.c.h.b16 %v3127
      %v3426 = vunpack.c.l.b16 %v3128
      %v3427 = vunpack.c.h.b16 %v3128
      %v3428 = vunpack.c.l.b16 %v3129
      %v3429 = vunpack.c.h.b16 %v3129
      %v3430 = vunpack.c.l.b16 %v3130
      %v3431 = vunpack.c.h.b16 %v3130
      %v3432 = vunpack.c.l.b16 %v3131
      %v3433 = vunpack.c.h.b16 %v3131
      %v3434 = vunpack.c.l.b16 %v3132
      %v3435 = vunpack.c.h.b16 %v3132
      %v3436 = vunpack.c.l.b16 %v3133
      %v3437 = vunpack.c.h.b16 %v3133
      %v3438 = vunpack.c.l.b16 %v3134
      %v3439 = vunpack.c.h.b16 %v3134
      %v3440 = vunpack.c.l.b16 %v3135
      %v3441 = vunpack.c.h.b16 %v3135
      %v3442 = vunpack.c.l.b16 %v3136
      %v3443 = vunpack.c.h.b16 %v3136
      %v3444 = vunpack.c.l.b16 %v3137
      %v3445 = vunpack.c.h.b16 %v3137
      %v3446 = vunpack.c.l.b16 %v3138
      %v3447 = vunpack.c.h.b16 %v3138
      %v3448 = vunpack.c.l.b16 %v3139
      %v3449 = vunpack.c.h.b16 %v3139
      %v3450 = vunpack.c.l.b16 %v3140
      %v3451 = vunpack.c.h.b16 %v3140
      %v3452 = vunpack.c.l.b16 %v3141
      %v3453 = vunpack.c.h.b16 %v3141
      %v3454 = vunpack.c.l.b16 %v3142
      %v3455 = vunpack.c.h.b16 %v3142
      %v3456 = vunpack.c.l.b16 %v3143
      %v3457 = vunpack.c.h.b16 %v3143
      %v3458 = vunpack.c.l.b16 %v3144
      %v3459 = vunpack.c.h.b16 %v3144
      %v3460 = vunpack.c.l.b16 %v3145
      %v3461 = vunpack.c.h.b16 %v3145
      %v3462 = vunpack.c.l.b16 %v3146
      %v3463 = vunpack.c.h.b16 %v3146
      %v3464 = vunpack.c.l.b16 %v3147
      %v3465 = vunpack.c.h.b16 %v3147
      %v3466 = vunpack.c.l.b16 %v3148
      %v3467 = vunpack.c.h.b16 %v3148
      %v3468 = vunpack.c.l.b16 %v3149
      %v3469 = vunpack.c.h.b16 %v3149
      %v3470 = vunpack.c.l.b16 %v3150
      %v3471 = vunpack.c.h.b16 %v3150
      %v3472 = vunpack.c.l.b16 %v3151
      %v3473 = vunpack.c.h.b16 %v3151
      %v3474 = vunpack.c.l.b16 %v3152
      %v3475 = vunpack.c.h.b16 %v3152
      %v3476 = vunpack.c.l.b16 %v3153
      %v3477 = vunpack.c.h.b16 %v3153
      %v3478 = vunpack.c.l.b16 %v3154
      %v3479 = vunpack.c.h.b16 %v3154
      %v3480 = vunpack.c.l.b16 %v3155
      %v3481 = vunpack.c.h.b16 %v3155
      %v3482 = vunpack.c.l.b16 %v3156
      %v3483 = vunpack.c.h.b16 %v3156
      %v3484 = vunpack.c.l.b16 %v3157
      %v3485 = vunpack.c.h.b16 %v3157
      %v3486 = vunpack.c.l.b16 %v3158
      %v3487 = vunpack.c.h.b16 %v3158
      %v3488 = vunpack.c.l.b16 %v3159
      %v3489 = vunpack.c.h.b16 %v3159
      %v3490 = vunpack.c.l.b16 %v3160
      %v3491 = vunpack.c.h.b16 %v3160
      %v3492 = vunpack.c.l.b16 %v3161
      %v3493 = vunpack.c.h.b16 %v3161
      %v3494 = vunpack.c.l.b16 %v3162
      %v3495 = vunpack.c.h.b16 %v3162
      %v3496 = vunpack.c.l.b16 %v3163
      %v3497 = vunpack.c.h.b16 %v3163
      %v3498 = vunpack.c.l.b16 %v3164
      %v3499 = vunpack.c.h.b16 %v3164
      %v3500 = vunpack.c.l.b16 %v3165
      %v3501 = vunpack.c.h.b16 %v3165
      %v3502 = vunpack.c.l.b16 %v3166
      %v3503 = vunpack.c.h.b16 %v3166
      %v3504 = vunpack.c.l.b16 %v3167
      %v3505 = vunpack.c.h.b16 %v3167
      %v3506 = vunpack.c.l.b16 %v3168
      %v3507 = vunpack.c.h.b16 %v3168
      %v3508 = vunpack.c.l.b16 %v3169
      %v3509 = vunpack.c.h.b16 %v3169
      %v3510 = vunpack.c.l.b16 %v3170
      %v3511 = vunpack.c.h.b16 %v3170
      %v3512 = vunpack.c.l.b16 %v3171
      %v3513 = vunpack.c.h.b16 %v3171
      %v3514 = vunpack.c.l.b16 %v3172
      %v3515 = vunpack.c.h.b16 %v3172
      %v3516 = vunpack.c.l.b16 %v3173
      %v3517 = vunpack.c.h.b16 %v3173
      %v3518 = vunpack.c.l.b16 %v3174
      %v3519 = vunpack.c.h.b16 %v3174
      %v3520 = vunpack.c.l.b16 %v3175
      %v3521 = vunpack.c.h.b16 %v3175
      %v3522 = vunpack.c.l.b16 %v3176
      %v3523 = vunpack.c.h.b16 %v3176
      %v3524 = vunpack.c.l.b16 %v3177
      %v3525 = vunpack.c.h.b16 %v3177
      %v3526 = vunpack.c.l.b16 %v3178
      %v3527 = vunpack.c.h.b16 %v3178
      %v3528 = vunpack.c.l.b16 %v3179
      %v3529 = vunpack.c.h.b16 %v3179
      %v3530 = vunpack.c.l.b16 %v3180
      %v3531 = vunpack.c.h.b16 %v3180
      %v3532 = vunpack.c.l.b16 %v3181
      %v3533 = vunpack.c.h.b16 %v3181
      %v3534 = vunpack.c.l.b16 %v3182
      %v3535 = vunpack.c.h.b16 %v3182
      %v3536 = vunpack.c.l.b16 %v3183
      %v3537 = vunpack.c.h.b16 %v3183
      %v3538 = vunpack.c.l.b16 %v3184
      %v3539 = vunpack.c.h.b16 %v3184
      %v3540 = vunpack.c.l.b16 %v3185
      %v3541 = vunpack.c.h.b16 %v3185
      %v3542 = vunpack.c.l.b16 %v3186
      %v3543 = vunpack.c.h.b16 %v3186
      %v3544 = vunpack.c.l.b16 %v3187
      %v3545 = vunpack.c.h.b16 %v3187
      %v3546 = vunpack.c.l.b16 %v3188
      %v3547 = vunpack.c.h.b16 %v3188
      %v3548 = vunpack.c.l.b16 %v3189
      %v3549 = vunpack.c.h.b16 %v3189
      %v3550 = vunpack.c.l.b16 %v3190
      %v3551 = vunpack.c.h.b16 %v3190
      %v3552 = vunpack.c.l.b16 %v3191
      %v3553 = vunpack.c.h.b16 %v3191
      %v3554 = vunpack.c.l.b16 %v3192
      %v3555 = vunpack.c.h.b16 %v3192
      %v3556 = vunpack.c.l.b16 %v3193
      %v3557 = vunpack.c.h.b16 %v3193
      %v3558 = vunpack.c.l.b16 %v3194
      %v3559 = vunpack.c.h.b16 %v3194
      %v3560 = vunpack.c.l.b16 %v3195
      %v3561 = vunpack.c.h.b16 %v3195
      %v3562 = vunpack.c.l.b16 %v3196
      %v3563 = vunpack.c.h.b16 %v3196
      %v3564 = vunpack.c.l.b16 %v3197
      %v3565 = vunpack.c.h.b16 %v3197
      %v3566 = vunpack.c.l.b16 %v3198
      %v3567 = vunpack.c.h.b16 %v3198
      %v3568 = vunpack.c.l.b16 %v3199
      %v3569 = vunpack.c.h.b16 %v3199
      %v3570 = vunpack.c.l.b16 %v3200
      %v3571 = vunpack.c.h.b16 %v3200
      %v3572 = vunpack.c.l.b16 %v3201
      %v3573 = vunpack.c.h.b16 %v3201
      %v3574 = vunpack.c.l.b16 %v3202
      %v3575 = vunpack.c.h.b16 %v3202
      %v3576 = vunpack.c.l.b16 %v3203
      %v3577 = vunpack.c.h.b16 %v3203
      %v3578 = vunpack.c.l.b16 %v3204
      %v3579 = vunpack.c.h.b16 %v3204
      %v3580 = vunpack.c.l.b16 %v3205
      %v3581 = vunpack.c.h.b16 %v3205
      %v3582 = vunpack.c.l.b16 %v3206
      %v3583 = vunpack.c.h.b16 %v3206
      %v3584 = vunpack.c.l.b16 %v3207
      %v3585 = vunpack.c.h.b16 %v3207
      %v3586 = vunpack.c.l.b16 %v3208
      %v3587 = vunpack.c.h.b16 %v3208
      %v3588 = vunpack.c.l.b16 %v3209
      %v3589 = vunpack.c.h.b16 %v3209
      %v3590 = vunpack.c.l.b16 %v3210
      %v3591 = vunpack.c.h.b16 %v3210
      %v3592 = vunpack.c.l.b16 %v3211
      %v3593 = vunpack.c.h.b16 %v3211
      %v3594 = vunpack.c.l.b16 %v3212
      %v3595 = vunpack.c.h.b16 %v3212
      %v3596 = vunpack.c.l.b16 %v3213
      %v3597 = vunpack.c.h.b16 %v3213
      %v3598 = vunpack.c.l.b16 %v3214
      %v3599 = vunpack.c.h.b16 %v3214
      %v3600 = vunpack.c.l.b16 %v3215
      %v3601 = vunpack.c.h.b16 %v3215
      %v3602 = vunpack.c.l.b16 %v3216
      %v3603 = vunpack.c.h.b16 %v3216
      %v3604 = vunpack.c.l.b16 %v3217
      %v3605 = vunpack.c.h.b16 %v3217
      %v3606 = vunpack.c.l.b16 %v3218
      %v3607 = vunpack.c.h.b16 %v3218
      %v3608 = vunpack.c.l.b16 %v3219
      %v3609 = vunpack.c.h.b16 %v3219
      %v3610 = vunpack.c.l.b16 %v3220
      %v3611 = vunpack.c.h.b16 %v3220
      %v3612 = vunpack.c.l.b16 %v3221
      %v3613 = vunpack.c.h.b16 %v3221
      %v3614 = vunpack.c.l.b16 %v3222
      %v3615 = vunpack.c.h.b16 %v3222
      %v3616 = vunpack.c.l.b16 %v3223
      %v3617 = vunpack.c.h.b16 %v3223
      %v3618 = vunpack.c.l.b16 %v3224
      %v3619 = vunpack.c.h.b16 %v3224
      %v3620 = vunpack.c.l.b16 %v3225
      %v3621 = vunpack.c.h.b16 %v3225
      %v3622 = vunpack.c.l.b16 %v3226
      %v3623 = vunpack.c.h.b16 %v3226
      %v3624 = vunpack.c.l.b16 %v3227
      %v3625 = vunpack.c.h.b16 %v3227
      %v3626 = vunpack.c.l.b16 %v3228
      %v3627 = vunpack.c.h.b16 %v3228
      %v3628 = vunpack.c.l.b16 %v3229
      %v3629 = vunpack.c.h.b16 %v3229
      %v3630 = vunpack.c.l.b16 %v3230
      %v3631 = vunpack.c.h.b16 %v3230
      %v3632 = vunpack.c.l.b16 %v3231
      %v3633 = vunpack.c.h.b16 %v3231
      %v3634 = vunpack.c.l.b16 %v3232
      %v3635 = vunpack.c.h.b16 %v3232
      %v3636 = vunpack.c.l.b16 %v3233
      %v3637 = vunpack.c.h.b16 %v3233
      %v3638 = vunpack.c.l.b16 %v3234
      %v3639 = vunpack.c.h.b16 %v3234
      %v3640 = vunpack.c.l.b16 %v3235
      %v3641 = vunpack.c.h.b16 %v3235
      %v3642 = vunpack.c.l.b16 %v3236
      %v3643 = vunpack.c.h.b16 %v3236
      %v3644 = vpack.c.b16 %v3392, %v3388
      %v3645 = vpack.c.b16 %v3393, %v3389
      %v3646 = vpack.c.b16 %v3394, %v3390
      %v3647 = vpack.c.b16 %v3395, %v3391
      %v3648 = vpack.c.b16 %v3400, %v3396
      %v3649 = vpack.c.b16 %v3401, %v3397
      %v3650 = vpack.c.b16 %v3402, %v3398
      %v3651 = vpack.c.b16 %v3403, %v3399
      %v3652 = vpack.c.b16 %v3408, %v3404
      %v3653 = vpack.c.b16 %v3409, %v3405
      %v3654 = vpack.c.b16 %v3410, %v3406
      %v3655 = vpack.c.b16 %v3411, %v3407
      %v3656 = vpack.c.b16 %v3416, %v3412
      %v3657 = vpack.c.b16 %v3417, %v3413
      %v3658 = vpack.c.b16 %v3418, %v3414
      %v3659 = vpack.c.b16 %v3419, %v3415
      %v3660 = vpack.c.b16 %v3424, %v3420
      %v3661 = vpack.c.b16 %v3425, %v3421
      %v3662 = vpack.c.b16 %v3426, %v3422
      %v3663 = vpack.c.b16 %v3427, %v3423
      %v3664 = vpack.c.b16 %v3432, %v3428
      %v3665 = vpack.c.b16 %v3433, %v3429
      %v3666 = vpack.c.b16 %v3434, %v3430
      %v3667 = vpack.c.b16 %v3435, %v3431
      %v3668 = vpack.c.b16 %v3440, %v3436
      %v3669 = vpack.c.b16 %v3441, %v3437
      %v3670 = vpack.c.b16 %v3442, %v3438
      %v3671 = vpack.c.b16 %v3443, %v3439
      %v3672 = vpack.c.b16 %v3448, %v3444
      %v3673 = vpack.c.b16 %v3449, %v3445
      %v3674 = vpack.c.b16 %v3450, %v3446
      %v3675 = vpack.c.b16 %v3451, %v3447
      %v3676 = vpack.c.b16 %v3456, %v3452
      %v3677 = vpack.c.b16 %v3457, %v3453
      %v3678 = vpack.c.b16 %v3458, %v3454
      %v3679 = vpack.c.b16 %v3459, %v3455
      %v3680 = vpack.c.b16 %v3464, %v3460
      %v3681 = vpack.c.b16 %v3465, %v3461
      %v3682 = vpack.c.b16 %v3466, %v3462
      %v3683 = vpack.c.b16 %v3467, %v3463
      %v3684 = vpack.c.b16 %v3472, %v3468
      %v3685 = vpack.c.b16 %v3473, %v3469
      %v3686 = vpack.c.b16 %v3474, %v3470
      %v3687 = vpack.c.b16 %v3475, %v3471
      %v3688 = vpack.c.b16 %v3480, %v3476
      %v3689 = vpack.c.b16 %v3481, %v3477
      %v3690 = vpack.c.b16 %v3482, %v3478
      %v3691 = vpack.c.b16 %v3483, %v3479
      %v3692 = vpack.c.b16 %v3488, %v3484
      %v3693 = vpack.c.b16 %v3489, %v3485
      %v3694 = vpack.c.b16 %v3490, %v3486
      %v3695 = vpack.c.b16 %v3491, %v3487
      %v3696 = vpack.c.b16 %v3496, %v3492
      %v3697 = vpack.c.b16 %v3497, %v3493
      %v3698 = vpack.c.b16 %v3498, %v3494
      %v3699 = vpack.c.b16 %v3499, %v3495
      %v3700 = vpack.c.b16 %v3504, %v3500
      %v3701 = vpack.c.b16 %v3505, %v3501
      %v3702 = vpack.c.b16 %v3506, %v3502
      %v3703 = vpack.c.b16 %v3507, %v3503
      %v3704 = vpack.c.b16 %v3512, %v3508
      %v3705 = vpack.c.b16 %v3513, %v3509
      %v3706 = vpack.c.b16 %v3514, %v3510
      %v3707 = vpack.c.b16 %v3515, %v3511
      %v3708 = vpack.c.b16 %v3520, %v3516
      %v3709 = vpack.c.b16 %v3521, %v3517
      %v3710 = vpack.c.b16 %v3522, %v3518
      %v3711 = vpack.c.b16 %v3523, %v3519
      %v3712 = vpack.c.b16 %v3528, %v3524
      %v3713 = vpack.c.b16 %v3529, %v3525
      %v3714 = vpack.c.b16 %v3530, %v3526
      %v3715 = vpack.c.b16 %v3531, %v3527
      %v3716 = vpack.c.b16 %v3536, %v3532
      %v3717 = vpack.c.b16 %v3537, %v3533
      %v3718 = vpack.c.b16 %v3538, %v3534
      %v3719 = vpack.c.b16 %v3539, %v3535
      %v3720 = vpack.c.b16 %v3544, %v3540
      %v3721 = vpack.c.b16 %v3545, %v3541
      %v3722 = vpack.c.b16 %v3546, %v3542
      %v3723 = vpack.c.b16 %v3547, %v3543
      %v3724 = vpack.c.b16 %v3552, %v3548
      %v3725 = vpack.c.b16 %v3553, %v3549
      %v3726 = vpack.c.b16 %v3554, %v3550
      %v3727 = vpack.c.b16 %v3555, %v3551
      %v3728 = vpack.c.b16 %v3560, %v3556
      %v3729 = vpack.c.b16 %v3561, %v3557
      %v3730 = vpack.c.b16 %v3562, %v3558
      %v3731 = vpack.c.b16 %v3563, %v3559
      %v3732 = vpack.c.b16 %v3568, %v3564
      %v3733 = vpack.c.b16 %v3569, %v3565
      %v3734 = vpack.c.b16 %v3570, %v3566
      %v3735 = vpack.c.b16 %v3571, %v3567
      %v3736 = vpack.c.b16 %v3576, %v3572
      %v3737 = vpack.c.b16 %v3577, %v3573
      %v3738 = vpack.c.b16 %v3578, %v3574
      %v3739 = vpack.c.b16 %v3579, %v3575
      %v3740 = vpack.c.b16 %v3584, %v3580
      %v3741 = vpack.c.b16 %v3585, %v3581
      %v3742 = vpack.c.b16 %v3586, %v3582
      %v3743 = vpack.c.b16 %v3587, %v3583
      %v3744 = vpack.c.b16 %v3592, %v3588
      %v3745 = vpack.c.b16 %v3593, %v3589
      %v3746 = vpack.c.b16 %v3594, %v3590
      %v3747 = vpack.c.b16 %v3595, %v3591
      %v3748 = vpack.c.b16 %v3600, %v3596
      %v3749 = vpack.c.b16 %v3601, %v3597
      %v3750 = vpack.c.b16 %v3602, %v3598
      %v3751 = vpack.c.b16 %v3603, %v3599
      %v3752 = vpack.c.b16 %v3608, %v3604
      %v3753 = vpack.c.b16 %v3609, %v3605
      %v3754 = vpack.c.b16 %v3610, %v3606
      %v3755 = vpack.c.b16 %v3611, %v3607
      %v3756 = vpack.c.b16 %v3616, %v3612
      %v3757 = vpack.c.b16 %v3617, %v3613
      %v3758 = vpack.c.b16 %v3618, %v3614
      %v3759 = vpack.c.b16 %v3619, %v3615
      %v3760 = vpack.c.b16 %v3624, %v3620
      %v3761 = vpack.c.b16 %v3625, %v3621
      %v3762 = vpack.c.b16 %v3626, %v3622
      %v3763 = vpack.c.b16 %v3627, %v3623
      %v3764 = vpack.c.b16 %v3632, %v3628
      %v3765 = vpack.c.b16 %v3633, %v3629
      %v3766 = vpack.c.b16 %v3634, %v3630
      %v3767 = vpack.c.b16 %v3635, %v3631
      %v3768 = vpack.c.b16 %v3640, %v3636
      %v3769 = vpack.c.b16 %v3641, %v3637
      %v3770 = vpack.c.b16 %v3642, %v3638
      %v3771 = vpack.c.b16 %v3643, %v3639
      %3900 = vmatprep.subr.bf16.mxu0 %v3645
      %3901 = vmatpush1.bf16.msra.mxu0 %v3644
      %3902 = vmatprep.subr.bf16.mxu0 %v3649
      %3903 = vmatpush1.bf16.msra.mxu0 %v3648
      %3904 = vmatprep.subr.bf16.mxu0 %v3653
      %3905 = vmatpush1.bf16.msra.mxu0 %v3652
      %3906 = vmatprep.subr.bf16.mxu0 %v3657
      %3907 = vmatpush1.bf16.msra.mxu0 %v3656
      %3908 = vmatprep.subr.bf16.mxu0 %v3661
      %3909 = vmatpush1.bf16.msra.mxu0 %v3660
      %3910 = vmatprep.subr.bf16.mxu0 %v3665
      %3911 = vmatpush1.bf16.msra.mxu0 %v3664
      %3912 = vmatprep.subr.bf16.mxu0 %v3669
      %3913 = vmatpush1.bf16.msra.mxu0 %v3668
      %3914 = vmatprep.subr.bf16.mxu0 %v3673
      %3915 = vmatpush1.bf16.msra.mxu0 %v3672
      %3916 = vmatprep.subr.bf16.mxu0 %v3677
      %3917 = vmatpush1.bf16.msra.mxu0 %v3676
      %3918 = vmatprep.subr.bf16.mxu0 %v3681
      %3919 = vmatpush1.bf16.msra.mxu0 %v3680
      %3920 = vmatprep.subr.bf16.mxu0 %v3685
      %3921 = vmatpush1.bf16.msra.mxu0 %v3684
      %3922 = vmatprep.subr.bf16.mxu0 %v3689
      %3923 = vmatpush1.bf16.msra.mxu0 %v3688
      %3924 = vmatprep.subr.bf16.mxu0 %v3693
      %3925 = vmatpush1.bf16.msra.mxu0 %v3692
      %3926 = vmatprep.subr.bf16.mxu0 %v3697
      %3927 = vmatpush1.bf16.msra.mxu0 %v3696
      %3928 = vmatprep.subr.bf16.mxu0 %v3701
      %3929 = vmatpush1.bf16.msra.mxu0 %v3700
      %3930 = vmatprep.subr.bf16.mxu0 %v3705
      %3931 = vmatpush1.bf16.msra.mxu0 %v3704
      %3932 = vmatprep.mubr.bf16.mxu0 %v3046
      %3933 = vmatmul.mubr.bf16.gmra.mrb[0].mxu0 %v3045
      %v3934 = vpop.f32.mrb[0].mxu0
      %v3935 = vadd.f32 %v3243, %v3934
      %v3936 = vpop.f32.mrb[0].mxu0
      %v3937 = vadd.f32 %v3247, %v3936
      %v3938 = vpop.f32.mrb[0].mxu0
      %v3939 = vadd.f32 %v3243, %v3938
      %v3940 = vpop.f32.mrb[0].mxu0
      %v3941 = vadd.f32 %v3247, %v3940
      %3942 = vmatprep.mubr.bf16.mxu0 %v3050
      %3943 = vmatmul.mubr.bf16.gmra.mrb[0].mxu0 %v3049
      %v3944 = vpop.f32.mrb[0].mxu0
      %v3945 = vadd.f32 %v3243, %v3944
      %v3946 = vpop.f32.mrb[0].mxu0
      %v3947 = vadd.f32 %v3247, %v3946
      %v3948 = vpop.f32.mrb[0].mxu0
      %v3949 = vadd.f32 %v3243, %v3948
      %v3950 = vpop.f32.mrb[0].mxu0
      %v3951 = vadd.f32 %v3247, %v3950
      %3952 = vmatprep.mubr.bf16.mxu0 %v3054
      %3953 = vmatmul.mubr.bf16.gmra.mrb[0].mxu0 %v3053
      %v3954 = vpop.f32.mrb[0].mxu0
      %v3955 = vadd.f32 %v3243, %v3954
      %v3956 = vpop.f32.mrb[0].mxu0
      %v3957 = vadd.f32 %v3247, %v3956
      %v3958 = vpop.f32.mrb[0].mxu0
      %v3959 = vadd.f32 %v3243, %v3958
      %v3960 = vpop.f32.mrb[0].mxu0
      %v3961 = vadd.f32 %v3247, %v3960
      %3962 = vmatprep.mubr.bf16.mxu0 %v3058
      %3963 = vmatmul.mubr.bf16.gmra.mrb[0].mxu0 %v3057
      %v3964 = vpop.f32.mrb[0].mxu0
      %v3965 = vadd.f32 %v3243, %v3964
      %v3966 = vpop.f32.mrb[0].mxu0
      %v3967 = vadd.f32 %v3247, %v3966
      %v3968 = vpop.f32.mrb[0].mxu0
      %v3969 = vadd.f32 %v3243, %v3968
      %v3970 = vpop.f32.mrb[0].mxu0
      %v3971 = vadd.f32 %v3247, %v3970
      %3972 = vmatprep.mubr.bf16.mxu0 %v3062
      %3973 = vmatmul.mubr.bf16.gmra.mrb[0].mxu0 %v3061
      %v3974 = vpop.f32.mrb[0].mxu0
      %v3975 = vadd.f32 %v3243, %v3974
      %v3976 = vpop.f32.mrb[0].mxu0
      %v3977 = vadd.f32 %v3247, %v3976
      %v3978 = vpop.f32.mrb[0].mxu0
      %v3979 = vadd.f32 %v3243, %v3978
      %v3980 = vpop.f32.mrb[0].mxu0
      %v3981 = vadd.f32 %v3247, %v3980
      %3982 = vmatprep.mubr.bf16.mxu0 %v3066
      %3983 = vmatmul.mubr.bf16.gmra.mrb[0].mxu0 %v3065
      %v3984 = vpop.f32.mrb[0].mxu0
      %v3985 = vadd.f32 %v3243, %v3984
      %v3986 = vpop.f32.mrb[0].mxu0
      %v3987 = vadd.f32 %v3247, %v3986
      %v3988 = vpop.f32.mrb[0].mxu0
      %v3989 = vadd.f32 %v3243, %v3988
      %v3990 = vpop.f32.mrb[0].mxu0
      %v3991 = vadd.f32 %v3247, %v3990
      %3992 = vmatprep.mubr.bf16.mxu0 %v3070
      %3993 = vmatmul.mubr.bf16.gmra.mrb[0].mxu0 %v3069
      %v3994 = vpop.f32.mrb[0].mxu0
      %v3995 = vadd.f32 %v3243, %v3994
      %v3996 = vpop.f32.mrb[0].mxu0
      %v3997 = vadd.f32 %v3247, %v3996
      %v3998 = vpop.f32.mrb[0].mxu0
      %v3999 = vadd.f32 %v3243, %v3998
      %v4000 = vpop.f32.mrb[0].mxu0
      %v4001 = vadd.f32 %v3247, %v4000
      %4002 = vmatprep.mubr.bf16.mxu0 %v3074
      %4003 = vmatmul.mubr.bf16.gmra.mrb[0].mxu0 %v3073
      %v4004 = vpop.f32.mrb[0].mxu0
      %v4005 = vadd.f32 %v3243, %v4004
      %v4006 = vpop.f32.mrb[0].mxu0
      %v4007 = vadd.f32 %v3247, %v4006
      %v4008 = vpop.f32.mrb[0].mxu0
      %v4009 = vadd.f32 %v3243, %v4008
      %v4010 = vpop.f32.mrb[0].mxu0
      %v4011 = vadd.f32 %v3247, %v4010
      %4012 = vmatprep.mubr.bf16.mxu0 %v3078
      %4013 = vmatmul.mubr.bf16.gmra.mrb[0].mxu0 %v3077
      %v4014 = vpop.f32.mrb[0].mxu0
      %v4015 = vadd.f32 %v3243, %v4014
      %v4016 = vpop.f32.mrb[0].mxu0
      %v4017 = vadd.f32 %v3247, %v4016
      %v4018 = vpop.f32.mrb[0].mxu0
      %v4019 = vadd.f32 %v3243, %v4018
      %v4020 = vpop.f32.mrb[0].mxu0
      %v4021 = vadd.f32 %v3247, %v4020
      %4022 = vmatprep.mubr.bf16.mxu0 %v3082
      %4023 = vmatmul.mubr.bf16.gmra.mrb[0].mxu0 %v3081
      %v4024 = vpop.f32.mrb[0].mxu0
      %v4025 = vadd.f32 %v3243, %v4024
      %v4026 = vpop.f32.mrb[0].mxu0
      %v4027 = vadd.f32 %v3247, %v4026
      %v4028 = vpop.f32.mrb[0].mxu0
      %v4029 = vadd.f32 %v3243, %v4028
      %v4030 = vpop.f32.mrb[0].mxu0
      %v4031 = vadd.f32 %v3247, %v4030
      %4032 = vmatprep.mubr.bf16.mxu0 %v3086
      %4033 = vmatmul.mubr.bf16.gmra.mrb[0].mxu0 %v3085
      %v4034 = vpop.f32.mrb[0].mxu0
      %v4035 = vadd.f32 %v3243, %v4034
      %v4036 = vpop.f32.mrb[0].mxu0
      %v4037 = vadd.f32 %v3247, %v4036
      %v4038 = vpop.f32.mrb[0].mxu0
      %v4039 = vadd.f32 %v3243, %v4038
      %v4040 = vpop.f32.mrb[0].mxu0
      %v4041 = vadd.f32 %v3247, %v4040
      %4042 = vmatprep.mubr.bf16.mxu0 %v3090
      %4043 = vmatmul.mubr.bf16.gmra.mrb[0].mxu0 %v3089
      %v4044 = vpop.f32.mrb[0].mxu0
      %v4045 = vadd.f32 %v3243, %v4044
      %v4046 = vpop.f32.mrb[0].mxu0
      %v4047 = vadd.f32 %v3247, %v4046
      %v4048 = vpop.f32.mrb[0].mxu0
      %v4049 = vadd.f32 %v3243, %v4048
      %v4050 = vpop.f32.mrb[0].mxu0
      %v4051 = vadd.f32 %v3247, %v4050
      %4052 = vmatprep.mubr.bf16.mxu0 %v3094
      %4053 = vmatmul.mubr.bf16.gmra.mrb[0].mxu0 %v3093
      %v4054 = vpop.f32.mrb[0].mxu0
      %v4055 = vadd.f32 %v3243, %v4054
      %v4056 = vpop.f32.mrb[0].mxu0
      %v4057 = vadd.f32 %v3247, %v4056
      %v4058 = vpop.f32.mrb[0].mxu0
      %v4059 = vadd.f32 %v3243, %v4058
      %v4060 = vpop.f32.mrb[0].mxu0
      %v4061 = vadd.f32 %v3247, %v4060
      %4062 = vmatprep.mubr.bf16.mxu0 %v3098
      %4063 = vmatmul.mubr.bf16.gmra.mrb[0].mxu0 %v3097
      %v4064 = vpop.f32.mrb[0].mxu0
      %v4065 = vadd.f32 %v3243, %v4064
      %v4066 = vpop.f32.mrb[0].mxu0
      %v4067 = vadd.f32 %v3247, %v4066
      %v4068 = vpop.f32.mrb[0].mxu0
      %v4069 = vadd.f32 %v3243, %v4068
      %v4070 = vpop.f32.mrb[0].mxu0
      %v4071 = vadd.f32 %v3247, %v4070
      %4072 = vmatprep.mubr.bf16.mxu0 %v3102
      %4073 = vmatmul.mubr.bf16.gmra.mrb[0].mxu0 %v3101
      %v4074 = vpop.f32.mrb[0].mxu0
      %v4075 = vadd.f32 %v3243, %v4074
      %v4076 = vpop.f32.mrb[0].mxu0
      %v4077 = vadd.f32 %v3247, %v4076
      %v4078 = vpop.f32.mrb[0].mxu0
      %v4079 = vadd.f32 %v3243, %v4078
      %v4080 = vpop.f32.mrb[0].mxu0
      %v4081 = vadd.f32 %v3247, %v4080
      %4082 = vmatprep.mubr.bf16.mxu0 %v3106
      %4083 = vmatmul.mubr.bf16.gmra.mrb[0].mxu0 %v3105
      %v4084 = vpop.f32.mrb[0].mxu0
      %v4085 = vadd.f32 %v3243, %v4084
      %v4086 = vpop.f32.mrb[0].mxu0
      %v4087 = vadd.f32 %v3247, %v4086
      %v4088 = vpop.f32.mrb[0].mxu0
      %v4089 = vadd.f32 %v3243, %v4088
      %v4090 = vpop.f32.mrb[0].mxu0
      %v4091 = vadd.f32 %v3247, %v4090
      %4092 = vdwg.mxu0
      %4093 = vmatprep.subr.bf16.mxu0 %v3709
      %4094 = vmatpush1.bf16.msra.mxu0 %v3708
      %4095 = vmatprep.subr.bf16.mxu0 %v3713
      %4096 = vmatpush1.bf16.msra.mxu0 %v3712
      %4097 = vmatprep.subr.bf16.mxu0 %v3717
      %4098 = vmatpush1.bf16.msra.mxu0 %v3716
      %4099 = vmatprep.subr.bf16.mxu0 %v3721
      %4100 = vmatpush1.bf16.msra.mxu0 %v3720
      %4101 = vmatprep.subr.bf16.mxu0 %v3725
      %4102 = vmatpush1.bf16.msra.mxu0 %v3724
      %4103 = vmatprep.subr.bf16.mxu0 %v3729
      %4104 = vmatpush1.bf16.msra.mxu0 %v3728
      %4105 = vmatprep.subr.bf16.mxu0 %v3733
      %4106 = vmatpush1.bf16.msra.mxu0 %v3732
      %4107 = vmatprep.subr.bf16.mxu0 %v3737
      %4108 = vmatpush1.bf16.msra.mxu0 %v3736
      %4109 = vmatprep.subr.bf16.mxu0 %v3741
      %4110 = vmatpush1.bf16.msra.mxu0 %v3740
      %4111 = vmatprep.subr.bf16.mxu0 %v3745
      %4112 = vmatpush1.bf16.msra.mxu0 %v3744
      %4113 = vmatprep.subr.bf16.mxu0 %v3749
      %4114 = vmatpush1.bf16.msra.mxu0 %v3748
      %4115 = vmatprep.subr.bf16.mxu0 %v3753
      %4116 = vmatpush1.bf16.msra.mxu0 %v3752
      %4117 = vmatprep.subr.bf16.mxu0 %v3757
      %4118 = vmatpush1.bf16.msra.mxu0 %v3756
      %4119 = vmatprep.subr.bf16.mxu0 %v3761
      %4120 = vmatpush1.bf16.msra.mxu0 %v3760
      %4121 = vmatprep.subr.bf16.mxu0 %v3765
      %4122 = vmatpush1.bf16.msra.mxu0 %v3764
      %4123 = vmatprep.subr.bf16.mxu0 %v3769
      %4124 = vmatpush1.bf16.msra.mxu0 %v3768
      %4125 = vmatprep.mubr.bf16.mxu0 %v3048
      %4126 = vmatmul.mubr.bf16.gmra.mrb[0].mxu0 %v3047
      %v4127 = vpop.f32.mrb[0].mxu0
      %v4128 = vadd.f32 %v3935, %v4127
      %v4129 = vpop.f32.mrb[0].mxu0
      %v4130 = vadd.f32 %v3937, %v4129
      %v4131 = vpop.f32.mrb[0].mxu0
      %v4132 = vadd.f32 %v3939, %v4131
      %v4133 = vpop.f32.mrb[0].mxu0
      %v4134 = vadd.f32 %v3941, %v4133
      %4135 = vmatprep.mubr.bf16.mxu0 %v3052
      %4136 = vmatmul.mubr.bf16.gmra.mrb[0].mxu0 %v3051
      %v4137 = vpop.f32.mrb[0].mxu0
      %v4138 = vadd.f32 %v3945, %v4137
      %v4139 = vpop.f32.mrb[0].mxu0
      %v4140 = vadd.f32 %v3947, %v4139
      %v4141 = vpop.f32.mrb[0].mxu0
      %v4142 = vadd.f32 %v3949, %v4141
      %v4143 = vpop.f32.mrb[0].mxu0
      %v4144 = vadd.f32 %v3951, %v4143
      %4145 = vmatprep.mubr.bf16.mxu0 %v3056
      %4146 = vmatmul.mubr.bf16.gmra.mrb[0].mxu0 %v3055
      %v4147 = vpop.f32.mrb[0].mxu0
      %v4148 = vadd.f32 %v3955, %v4147
      %v4149 = vpop.f32.mrb[0].mxu0
      %v4150 = vadd.f32 %v3957, %v4149
      %v4151 = vpop.f32.mrb[0].mxu0
      %v4152 = vadd.f32 %v3959, %v4151
      %v4153 = vpop.f32.mrb[0].mxu0
      %v4154 = vadd.f32 %v3961, %v4153
      %4155 = vmatprep.mubr.bf16.mxu0 %v3060
      %4156 = vmatmul.mubr.bf16.gmra.mrb[0].mxu0 %v3059
      %v4157 = vpop.f32.mrb[0].mxu0
      %v4158 = vadd.f32 %v3965, %v4157
      %v4159 = vpop.f32.mrb[0].mxu0
      %v4160 = vadd.f32 %v3967, %v4159
      %v4161 = vpop.f32.mrb[0].mxu0
      %v4162 = vadd.f32 %v3969, %v4161
      %v4163 = vpop.f32.mrb[0].mxu0
      %v4164 = vadd.f32 %v3971, %v4163
      %4165 = vmatprep.mubr.bf16.mxu0 %v3064
      %4166 = vmatmul.mubr.bf16.gmra.mrb[0].mxu0 %v3063
      %v4167 = vpop.f32.mrb[0].mxu0
      %v4168 = vadd.f32 %v3975, %v4167
      %v4169 = vpop.f32.mrb[0].mxu0
      %v4170 = vadd.f32 %v3977, %v4169
      %v4171 = vpop.f32.mrb[0].mxu0
      %v4172 = vadd.f32 %v3979, %v4171
      %v4173 = vpop.f32.mrb[0].mxu0
      %v4174 = vadd.f32 %v3981, %v4173
      %4175 = vmatprep.mubr.bf16.mxu0 %v3068
      %4176 = vmatmul.mubr.bf16.gmra.mrb[0].mxu0 %v3067
      %v4177 = vpop.f32.mrb[0].mxu0
      %v4178 = vadd.f32 %v3985, %v4177
      %v4179 = vpop.f32.mrb[0].mxu0
      %v4180 = vadd.f32 %v3987, %v4179
      %v4181 = vpop.f32.mrb[0].mxu0
      %v4182 = vadd.f32 %v3989, %v4181
      %v4183 = vpop.f32.mrb[0].mxu0
      %v4184 = vadd.f32 %v3991, %v4183
      %4185 = vmatprep.mubr.bf16.mxu0 %v3072
      %4186 = vmatmul.mubr.bf16.gmra.mrb[0].mxu0 %v3071
      %v4187 = vpop.f32.mrb[0].mxu0
      %v4188 = vadd.f32 %v3995, %v4187
      %v4189 = vpop.f32.mrb[0].mxu0
      %v4190 = vadd.f32 %v3997, %v4189
      %v4191 = vpop.f32.mrb[0].mxu0
      %v4192 = vadd.f32 %v3999, %v4191
      %v4193 = vpop.f32.mrb[0].mxu0
      %v4194 = vadd.f32 %v4001, %v4193
      %4195 = vmatprep.mubr.bf16.mxu0 %v3076
      %4196 = vmatmul.mubr.bf16.gmra.mrb[0].mxu0 %v3075
      %v4197 = vpop.f32.mrb[0].mxu0
      %v4198 = vadd.f32 %v4005, %v4197
      %v4199 = vpop.f32.mrb[0].mxu0
      %v4200 = vadd.f32 %v4007, %v4199
      %v4201 = vpop.f32.mrb[0].mxu0
      %v4202 = vadd.f32 %v4009, %v4201
      %v4203 = vpop.f32.mrb[0].mxu0
      %v4204 = vadd.f32 %v4011, %v4203
      %4205 = vmatprep.mubr.bf16.mxu0 %v3080
      %4206 = vmatmul.mubr.bf16.gmra.mrb[0].mxu0 %v3079
      %v4207 = vpop.f32.mrb[0].mxu0
      %v4208 = vadd.f32 %v4015, %v4207
      %v4209 = vpop.f32.mrb[0].mxu0
      %v4210 = vadd.f32 %v4017, %v4209
      %v4211 = vpop.f32.mrb[0].mxu0
      %v4212 = vadd.f32 %v4019, %v4211
      %v4213 = vpop.f32.mrb[0].mxu0
      %v4214 = vadd.f32 %v4021, %v4213
      %4215 = vmatprep.mubr.bf16.mxu0 %v3084
      %4216 = vmatmul.mubr.bf16.gmra.mrb[0].mxu0 %v3083
      %v4217 = vpop.f32.mrb[0].mxu0
      %v4218 = vadd.f32 %v4025, %v4217
      %v4219 = vpop.f32.mrb[0].mxu0
      %v4220 = vadd.f32 %v4027, %v4219
      %v4221 = vpop.f32.mrb[0].mxu0
      %v4222 = vadd.f32 %v4029, %v4221
      %v4223 = vpop.f32.mrb[0].mxu0
      %v4224 = vadd.f32 %v4031, %v4223
      %4225 = vmatprep.mubr.bf16.mxu0 %v3088
      %4226 = vmatmul.mubr.bf16.gmra.mrb[0].mxu0 %v3087
      %v4227 = vpop.f32.mrb[0].mxu0
      %v4228 = vadd.f32 %v4035, %v4227
      %v4229 = vpop.f32.mrb[0].mxu0
      %v4230 = vadd.f32 %v4037, %v4229
      %v4231 = vpop.f32.mrb[0].mxu0
      %v4232 = vadd.f32 %v4039, %v4231
      %v4233 = vpop.f32.mrb[0].mxu0
      %v4234 = vadd.f32 %v4041, %v4233
      %4235 = vmatprep.mubr.bf16.mxu0 %v3092
      %4236 = vmatmul.mubr.bf16.gmra.mrb[0].mxu0 %v3091
      %v4237 = vpop.f32.mrb[0].mxu0
      %v4238 = vadd.f32 %v4045, %v4237
      %v4239 = vpop.f32.mrb[0].mxu0
      %v4240 = vadd.f32 %v4047, %v4239
      %v4241 = vpop.f32.mrb[0].mxu0
      %v4242 = vadd.f32 %v4049, %v4241
      %v4243 = vpop.f32.mrb[0].mxu0
      %v4244 = vadd.f32 %v4051, %v4243
      %4245 = vmatprep.mubr.bf16.mxu0 %v3096
      %4246 = vmatmul.mubr.bf16.gmra.mrb[0].mxu0 %v3095
      %v4247 = vpop.f32.mrb[0].mxu0
      %v4248 = vadd.f32 %v4055, %v4247
      %v4249 = vpop.f32.mrb[0].mxu0
      %v4250 = vadd.f32 %v4057, %v4249
      %v4251 = vpop.f32.mrb[0].mxu0
      %v4252 = vadd.f32 %v4059, %v4251
      %v4253 = vpop.f32.mrb[0].mxu0
      %v4254 = vadd.f32 %v4061, %v4253
      %4255 = vmatprep.mubr.bf16.mxu0 %v3100
      %4256 = vmatmul.mubr.bf16.gmra.mrb[0].mxu0 %v3099
      %v4257 = vpop.f32.mrb[0].mxu0
      %v4258 = vadd.f32 %v4065, %v4257
      %v4259 = vpop.f32.mrb[0].mxu0
      %v4260 = vadd.f32 %v4067, %v4259
      %v4261 = vpop.f32.mrb[0].mxu0
      %v4262 = vadd.f32 %v4069, %v4261
      %v4263 = vpop.f32.mrb[0].mxu0
      %v4264 = vadd.f32 %v4071, %v4263
      %4265 = vmatprep.mubr.bf16.mxu0 %v3104
      %4266 = vmatmul.mubr.bf16.gmra.mrb[0].mxu0 %v3103
      %v4267 = vpop.f32.mrb[0].mxu0
      %v4268 = vadd.f32 %v4075, %v4267
      %v4269 = vpop.f32.mrb[0].mxu0
      %v4270 = vadd.f32 %v4077, %v4269
      %v4271 = vpop.f32.mrb[0].mxu0
      %v4272 = vadd.f32 %v4079, %v4271
      %v4273 = vpop.f32.mrb[0].mxu0
      %v4274 = vadd.f32 %v4081, %v4273
      %4275 = vmatprep.mubr.bf16.mxu0 %v3108
      %4276 = vmatmul.mubr.bf16.gmra.mrb[0].mxu0 %v3107
      %v4277 = vpop.f32.mrb[0].mxu0
      %v4278 = vadd.f32 %v4085, %v4277
      %v4279 = vpop.f32.mrb[0].mxu0
      %v4280 = vadd.f32 %v4087, %v4279
      %v4281 = vpop.f32.mrb[0].mxu0
      %v4282 = vadd.f32 %v4089, %v4281
      %v4283 = vpop.f32.mrb[0].mxu0
      %v4284 = vadd.f32 %v4091, %v4283
      %4285 = vdwg.mxu0
      %4286 = vmatprep.subr.bf16.mxu0 %v3647
      %4287 = vmatpush1.bf16.msra.mxu0 %v3646
      %4288 = vmatprep.subr.bf16.mxu0 %v3651
      %4289 = vmatpush1.bf16.msra.mxu0 %v3650
      %4290 = vmatprep.subr.bf16.mxu0 %v3655
      %4291 = vmatpush1.bf16.msra.mxu0 %v3654
      %4292 = vmatprep.subr.bf16.mxu0 %v3659
      %4293 = vmatpush1.bf16.msra.mxu0 %v3658
      %4294 = vmatprep.subr.bf16.mxu0 %v3663
      %4295 = vmatpush1.bf16.msra.mxu0 %v3662
      %4296 = vmatprep.subr.bf16.mxu0 %v3667
      %4297 = vmatpush1.bf16.msra.mxu0 %v3666
      %4298 = vmatprep.subr.bf16.mxu0 %v3671
      %4299 = vmatpush1.bf16.msra.mxu0 %v3670
      %4300 = vmatprep.subr.bf16.mxu0 %v3675
      %4301 = vmatpush1.bf16.msra.mxu0 %v3674
      %4302 = vmatprep.subr.bf16.mxu0 %v3679
      %4303 = vmatpush1.bf16.msra.mxu0 %v3678
      %4304 = vmatprep.subr.bf16.mxu0 %v3683
      %4305 = vmatpush1.bf16.msra.mxu0 %v3682
      %4306 = vmatprep.subr.bf16.mxu0 %v3687
      %4307 = vmatpush1.bf16.msra.mxu0 %v3686
      %4308 = vmatprep.subr.bf16.mxu0 %v3691
      %4309 = vmatpush1.bf16.msra.mxu0 %v3690
      %4310 = vmatprep.subr.bf16.mxu0 %v3695
      %4311 = vmatpush1.bf16.msra.mxu0 %v3694
      %4312 = vmatprep.subr.bf16.mxu0 %v3699
      %4313 = vmatpush1.bf16.msra.mxu0 %v3698
      %4314 = vmatprep.subr.bf16.mxu0 %v3703
      %4315 = vmatpush1.bf16.msra.mxu0 %v3702
      %4316 = vmatprep.subr.bf16.mxu0 %v3707
      %4317 = vmatpush1.bf16.msra.mxu0 %v3706
      %4318 = vmatprep.mubr.bf16.mxu0 %v3046
      %4319 = vmatmul.mubr.bf16.gmra.mrb[0].mxu0 %v3045
      %v4320 = vpop.f32.mrb[0].mxu0
      %v4321 = vadd.f32 %v3251, %v4320
      %v4322 = vpop.f32.mrb[0].mxu0
      %v4323 = vadd.f32 %v3255, %v4322
      %v4324 = vpop.f32.mrb[0].mxu0
      %v4325 = vadd.f32 %v3251, %v4324
      %v4326 = vpop.f32.mrb[0].mxu0
      %v4327 = vadd.f32 %v3255, %v4326
      %4328 = vmatprep.mubr.bf16.mxu0 %v3050
      %4329 = vmatmul.mubr.bf16.gmra.mrb[0].mxu0 %v3049
      %v4330 = vpop.f32.mrb[0].mxu0
      %v4331 = vadd.f32 %v3251, %v4330
      %v4332 = vpop.f32.mrb[0].mxu0
      %v4333 = vadd.f32 %v3255, %v4332
      %v4334 = vpop.f32.mrb[0].mxu0
      %v4335 = vadd.f32 %v3251, %v4334
      %v4336 = vpop.f32.mrb[0].mxu0
      %v4337 = vadd.f32 %v3255, %v4336
      %4338 = vmatprep.mubr.bf16.mxu0 %v3054
      %4339 = vmatmul.mubr.bf16.gmra.mrb[0].mxu0 %v3053
      %v4340 = vpop.f32.mrb[0].mxu0
      %v4341 = vadd.f32 %v3251, %v4340
      %v4342 = vpop.f32.mrb[0].mxu0
      %v4343 = vadd.f32 %v3255, %v4342
      %v4344 = vpop.f32.mrb[0].mxu0
      %v4345 = vadd.f32 %v3251, %v4344
      %v4346 = vpop.f32.mrb[0].mxu0
      %v4347 = vadd.f32 %v3255, %v4346
      %4348 = vmatprep.mubr.bf16.mxu0 %v3058
      %4349 = vmatmul.mubr.bf16.gmra.mrb[0].mxu0 %v3057
      %v4350 = vpop.f32.mrb[0].mxu0
      %v4351 = vadd.f32 %v3251, %v4350
      %v4352 = vpop.f32.mrb[0].mxu0
      %v4353 = vadd.f32 %v3255, %v4352
      %v4354 = vpop.f32.mrb[0].mxu0
      %v4355 = vadd.f32 %v3251, %v4354
      %v4356 = vpop.f32.mrb[0].mxu0
      %v4357 = vadd.f32 %v3255, %v4356
      %4358 = vmatprep.mubr.bf16.mxu0 %v3062
      %4359 = vmatmul.mubr.bf16.gmra.mrb[0].mxu0 %v3061
      %v4360 = vpop.f32.mrb[0].mxu0
      %v4361 = vadd.f32 %v3251, %v4360
      %v4362 = vpop.f32.mrb[0].mxu0
      %v4363 = vadd.f32 %v3255, %v4362
      %v4364 = vpop.f32.mrb[0].mxu0
      %v4365 = vadd.f32 %v3251, %v4364
      %v4366 = vpop.f32.mrb[0].mxu0
      %v4367 = vadd.f32 %v3255, %v4366
      %4368 = vmatprep.mubr.bf16.mxu0 %v3066
      %4369 = vmatmul.mubr.bf16.gmra.mrb[0].mxu0 %v3065
      %v4370 = vpop.f32.mrb[0].mxu0
      %v4371 = vadd.f32 %v3251, %v4370
      %v4372 = vpop.f32.mrb[0].mxu0
      %v4373 = vadd.f32 %v3255, %v4372
      %v4374 = vpop.f32.mrb[0].mxu0
      %v4375 = vadd.f32 %v3251, %v4374
      %v4376 = vpop.f32.mrb[0].mxu0
      %v4377 = vadd.f32 %v3255, %v4376
      %4378 = vmatprep.mubr.bf16.mxu0 %v3070
      %4379 = vmatmul.mubr.bf16.gmra.mrb[0].mxu0 %v3069
      %v4380 = vpop.f32.mrb[0].mxu0
      %v4381 = vadd.f32 %v3251, %v4380
      %v4382 = vpop.f32.mrb[0].mxu0
      %v4383 = vadd.f32 %v3255, %v4382
      %v4384 = vpop.f32.mrb[0].mxu0
      %v4385 = vadd.f32 %v3251, %v4384
      %v4386 = vpop.f32.mrb[0].mxu0
      %v4387 = vadd.f32 %v3255, %v4386
      %4388 = vmatprep.mubr.bf16.mxu0 %v3074
      %4389 = vmatmul.mubr.bf16.gmra.mrb[0].mxu0 %v3073
      %v4390 = vpop.f32.mrb[0].mxu0
      %v4391 = vadd.f32 %v3251, %v4390
      %v4392 = vpop.f32.mrb[0].mxu0
      %v4393 = vadd.f32 %v3255, %v4392
      %v4394 = vpop.f32.mrb[0].mxu0
      %v4395 = vadd.f32 %v3251, %v4394
      %v4396 = vpop.f32.mrb[0].mxu0
      %v4397 = vadd.f32 %v3255, %v4396
      %4398 = vmatprep.mubr.bf16.mxu0 %v3078
      %4399 = vmatmul.mubr.bf16.gmra.mrb[0].mxu0 %v3077
      %v4400 = vpop.f32.mrb[0].mxu0
      %v4401 = vadd.f32 %v3251, %v4400
      %v4402 = vpop.f32.mrb[0].mxu0
      %v4403 = vadd.f32 %v3255, %v4402
      %v4404 = vpop.f32.mrb[0].mxu0
      %v4405 = vadd.f32 %v3251, %v4404
      %v4406 = vpop.f32.mrb[0].mxu0
      %v4407 = vadd.f32 %v3255, %v4406
      %4408 = vmatprep.mubr.bf16.mxu0 %v3082
      %4409 = vmatmul.mubr.bf16.gmra.mrb[0].mxu0 %v3081
      %v4410 = vpop.f32.mrb[0].mxu0
      %v4411 = vadd.f32 %v3251, %v4410
      %v4412 = vpop.f32.mrb[0].mxu0
      %v4413 = vadd.f32 %v3255, %v4412
      %v4414 = vpop.f32.mrb[0].mxu0
      %v4415 = vadd.f32 %v3251, %v4414
      %v4416 = vpop.f32.mrb[0].mxu0
      %v4417 = vadd.f32 %v3255, %v4416
      %4418 = vmatprep.mubr.bf16.mxu0 %v3086
      %4419 = vmatmul.mubr.bf16.gmra.mrb[0].mxu0 %v3085
      %v4420 = vpop.f32.mrb[0].mxu0
      %v4421 = vadd.f32 %v3251, %v4420
      %v4422 = vpop.f32.mrb[0].mxu0
      %v4423 = vadd.f32 %v3255, %v4422
      %v4424 = vpop.f32.mrb[0].mxu0
      %v4425 = vadd.f32 %v3251, %v4424
      %v4426 = vpop.f32.mrb[0].mxu0
      %v4427 = vadd.f32 %v3255, %v4426
      %4428 = vmatprep.mubr.bf16.mxu0 %v3090
      %4429 = vmatmul.mubr.bf16.gmra.mrb[0].mxu0 %v3089
      %v4430 = vpop.f32.mrb[0].mxu0
      %v4431 = vadd.f32 %v3251, %v4430
      %v4432 = vpop.f32.mrb[0].mxu0
      %v4433 = vadd.f32 %v3255, %v4432
      %v4434 = vpop.f32.mrb[0].mxu0
      %v4435 = vadd.f32 %v3251, %v4434
      %v4436 = vpop.f32.mrb[0].mxu0
      %v4437 = vadd.f32 %v3255, %v4436
      %4438 = vmatprep.mubr.bf16.mxu0 %v3094
      %4439 = vmatmul.mubr.bf16.gmra.mrb[0].mxu0 %v3093
      %v4440 = vpop.f32.mrb[0].mxu0
      %v4441 = vadd.f32 %v3251, %v4440
      %v4442 = vpop.f32.mrb[0].mxu0
      %v4443 = vadd.f32 %v3255, %v4442
      %v4444 = vpop.f32.mrb[0].mxu0
      %v4445 = vadd.f32 %v3251, %v4444
      %v4446 = vpop.f32.mrb[0].mxu0
      %v4447 = vadd.f32 %v3255, %v4446
      %4448 = vmatprep.mubr.bf16.mxu0 %v3098
      %4449 = vmatmul.mubr.bf16.gmra.mrb[0].mxu0 %v3097
      %v4450 = vpop.f32.mrb[0].mxu0
      %v4451 = vadd.f32 %v3251, %v4450
      %v4452 = vpop.f32.mrb[0].mxu0
      %v4453 = vadd.f32 %v3255, %v4452
      %v4454 = vpop.f32.mrb[0].mxu0
      %v4455 = vadd.f32 %v3251, %v4454
      %v4456 = vpop.f32.mrb[0].mxu0
      %v4457 = vadd.f32 %v3255, %v4456
      %4458 = vmatprep.mubr.bf16.mxu0 %v3102
      %4459 = vmatmul.mubr.bf16.gmra.mrb[0].mxu0 %v3101
      %v4460 = vpop.f32.mrb[0].mxu0
      %v4461 = vadd.f32 %v3251, %v4460
      %v4462 = vpop.f32.mrb[0].mxu0
      %v4463 = vadd.f32 %v3255, %v4462
      %v4464 = vpop.f32.mrb[0].mxu0
      %v4465 = vadd.f32 %v3251, %v4464
      %v4466 = vpop.f32.mrb[0].mxu0
      %v4467 = vadd.f32 %v3255, %v4466
      %4468 = vmatprep.mubr.bf16.mxu0 %v3106
      %4469 = vmatmul.mubr.bf16.gmra.mrb[0].mxu0 %v3105
      %v4470 = vpop.f32.mrb[0].mxu0
      %v4471 = vadd.f32 %v3251, %v4470
      %v4472 = vpop.f32.mrb[0].mxu0
      %v4473 = vadd.f32 %v3255, %v4472
      %v4474 = vpop.f32.mrb[0].mxu0
      %v4475 = vadd.f32 %v3251, %v4474
      %v4476 = vpop.f32.mrb[0].mxu0
      %v4477 = vadd.f32 %v3255, %v4476
      %4478 = vdwg.mxu0
      %4479 = vmatprep.subr.bf16.mxu0 %v3711
      %4480 = vmatpush1.bf16.msra.mxu0 %v3710
      %4481 = vmatprep.subr.bf16.mxu0 %v3715
      %4482 = vmatpush1.bf16.msra.mxu0 %v3714
      %4483 = vmatprep.subr.bf16.mxu0 %v3719
      %4484 = vmatpush1.bf16.msra.mxu0 %v3718
      %4485 = vmatprep.subr.bf16.mxu0 %v3723
      %4486 = vmatpush1.bf16.msra.mxu0 %v3722
      %4487 = vmatprep.subr.bf16.mxu0 %v3727
      %4488 = vmatpush1.bf16.msra.mxu0 %v3726
      %4489 = vmatprep.subr.bf16.mxu0 %v3731
      %4490 = vmatpush1.bf16.msra.mxu0 %v3730
      %4491 = vmatprep.subr.bf16.mxu0 %v3735
      %4492 = vmatpush1.bf16.msra.mxu0 %v3734
      %4493 = vmatprep.subr.bf16.mxu0 %v3739
      %4494 = vmatpush1.bf16.msra.mxu0 %v3738
      %4495 = vmatprep.subr.bf16.mxu0 %v3743
      %4496 = vmatpush1.bf16.msra.mxu0 %v3742
      %4497 = vmatprep.subr.bf16.mxu0 %v3747
      %4498 = vmatpush1.bf16.msra.mxu0 %v3746
      %4499 = vmatprep.subr.bf16.mxu0 %v3751
      %4500 = vmatpush1.bf16.msra.mxu0 %v3750
      %4501 = vmatprep.subr.bf16.mxu0 %v3755
      %4502 = vmatpush1.bf16.msra.mxu0 %v3754
      %4503 = vmatprep.subr.bf16.mxu0 %v3759
      %4504 = vmatpush1.bf16.msra.mxu0 %v3758
      %4505 = vmatprep.subr.bf16.mxu0 %v3763
      %4506 = vmatpush1.bf16.msra.mxu0 %v3762
      %4507 = vmatprep.subr.bf16.mxu0 %v3767
      %4508 = vmatpush1.bf16.msra.mxu0 %v3766
      %4509 = vmatprep.subr.bf16.mxu0 %v3771
      %4510 = vmatpush1.bf16.msra.mxu0 %v3770
      %4511 = vmatprep.mubr.bf16.mxu0 %v3048
      %4512 = vmatmul.mubr.bf16.gmra.mrb[0].mxu0 %v3047
      %v4513 = vpop.f32.mrb[0].mxu0
      %v4514 = vadd.f32 %v4321, %v4513
      %v4515 = vpop.f32.mrb[0].mxu0
      %v4516 = vadd.f32 %v4323, %v4515
      %v4517 = vpop.f32.mrb[0].mxu0
      %v4518 = vadd.f32 %v4325, %v4517
      %v4519 = vpop.f32.mrb[0].mxu0
      %v4520 = vadd.f32 %v4327, %v4519
      %4521 = vmatprep.mubr.bf16.mxu0 %v3052
      %4522 = vmatmul.mubr.bf16.gmra.mrb[0].mxu0 %v3051
      %v4523 = vpop.f32.mrb[0].mxu0
      %v4524 = vadd.f32 %v4331, %v4523
      %v4525 = vpop.f32.mrb[0].mxu0
      %v4526 = vadd.f32 %v4333, %v4525
      %v4527 = vpop.f32.mrb[0].mxu0
      %v4528 = vadd.f32 %v4335, %v4527
      %v4529 = vpop.f32.mrb[0].mxu0
      %v4530 = vadd.f32 %v4337, %v4529
      %4531 = vmatprep.mubr.bf16.mxu0 %v3056
      %4532 = vmatmul.mubr.bf16.gmra.mrb[0].mxu0 %v3055
      %v4533 = vpop.f32.mrb[0].mxu0
      %v4534 = vadd.f32 %v4341, %v4533
      %v4535 = vpop.f32.mrb[0].mxu0
      %v4536 = vadd.f32 %v4343, %v4535
      %v4537 = vpop.f32.mrb[0].mxu0
      %v4538 = vadd.f32 %v4345, %v4537
      %v4539 = vpop.f32.mrb[0].mxu0
      %v4540 = vadd.f32 %v4347, %v4539
      %4541 = vmatprep.mubr.bf16.mxu0 %v3060
      %4542 = vmatmul.mubr.bf16.gmra.mrb[0].mxu0 %v3059
      %v4543 = vpop.f32.mrb[0].mxu0
      %v4544 = vadd.f32 %v4351, %v4543
      %v4545 = vpop.f32.mrb[0].mxu0
      %v4546 = vadd.f32 %v4353, %v4545
      %v4547 = vpop.f32.mrb[0].mxu0
      %v4548 = vadd.f32 %v4355, %v4547
      %v4549 = vpop.f32.mrb[0].mxu0
      %v4550 = vadd.f32 %v4357, %v4549
      %4551 = vmatprep.mubr.bf16.mxu0 %v3064
      %4552 = vmatmul.mubr.bf16.gmra.mrb[0].mxu0 %v3063
      %v4553 = vpop.f32.mrb[0].mxu0
      %v4554 = vadd.f32 %v4361, %v4553
      %v4555 = vpop.f32.mrb[0].mxu0
      %v4556 = vadd.f32 %v4363, %v4555
      %v4557 = vpop.f32.mrb[0].mxu0
      %v4558 = vadd.f32 %v4365, %v4557
      %v4559 = vpop.f32.mrb[0].mxu0
      %v4560 = vadd.f32 %v4367, %v4559
      %4561 = vmatprep.mubr.bf16.mxu0 %v3068
      %4562 = vmatmul.mubr.bf16.gmra.mrb[0].mxu0 %v3067
      %v4563 = vpop.f32.mrb[0].mxu0
      %v4564 = vadd.f32 %v4371, %v4563
      %v4565 = vpop.f32.mrb[0].mxu0
      %v4566 = vadd.f32 %v4373, %v4565
      %v4567 = vpop.f32.mrb[0].mxu0
      %v4568 = vadd.f32 %v4375, %v4567
      %v4569 = vpop.f32.mrb[0].mxu0
      %v4570 = vadd.f32 %v4377, %v4569
      %4571 = vmatprep.mubr.bf16.mxu0 %v3072
      %4572 = vmatmul.mubr.bf16.gmra.mrb[0].mxu0 %v3071
      %v4573 = vpop.f32.mrb[0].mxu0
      %v4574 = vadd.f32 %v4381, %v4573
      %v4575 = vpop.f32.mrb[0].mxu0
      %v4576 = vadd.f32 %v4383, %v4575
      %v4577 = vpop.f32.mrb[0].mxu0
      %v4578 = vadd.f32 %v4385, %v4577
      %v4579 = vpop.f32.mrb[0].mxu0
      %v4580 = vadd.f32 %v4387, %v4579
      %4581 = vmatprep.mubr.bf16.mxu0 %v3076
      %4582 = vmatmul.mubr.bf16.gmra.mrb[0].mxu0 %v3075
      %v4583 = vpop.f32.mrb[0].mxu0
      %v4584 = vadd.f32 %v4391, %v4583
      %v4585 = vpop.f32.mrb[0].mxu0
      %v4586 = vadd.f32 %v4393, %v4585
      %v4587 = vpop.f32.mrb[0].mxu0
      %v4588 = vadd.f32 %v4395, %v4587
      %v4589 = vpop.f32.mrb[0].mxu0
      %v4590 = vadd.f32 %v4397, %v4589
      %4591 = vmatprep.mubr.bf16.mxu0 %v3080
      %4592 = vmatmul.mubr.bf16.gmra.mrb[0].mxu0 %v3079
      %v4593 = vpop.f32.mrb[0].mxu0
      %v4594 = vadd.f32 %v4401, %v4593
      %v4595 = vpop.f32.mrb[0].mxu0
      %v4596 = vadd.f32 %v4403, %v4595
      %v4597 = vpop.f32.mrb[0].mxu0
      %v4598 = vadd.f32 %v4405, %v4597
      %v4599 = vpop.f32.mrb[0].mxu0
      %v4600 = vadd.f32 %v4407, %v4599
      %4601 = vmatprep.mubr.bf16.mxu0 %v3084
      %4602 = vmatmul.mubr.bf16.gmra.mrb[0].mxu0 %v3083
      %v4603 = vpop.f32.mrb[0].mxu0
      %v4604 = vadd.f32 %v4411, %v4603
      %v4605 = vpop.f32.mrb[0].mxu0
      %v4606 = vadd.f32 %v4413, %v4605
      %v4607 = vpop.f32.mrb[0].mxu0
      %v4608 = vadd.f32 %v4415, %v4607
      %v4609 = vpop.f32.mrb[0].mxu0
      %v4610 = vadd.f32 %v4417, %v4609
      %4611 = vmatprep.mubr.bf16.mxu0 %v3088
      %4612 = vmatmul.mubr.bf16.gmra.mrb[0].mxu0 %v3087
      %v4613 = vpop.f32.mrb[0].mxu0
      %v4614 = vadd.f32 %v4421, %v4613
      %v4615 = vpop.f32.mrb[0].mxu0
      %v4616 = vadd.f32 %v4423, %v4615
      %v4617 = vpop.f32.mrb[0].mxu0
      %v4618 = vadd.f32 %v4425, %v4617
      %v4619 = vpop.f32.mrb[0].mxu0
      %v4620 = vadd.f32 %v4427, %v4619
      %4621 = vmatprep.mubr.bf16.mxu0 %v3092
      %4622 = vmatmul.mubr.bf16.gmra.mrb[0].mxu0 %v3091
      %v4623 = vpop.f32.mrb[0].mxu0
      %v4624 = vadd.f32 %v4431, %v4623
      %v4625 = vpop.f32.mrb[0].mxu0
      %v4626 = vadd.f32 %v4433, %v4625
      %v4627 = vpop.f32.mrb[0].mxu0
      %v4628 = vadd.f32 %v4435, %v4627
      %v4629 = vpop.f32.mrb[0].mxu0
      %v4630 = vadd.f32 %v4437, %v4629
      %4631 = vmatprep.mubr.bf16.mxu0 %v3096
      %4632 = vmatmul.mubr.bf16.gmra.mrb[0].mxu0 %v3095
      %v4633 = vpop.f32.mrb[0].mxu0
      %v4634 = vadd.f32 %v4441, %v4633
      %v4635 = vpop.f32.mrb[0].mxu0
      %v4636 = vadd.f32 %v4443, %v4635
      %v4637 = vpop.f32.mrb[0].mxu0
      %v4638 = vadd.f32 %v4445, %v4637
      %v4639 = vpop.f32.mrb[0].mxu0
      %v4640 = vadd.f32 %v4447, %v4639
      %4641 = vmatprep.mubr.bf16.mxu0 %v3100
      %4642 = vmatmul.mubr.bf16.gmra.mrb[0].mxu0 %v3099
      %v4643 = vpop.f32.mrb[0].mxu0
      %v4644 = vadd.f32 %v4451, %v4643
      %v4645 = vpop.f32.mrb[0].mxu0
      %v4646 = vadd.f32 %v4453, %v4645
      %v4647 = vpop.f32.mrb[0].mxu0
      %v4648 = vadd.f32 %v4455, %v4647
      %v4649 = vpop.f32.mrb[0].mxu0
      %v4650 = vadd.f32 %v4457, %v4649
      %4651 = vmatprep.mubr.bf16.mxu0 %v3104
      %4652 = vmatmul.mubr.bf16.gmra.mrb[0].mxu0 %v3103
      %v4653 = vpop.f32.mrb[0].mxu0
      %v4654 = vadd.f32 %v4461, %v4653
      %v4655 = vpop.f32.mrb[0].mxu0
      %v4656 = vadd.f32 %v4463, %v4655
      %v4657 = vpop.f32.mrb[0].mxu0
      %v4658 = vadd.f32 %v4465, %v4657
      %v4659 = vpop.f32.mrb[0].mxu0
      %v4660 = vadd.f32 %v4467, %v4659
      %4661 = vmatprep.mubr.bf16.mxu0 %v3108
      %4662 = vmatmul.mubr.bf16.gmra.mrb[0].mxu0 %v3107
      %v4663 = vpop.f32.mrb[0].mxu0
      %v4664 = vadd.f32 %v4471, %v4663
      %v4665 = vpop.f32.mrb[0].mxu0
      %v4666 = vadd.f32 %v4473, %v4665
      %v4667 = vpop.f32.mrb[0].mxu0
      %v4668 = vadd.f32 %v4475, %v4667
      %v4669 = vpop.f32.mrb[0].mxu0
      %v4670 = vadd.f32 %v4477, %v4669
      %4671 = vdwg.mxu0
      %v4672 = vmax.f32 %v4128, 0.0
      %v4673 = vmax.f32 %v4130, 0.0
      %v4674 = vmax.f32 %v4514, 0.0
      %v4675 = vmax.f32 %v4516, 0.0
      %v4676 = vmax.f32 %v4132, 0.0
      %v4677 = vmax.f32 %v4134, 0.0
      %v4678 = vmax.f32 %v4518, 0.0
      %v4679 = vmax.f32 %v4520, 0.0
      %v4680 = vmax.f32 %v4138, 0.0
      %v4681 = vmax.f32 %v4140, 0.0
      %v4682 = vmax.f32 %v4524, 0.0
      %v4683 = vmax.f32 %v4526, 0.0
      %v4684 = vmax.f32 %v4142, 0.0
      %v4685 = vmax.f32 %v4144, 0.0
      %v4686 = vmax.f32 %v4528, 0.0
      %v4687 = vmax.f32 %v4530, 0.0
      %v4688 = vmax.f32 %v4148, 0.0
      %v4689 = vmax.f32 %v4150, 0.0
      %v4690 = vmax.f32 %v4534, 0.0
      %v4691 = vmax.f32 %v4536, 0.0
      %v4692 = vmax.f32 %v4152, 0.0
      %v4693 = vmax.f32 %v4154, 0.0
      %v4694 = vmax.f32 %v4538, 0.0
      %v4695 = vmax.f32 %v4540, 0.0
      %v4696 = vmax.f32 %v4158, 0.0
      %v4697 = vmax.f32 %v4160, 0.0
      %v4698 = vmax.f32 %v4544, 0.0
      %v4699 = vmax.f32 %v4546, 0.0
      %v4700 = vmax.f32 %v4162, 0.0
      %v4701 = vmax.f32 %v4164, 0.0
      %v4702 = vmax.f32 %v4548, 0.0
      %v4703 = vmax.f32 %v4550, 0.0
      %v4704 = vmax.f32 %v4168, 0.0
      %v4705 = vmax.f32 %v4170, 0.0
      %v4706 = vmax.f32 %v4554, 0.0
      %v4707 = vmax.f32 %v4556, 0.0
      %v4708 = vmax.f32 %v4172, 0.0
      %v4709 = vmax.f32 %v4174, 0.0
      %v4710 = vmax.f32 %v4558, 0.0
      %v4711 = vmax.f32 %v4560, 0.0
      %v4712 = vmax.f32 %v4178, 0.0
      %v4713 = vmax.f32 %v4180, 0.0
      %v4714 = vmax.f32 %v4564, 0.0
      %v4715 = vmax.f32 %v4566, 0.0
      %v4716 = vmax.f32 %v4182, 0.0
      %v4717 = vmax.f32 %v4184, 0.0
      %v4718 = vmax.f32 %v4568, 0.0
      %v4719 = vmax.f32 %v4570, 0.0
      %v4720 = vmax.f32 %v4188, 0.0
      %v4721 = vmax.f32 %v4190, 0.0
      %v4722 = vmax.f32 %v4574, 0.0
      %v4723 = vmax.f32 %v4576, 0.0
      %v4724 = vmax.f32 %v4192, 0.0
      %v4725 = vmax.f32 %v4194, 0.0
      %v4726 = vmax.f32 %v4578, 0.0
      %v4727 = vmax.f32 %v4580, 0.0
      %v4728 = vmax.f32 %v4198, 0.0
      %v4729 = vmax.f32 %v4200, 0.0
      %v4730 = vmax.f32 %v4584, 0.0
      %v4731 = vmax.f32 %v4586, 0.0
      %v4732 = vmax.f32 %v4202, 0.0
      %v4733 = vmax.f32 %v4204, 0.0
      %v4734 = vmax.f32 %v4588, 0.0
      %v4735 = vmax.f32 %v4590, 0.0
      %v4736 = vmax.f32 %v4208, 0.0
      %v4737 = vmax.f32 %v4210, 0.0
      %v4738 = vmax.f32 %v4594, 0.0
      %v4739 = vmax.f32 %v4596, 0.0
      %v4740 = vmax.f32 %v4212, 0.0
      %v4741 = vmax.f32 %v4214, 0.0
      %v4742 = vmax.f32 %v4598, 0.0
      %v4743 = vmax.f32 %v4600, 0.0
      %v4744 = vmax.f32 %v4218, 0.0
      %v4745 = vmax.f32 %v4220, 0.0
      %v4746 = vmax.f32 %v4604, 0.0
      %v4747 = vmax.f32 %v4606, 0.0
      %v4748 = vmax.f32 %v4222, 0.0
      %v4749 = vmax.f32 %v4224, 0.0
      %v4750 = vmax.f32 %v4608, 0.0
      %v4751 = vmax.f32 %v4610, 0.0
      %v4752 = vmax.f32 %v4228, 0.0
      %v4753 = vmax.f32 %v4230, 0.0
      %v4754 = vmax.f32 %v4614, 0.0
      %v4755 = vmax.f32 %v4616, 0.0
      %v4756 = vmax.f32 %v4232, 0.0
      %v4757 = vmax.f32 %v4234, 0.0
      %v4758 = vmax.f32 %v4618, 0.0
      %v4759 = vmax.f32 %v4620, 0.0
      %v4760 = vmax.f32 %v4238, 0.0
      %v4761 = vmax.f32 %v4240, 0.0
      %v4762 = vmax.f32 %v4624, 0.0
      %v4763 = vmax.f32 %v4626, 0.0
      %v4764 = vmax.f32 %v4242, 0.0
      %v4765 = vmax.f32 %v4244, 0.0
      %v4766 = vmax.f32 %v4628, 0.0
      %v4767 = vmax.f32 %v4630, 0.0
      %v4768 = vmax.f32 %v4248, 0.0
      %v4769 = vmax.f32 %v4250, 0.0
      %v4770 = vmax.f32 %v4634, 0.0
      %v4771 = vmax.f32 %v4636, 0.0
      %v4772 = vmax.f32 %v4252, 0.0
      %v4773 = vmax.f32 %v4254, 0.0
      %v4774 = vmax.f32 %v4638, 0.0
      %v4775 = vmax.f32 %v4640, 0.0
      %v4776 = vmax.f32 %v4258, 0.0
      %v4777 = vmax.f32 %v4260, 0.0
      %v4778 = vmax.f32 %v4644, 0.0
      %v4779 = vmax.f32 %v4646, 0.0
      %v4780 = vmax.f32 %v4262, 0.0
      %v4781 = vmax.f32 %v4264, 0.0
      %v4782 = vmax.f32 %v4648, 0.0
      %v4783 = vmax.f32 %v4650, 0.0
      %v4784 = vmax.f32 %v4268, 0.0
      %v4785 = vmax.f32 %v4270, 0.0
      %v4786 = vmax.f32 %v4654, 0.0
      %v4787 = vmax.f32 %v4656, 0.0
      %v4788 = vmax.f32 %v4272, 0.0
      %v4789 = vmax.f32 %v4274, 0.0
      %v4790 = vmax.f32 %v4658, 0.0
      %v4791 = vmax.f32 %v4660, 0.0
      %v4792 = vmax.f32 %v4278, 0.0
      %v4793 = vmax.f32 %v4280, 0.0
      %v4794 = vmax.f32 %v4664, 0.0
      %v4795 = vmax.f32 %v4666, 0.0
      %v4796 = vmax.f32 %v4282, 0.0
      %v4797 = vmax.f32 %v4284, 0.0
      %v4798 = vmax.f32 %v4668, 0.0
      %v4799 = vmax.f32 %v4670, 0.0
      %v4800 = vpack.c.bf16 %v4676, %v4672
      %v4801 = vpack.c.bf16 %v4677, %v4673
      %v4802 = vpack.c.bf16 %v4678, %v4674
      %v4803 = vpack.c.bf16 %v4679, %v4675
      %v4804 = vpack.c.bf16 %v4684, %v4680
      %v4805 = vpack.c.bf16 %v4685, %v4681
      %v4806 = vpack.c.bf16 %v4686, %v4682
      %v4807 = vpack.c.bf16 %v4687, %v4683
      %v4808 = vpack.c.bf16 %v4692, %v4688
      %v4809 = vpack.c.bf16 %v4693, %v4689
      %v4810 = vpack.c.bf16 %v4694, %v4690
      %v4811 = vpack.c.bf16 %v4695, %v4691
      %v4812 = vpack.c.bf16 %v4700, %v4696
      %v4813 = vpack.c.bf16 %v4701, %v4697
      %v4814 = vpack.c.bf16 %v4702, %v4698
      %v4815 = vpack.c.bf16 %v4703, %v4699
      %v4816 = vpack.c.bf16 %v4708, %v4704
      %v4817 = vpack.c.bf16 %v4709, %v4705
      %v4818 = vpack.c.bf16 %v4710, %v4706
      %v4819 = vpack.c.bf16 %v4711, %v4707
      %v4820 = vpack.c.bf16 %v4716, %v4712
      %v4821 = vpack.c.bf16 %v4717, %v4713
      %v4822 = vpack.c.bf16 %v4718, %v4714
      %v4823 = vpack.c.bf16 %v4719, %v4715
      %v4824 = vpack.c.bf16 %v4724, %v4720
      %v4825 = vpack.c.bf16 %v4725, %v4721
      %v4826 = vpack.c.bf16 %v4726, %v4722
      %v4827 = vpack.c.bf16 %v4727, %v4723
      %v4828 = vpack.c.bf16 %v4732, %v4728
      %v4829 = vpack.c.bf16 %v4733, %v4729
      %v4830 = vpack.c.bf16 %v4734, %v4730
      %v4831 = vpack.c.bf16 %v4735, %v4731
      %v4832 = vpack.c.bf16 %v4740, %v4736
      %v4833 = vpack.c.bf16 %v4741, %v4737
      %v4834 = vpack.c.bf16 %v4742, %v4738
      %v4835 = vpack.c.bf16 %v4743, %v4739
      %v4836 = vpack.c.bf16 %v4748, %v4744
      %v4837 = vpack.c.bf16 %v4749, %v4745
      %v4838 = vpack.c.bf16 %v4750, %v4746
      %v4839 = vpack.c.bf16 %v4751, %v4747
      %v4840 = vpack.c.bf16 %v4756, %v4752
      %v4841 = vpack.c.bf16 %v4757, %v4753
      %v4842 = vpack.c.bf16 %v4758, %v4754
      %v4843 = vpack.c.bf16 %v4759, %v4755
      %v4844 = vpack.c.bf16 %v4764, %v4760
      %v4845 = vpack.c.bf16 %v4765, %v4761
      %v4846 = vpack.c.bf16 %v4766, %v4762
      %v4847 = vpack.c.bf16 %v4767, %v4763
      %v4848 = vpack.c.bf16 %v4772, %v4768
      %v4849 = vpack.c.bf16 %v4773, %v4769
      %v4850 = vpack.c.bf16 %v4774, %v4770
      %v4851 = vpack.c.bf16 %v4775, %v4771
      %v4852 = vpack.c.bf16 %v4780, %v4776
      %v4853 = vpack.c.bf16 %v4781, %v4777
      %v4854 = vpack.c.bf16 %v4782, %v4778
      %v4855 = vpack.c.bf16 %v4783, %v4779
      %v4856 = vpack.c.bf16 %v4788, %v4784
      %v4857 = vpack.c.bf16 %v4789, %v4785
      %v4858 = vpack.c.bf16 %v4790, %v4786
      %v4859 = vpack.c.bf16 %v4791, %v4787
      %v4860 = vpack.c.bf16 %v4796, %v4792
      %v4861 = vpack.c.bf16 %v4797, %v4793
      %v4862 = vpack.c.bf16 %v4798, %v4794
      %v4863 = vpack.c.bf16 %v4799, %v4795
      %v4864 = vld [vmem:[%s6] sm:$0xf]
      %v4865 = vld [vmem:[%s6 + $0x4] sm:$0xf]
      %v4866 = vld [vmem:[%s6 + $0x8] sm:$0xf]
      %v4867 = vld [vmem:[%s6 + $0xc] sm:$0xf]
      %v4868 = vld [vmem:[%s6 + $0x10] sm:$0xf]
      %v4869 = vld [vmem:[%s6 + $0x14] sm:$0xf]
      %v4870 = vld [vmem:[%s6 + $0x18] sm:$0xf]
      %v4871 = vld [vmem:[%s6 + $0x1c] sm:$0xf]
      %v4872 = vld [vmem:[%s6 + $0x20] sm:$0xf]
      %v4873 = vld [vmem:[%s6 + $0x24] sm:$0xf]
      %v4874 = vld [vmem:[%s6 + $0x28] sm:$0xf]
      %v4875 = vld [vmem:[%s6 + $0x2c] sm:$0xf]
      %v4876 = vld [vmem:[%s6 + $0x30] sm:$0xf]
      %v4877 = vld [vmem:[%s6 + $0x34] sm:$0xf]
      %v4878 = vld [vmem:[%s6 + $0x38] sm:$0xf]
      %v4879 = vld [vmem:[%s6 + $0x3c] sm:$0xf]
      %v4880 = vld [vmem:[%s6 + $0x40] sm:$0xf]
      %v4881 = vld [vmem:[%s6 + $0x44] sm:$0xf]
      %v4882 = vld [vmem:[%s6 + $0x48] sm:$0xf]
      %v4883 = vld [vmem:[%s6 + $0x4c] sm:$0xf]
      %v4884 = vld [vmem:[%s6 + $0x50] sm:$0xf]
      %v4885 = vld [vmem:[%s6 + $0x54] sm:$0xf]
      %v4886 = vld [vmem:[%s6 + $0x58] sm:$0xf]
      %v4887 = vld [vmem:[%s6 + $0x5c] sm:$0xf]
      %v4888 = vld [vmem:[%s6 + $0x60] sm:$0xf]
      %v4889 = vld [vmem:[%s6 + $0x64] sm:$0xf]
      %v4890 = vld [vmem:[%s6 + $0x68] sm:$0xf]
      %v4891 = vld [vmem:[%s6 + $0x6c] sm:$0xf]
      %v4892 = vld [vmem:[%s6 + $0x70] sm:$0xf]
      %v4893 = vld [vmem:[%s6 + $0x74] sm:$0xf]
      %v4894 = vld [vmem:[%s6 + $0x78] sm:$0xf]
      %v4895 = vld [vmem:[%s6 + $0x7c] sm:$0xf]
      %v4896 = vld [vmem:[%s6 + $0x80] sm:$0xf]
      %v4897 = vld [vmem:[%s6 + $0x84] sm:$0xf]
      %v4898 = vld [vmem:[%s6 + $0x88] sm:$0xf]
      %v4899 = vld [vmem:[%s6 + $0x8c] sm:$0xf]
      %v4900 = vld [vmem:[%s6 + $0x90] sm:$0xf]
      %v4901 = vld [vmem:[%s6 + $0x94] sm:$0xf]
      %v4902 = vld [vmem:[%s6 + $0x98] sm:$0xf]
      %v4903 = vld [vmem:[%s6 + $0x9c] sm:$0xf]
      %v4904 = vld [vmem:[%s6 + $0xa0] sm:$0xf]
      %v4905 = vld [vmem:[%s6 + $0xa4] sm:$0xf]
      %v4906 = vld [vmem:[%s6 + $0xa8] sm:$0xf]
      %v4907 = vld [vmem:[%s6 + $0xac] sm:$0xf]
      %v4908 = vld [vmem:[%s6 + $0xb0] sm:$0xf]
      %v4909 = vld [vmem:[%s6 + $0xb4] sm:$0xf]
      %v4910 = vld [vmem:[%s6 + $0xb8] sm:$0xf]
      %v4911 = vld [vmem:[%s6 + $0xbc] sm:$0xf]
      %v4912 = vld [vmem:[%s6 + $0xc0] sm:$0xf]
      %v4913 = vld [vmem:[%s6 + $0xc4] sm:$0xf]
      %v4914 = vld [vmem:[%s6 + $0xc8] sm:$0xf]
      %v4915 = vld [vmem:[%s6 + $0xcc] sm:$0xf]
      %v4916 = vld [vmem:[%s6 + $0xd0] sm:$0xf]
      %v4917 = vld [vmem:[%s6 + $0xd4] sm:$0xf]
      %v4918 = vld [vmem:[%s6 + $0xd8] sm:$0xf]
      %v4919 = vld [vmem:[%s6 + $0xdc] sm:$0xf]
      %v4920 = vld [vmem:[%s6 + $0xe0] sm:$0xf]
      %v4921 = vld [vmem:[%s6 + $0xe4] sm:$0xf]
      %v4922 = vld [vmem:[%s6 + $0xe8] sm:$0xf]
      %v4923 = vld [vmem:[%s6 + $0xec] sm:$0xf]
      %v4924 = vld [vmem:[%s6 + $0xf0] sm:$0xf]
      %v4925 = vld [vmem:[%s6 + $0xf4] sm:$0xf]
      %v4926 = vld [vmem:[%s6 + $0xf8] sm:$0xf]
      %v4927 = vld [vmem:[%s6 + $0xfc] sm:$0xf]
      %v4928 = vld [vmem:[%s7 + $0x3] ss:$0 sm:$0xff]
      %v4993 = vunpack.c.l.b16 %v4864
      %v4994 = vunpack.c.l.b16 %v4865
      %v4995 = vunpack.c.l.b16 %v4866
      %v4996 = vunpack.c.l.b16 %v4867
      %v4997 = vunpack.c.l.b16 %v4868
      %v4998 = vunpack.c.l.b16 %v4869
      %v4999 = vunpack.c.l.b16 %v4870
      %v5000 = vunpack.c.l.b16 %v4871
      %v5001 = vunpack.c.l.b16 %v4872
      %v5002 = vunpack.c.l.b16 %v4873
      %v5003 = vunpack.c.l.b16 %v4874
      %v5004 = vunpack.c.l.b16 %v4875
      %v5005 = vunpack.c.l.b16 %v4876
      %v5006 = vunpack.c.l.b16 %v4877
      %v5007 = vunpack.c.l.b16 %v4878
      %v5008 = vunpack.c.l.b16 %v4879
      %v5009 = vunpack.c.l.b16 %v4880
      %v5010 = vunpack.c.l.b16 %v4881
      %v5011 = vunpack.c.l.b16 %v4882
      %v5012 = vunpack.c.l.b16 %v4883
      %v5013 = vunpack.c.l.b16 %v4884
      %v5014 = vunpack.c.l.b16 %v4885
      %v5015 = vunpack.c.l.b16 %v4886
      %v5016 = vunpack.c.l.b16 %v4887
      %v5017 = vunpack.c.l.b16 %v4888
      %v5018 = vunpack.c.l.b16 %v4889
      %v5019 = vunpack.c.l.b16 %v4890
      %v5020 = vunpack.c.l.b16 %v4891
      %v5021 = vunpack.c.l.b16 %v4892
      %v5022 = vunpack.c.l.b16 %v4893
      %v5023 = vunpack.c.l.b16 %v4894
      %v5024 = vunpack.c.l.b16 %v4895
      %v5025 = vunpack.c.l.b16 %v4896
      %v5026 = vunpack.c.l.b16 %v4897
      %v5027 = vunpack.c.l.b16 %v4898
      %v5028 = vunpack.c.l.b16 %v4899
      %v5029 = vunpack.c.l.b16 %v4900
      %v5030 = vunpack.c.l.b16 %v4901
      %v5031 = vunpack.c.l.b16 %v4902
      %v5032 = vunpack.c.l.b16 %v4903
      %v5033 = vunpack.c.l.b16 %v4904
      %v5034 = vunpack.c.l.b16 %v4905
      %v5035 = vunpack.c.l.b16 %v4906
      %v5036 = vunpack.c.l.b16 %v4907
      %v5037 = vunpack.c.l.b16 %v4908
      %v5038 = vunpack.c.l.b16 %v4909
      %v5039 = vunpack.c.l.b16 %v4910
      %v5040 = vunpack.c.l.b16 %v4911
      %v5041 = vunpack.c.l.b16 %v4912
      %v5042 = vunpack.c.l.b16 %v4913
      %v5043 = vunpack.c.l.b16 %v4914
      %v5044 = vunpack.c.l.b16 %v4915
      %v5045 = vunpack.c.l.b16 %v4916
      %v5046 = vunpack.c.l.b16 %v4917
      %v5047 = vunpack.c.l.b16 %v4918
      %v5048 = vunpack.c.l.b16 %v4919
      %v5049 = vunpack.c.l.b16 %v4920
      %v5050 = vunpack.c.l.b16 %v4921
      %v5051 = vunpack.c.l.b16 %v4922
      %v5052 = vunpack.c.l.b16 %v4923
      %v5053 = vunpack.c.l.b16 %v4924
      %v5054 = vunpack.c.l.b16 %v4925
      %v5055 = vunpack.c.l.b16 %v4926
      %v5056 = vunpack.c.l.b16 %v4927
      %v5057 = vpack.c.b16 %v4994, %v4993
      %v5058 = vpack.c.b16 %v4996, %v4995
      %v5059 = vpack.c.b16 %v4998, %v4997
      %v5060 = vpack.c.b16 %v5000, %v4999
      %v5061 = vpack.c.b16 %v5002, %v5001
      %v5062 = vpack.c.b16 %v5004, %v5003
      %v5063 = vpack.c.b16 %v5006, %v5005
      %v5064 = vpack.c.b16 %v5008, %v5007
      %v5065 = vpack.c.b16 %v5010, %v5009
      %v5066 = vpack.c.b16 %v5012, %v5011
      %v5067 = vpack.c.b16 %v5014, %v5013
      %v5068 = vpack.c.b16 %v5016, %v5015
      %v5069 = vpack.c.b16 %v5018, %v5017
      %v5070 = vpack.c.b16 %v5020, %v5019
      %v5071 = vpack.c.b16 %v5022, %v5021
      %v5072 = vpack.c.b16 %v5024, %v5023
      %v5073 = vpack.c.b16 %v5026, %v5025
      %v5074 = vpack.c.b16 %v5028, %v5027
      %v5075 = vpack.c.b16 %v5030, %v5029
      %v5076 = vpack.c.b16 %v5032, %v5031
      %v5077 = vpack.c.b16 %v5034, %v5033
      %v5078 = vpack.c.b16 %v5036, %v5035
      %v5079 = vpack.c.b16 %v5038, %v5037
      %v5080 = vpack.c.b16 %v5040, %v5039
      %v5081 = vpack.c.b16 %v5042, %v5041
      %v5082 = vpack.c.b16 %v5044, %v5043
      %v5083 = vpack.c.b16 %v5046, %v5045
      %v5084 = vpack.c.b16 %v5048, %v5047
      %v5085 = vpack.c.b16 %v5050, %v5049
      %v5086 = vpack.c.b16 %v5052, %v5051
      %v5087 = vpack.c.b16 %v5054, %v5053
      %v5088 = vpack.c.b16 %v5056, %v5055
      %5121 = vmatprep.subr.bf16.mxu0 0
      %5122 = vmatpush1.bf16.msra.mxu0 %v5057
      %5123 = vmatprep.subr.bf16.mxu0 0
      %5124 = vmatpush1.bf16.msra.mxu0 %v5058
      %5125 = vmatprep.subr.bf16.mxu0 0
      %5126 = vmatpush1.bf16.msra.mxu0 %v5059
      %5127 = vmatprep.subr.bf16.mxu0 0
      %5128 = vmatpush1.bf16.msra.mxu0 %v5060
      %5129 = vmatprep.subr.bf16.mxu0 0
      %5130 = vmatpush1.bf16.msra.mxu0 %v5061
      %5131 = vmatprep.subr.bf16.mxu0 0
      %5132 = vmatpush1.bf16.msra.mxu0 %v5062
      %5133 = vmatprep.subr.bf16.mxu0 0
      %5134 = vmatpush1.bf16.msra.mxu0 %v5063
      %5135 = vmatprep.subr.bf16.mxu0 0
      %5136 = vmatpush1.bf16.msra.mxu0 %v5064
      %5137 = vmatprep.subr.bf16.mxu0 0
      %5138 = vmatpush1.bf16.msra.mxu0 %v5065
      %5139 = vmatprep.subr.bf16.mxu0 0
      %5140 = vmatpush1.bf16.msra.mxu0 %v5066
      %5141 = vmatprep.subr.bf16.mxu0 0
      %5142 = vmatpush1.bf16.msra.mxu0 %v5067
      %5143 = vmatprep.subr.bf16.mxu0 0
      %5144 = vmatpush1.bf16.msra.mxu0 %v5068
      %5145 = vmatprep.subr.bf16.mxu0 0
      %5146 = vmatpush1.bf16.msra.mxu0 %v5069
      %5147 = vmatprep.subr.bf16.mxu0 0
      %5148 = vmatpush1.bf16.msra.mxu0 %v5070
      %5149 = vmatprep.subr.bf16.mxu0 0
      %5150 = vmatpush1.bf16.msra.mxu0 %v5071
      %5151 = vmatprep.subr.bf16.mxu0 0
      %5152 = vmatpush1.bf16.msra.mxu0 %v5072
      %5153 = vmatprep.mubr.bf16.mxu0 %v4801
      %5154 = vmatmul.mubr.bf16.gmra.mrb[0].mxu0 %v4800
      %v5155 = vpop.f32.mrb[0].mxu0
      %v5156 = vadd.f32 %v4928, %v5155
      %v5157 = vpop.f32.mrb[0].mxu0
      %v5158 = vpop.f32.mrb[0].mxu0
      %v5159 = vadd.f32 %v4928, %v5158
      %v5160 = vpop.f32.mrb[0].mxu0
      %5161 = vmatprep.mubr.bf16.mxu0 %v4805
      %5162 = vmatmul.mubr.bf16.gmra.mrb[0].mxu0 %v4804
      %v5163 = vpop.f32.mrb[0].mxu0
      %v5164 = vadd.f32 %v4928, %v5163
      %v5165 = vpop.f32.mrb[0].mxu0
      %v5166 = vpop.f32.mrb[0].mxu0
      %v5167 = vadd.f32 %v4928, %v5166
      %v5168 = vpop.f32.mrb[0].mxu0
      %5169 = vmatprep.mubr.bf16.mxu0 %v4809
      %5170 = vmatmul.mubr.bf16.gmra.mrb[0].mxu0 %v4808
      %v5171 = vpop.f32.mrb[0].mxu0
      %v5172 = vadd.f32 %v4928, %v5171
      %v5173 = vpop.f32.mrb[0].mxu0
      %v5174 = vpop.f32.mrb[0].mxu0
      %v5175 = vadd.f32 %v4928, %v5174
      %v5176 = vpop.f32.mrb[0].mxu0
      %5177 = vmatprep.mubr.bf16.mxu0 %v4813
      %5178 = vmatmul.mubr.bf16.gmra.mrb[0].mxu0 %v4812
      %v5179 = vpop.f32.mrb[0].mxu0
      %v5180 = vadd.f32 %v4928, %v5179
      %v5181 = vpop.f32.mrb[0].mxu0
      %v5182 = vpop.f32.mrb[0].mxu0
      %v5183 = vadd.f32 %v4928, %v5182
      %v5184 = vpop.f32.mrb[0].mxu0
      %5185 = vmatprep.mubr.bf16.mxu0 %v4817
      %5186 = vmatmul.mubr.bf16.gmra.mrb[0].mxu0 %v4816
      %v5187 = vpop.f32.mrb[0].mxu0
      %v5188 = vadd.f32 %v4928, %v5187
      %v5189 = vpop.f32.mrb[0].mxu0
      %v5190 = vpop.f32.mrb[0].mxu0
      %v5191 = vadd.f32 %v4928, %v5190
      %v5192 = vpop.f32.mrb[0].mxu0
      %5193 = vmatprep.mubr.bf16.mxu0 %v4821
      %5194 = vmatmul.mubr.bf16.gmra.mrb[0].mxu0 %v4820
      %v5195 = vpop.f32.mrb[0].mxu0
      %v5196 = vadd.f32 %v4928, %v5195
      %v5197 = vpop.f32.mrb[0].mxu0
      %v5198 = vpop.f32.mrb[0].mxu0
      %v5199 = vadd.f32 %v4928, %v5198
      %v5200 = vpop.f32.mrb[0].mxu0
      %5201 = vmatprep.mubr.bf16.mxu0 %v4825
      %5202 = vmatmul.mubr.bf16.gmra.mrb[0].mxu0 %v4824
      %v5203 = vpop.f32.mrb[0].mxu0
      %v5204 = vadd.f32 %v4928, %v5203
      %v5205 = vpop.f32.mrb[0].mxu0
      %v5206 = vpop.f32.mrb[0].mxu0
      %v5207 = vadd.f32 %v4928, %v5206
      %v5208 = vpop.f32.mrb[0].mxu0
      %5209 = vmatprep.mubr.bf16.mxu0 %v4829
      %5210 = vmatmul.mubr.bf16.gmra.mrb[0].mxu0 %v4828
      %v5211 = vpop.f32.mrb[0].mxu0
      %v5212 = vadd.f32 %v4928, %v5211
      %v5213 = vpop.f32.mrb[0].mxu0
      %v5214 = vpop.f32.mrb[0].mxu0
      %v5215 = vadd.f32 %v4928, %v5214
      %v5216 = vpop.f32.mrb[0].mxu0
      %5217 = vmatprep.mubr.bf16.mxu0 %v4833
      %5218 = vmatmul.mubr.bf16.gmra.mrb[0].mxu0 %v4832
      %v5219 = vpop.f32.mrb[0].mxu0
      %v5220 = vadd.f32 %v4928, %v5219
      %v5221 = vpop.f32.mrb[0].mxu0
      %v5222 = vpop.f32.mrb[0].mxu0
      %v5223 = vadd.f32 %v4928, %v5222
      %v5224 = vpop.f32.mrb[0].mxu0
      %5225 = vmatprep.mubr.bf16.mxu0 %v4837
      %5226 = vmatmul.mubr.bf16.gmra.mrb[0].mxu0 %v4836
      %v5227 = vpop.f32.mrb[0].mxu0
      %v5228 = vadd.f32 %v4928, %v5227
      %v5229 = vpop.f32.mrb[0].mxu0
      %v5230 = vpop.f32.mrb[0].mxu0
      %v5231 = vadd.f32 %v4928, %v5230
      %v5232 = vpop.f32.mrb[0].mxu0
      %5233 = vmatprep.mubr.bf16.mxu0 %v4841
      %5234 = vmatmul.mubr.bf16.gmra.mrb[0].mxu0 %v4840
      %v5235 = vpop.f32.mrb[0].mxu0
      %v5236 = vadd.f32 %v4928, %v5235
      %v5237 = vpop.f32.mrb[0].mxu0
      %v5238 = vpop.f32.mrb[0].mxu0
      %v5239 = vadd.f32 %v4928, %v5238
      %v5240 = vpop.f32.mrb[0].mxu0
      %5241 = vmatprep.mubr.bf16.mxu0 %v4845
      %5242 = vmatmul.mubr.bf16.gmra.mrb[0].mxu0 %v4844
      %v5243 = vpop.f32.mrb[0].mxu0
      %v5244 = vadd.f32 %v4928, %v5243
      %v5245 = vpop.f32.mrb[0].mxu0
      %v5246 = vpop.f32.mrb[0].mxu0
      %v5247 = vadd.f32 %v4928, %v5246
      %v5248 = vpop.f32.mrb[0].mxu0
      %5249 = vmatprep.mubr.bf16.mxu0 %v4849
      %5250 = vmatmul.mubr.bf16.gmra.mrb[0].mxu0 %v4848
      %v5251 = vpop.f32.mrb[0].mxu0
      %v5252 = vadd.f32 %v4928, %v5251
      %v5253 = vpop.f32.mrb[0].mxu0
      %v5254 = vpop.f32.mrb[0].mxu0
      %v5255 = vadd.f32 %v4928, %v5254
      %v5256 = vpop.f32.mrb[0].mxu0
      %5257 = vmatprep.mubr.bf16.mxu0 %v4853
      %5258 = vmatmul.mubr.bf16.gmra.mrb[0].mxu0 %v4852
      %v5259 = vpop.f32.mrb[0].mxu0
      %v5260 = vadd.f32 %v4928, %v5259
      %v5261 = vpop.f32.mrb[0].mxu0
      %v5262 = vpop.f32.mrb[0].mxu0
      %v5263 = vadd.f32 %v4928, %v5262
      %v5264 = vpop.f32.mrb[0].mxu0
      %5265 = vmatprep.mubr.bf16.mxu0 %v4857
      %5266 = vmatmul.mubr.bf16.gmra.mrb[0].mxu0 %v4856
      %v5267 = vpop.f32.mrb[0].mxu0
      %v5268 = vadd.f32 %v4928, %v5267
      %v5269 = vpop.f32.mrb[0].mxu0
      %v5270 = vpop.f32.mrb[0].mxu0
      %v5271 = vadd.f32 %v4928, %v5270
      %v5272 = vpop.f32.mrb[0].mxu0
      %5273 = vmatprep.mubr.bf16.mxu0 %v4861
      %5274 = vmatmul.mubr.bf16.gmra.mrb[0].mxu0 %v4860
      %v5275 = vpop.f32.mrb[0].mxu0
      %v5276 = vadd.f32 %v4928, %v5275
      %v5277 = vpop.f32.mrb[0].mxu0
      %v5278 = vpop.f32.mrb[0].mxu0
      %v5279 = vadd.f32 %v4928, %v5278
      %v5280 = vpop.f32.mrb[0].mxu0
      %5281 = vdwg.mxu0
      %5282 = vmatprep.subr.bf16.mxu0 0
      %5283 = vmatpush1.bf16.msra.mxu0 %v5073
      %5284 = vmatprep.subr.bf16.mxu0 0
      %5285 = vmatpush1.bf16.msra.mxu0 %v5074
      %5286 = vmatprep.subr.bf16.mxu0 0
      %5287 = vmatpush1.bf16.msra.mxu0 %v5075
      %5288 = vmatprep.subr.bf16.mxu0 0
      %5289 = vmatpush1.bf16.msra.mxu0 %v5076
      %5290 = vmatprep.subr.bf16.mxu0 0
      %5291 = vmatpush1.bf16.msra.mxu0 %v5077
      %5292 = vmatprep.subr.bf16.mxu0 0
      %5293 = vmatpush1.bf16.msra.mxu0 %v5078
      %5294 = vmatprep.subr.bf16.mxu0 0
      %5295 = vmatpush1.bf16.msra.mxu0 %v5079
      %5296 = vmatprep.subr.bf16.mxu0 0
      %5297 = vmatpush1.bf16.msra.mxu0 %v5080
      %5298 = vmatprep.subr.bf16.mxu0 0
      %5299 = vmatpush1.bf16.msra.mxu0 %v5081
      %5300 = vmatprep.subr.bf16.mxu0 0
      %5301 = vmatpush1.bf16.msra.mxu0 %v5082
      %5302 = vmatprep.subr.bf16.mxu0 0
      %5303 = vmatpush1.bf16.msra.mxu0 %v5083
      %5304 = vmatprep.subr.bf16.mxu0 0
      %5305 = vmatpush1.bf16.msra.mxu0 %v5084
      %5306 = vmatprep.subr.bf16.mxu0 0
      %5307 = vmatpush1.bf16.msra.mxu0 %v5085
      %5308 = vmatprep.subr.bf16.mxu0 0
      %5309 = vmatpush1.bf16.msra.mxu0 %v5086
      %5310 = vmatprep.subr.bf16.mxu0 0
      %5311 = vmatpush1.bf16.msra.mxu0 %v5087
      %5312 = vmatprep.subr.bf16.mxu0 0
      %5313 = vmatpush1.bf16.msra.mxu0 %v5088
      %5314 = vmatprep.mubr.bf16.mxu0 %v4803
      %5315 = vmatmul.mubr.bf16.gmra.mrb[0].mxu0 %v4802
      %v5316 = vpop.f32.mrb[0].mxu0
      %v5317 = vadd.f32 %v5156, %v5316
      %v5318 = vpop.f32.mrb[0].mxu0
      %v5319 = vpop.f32.mrb[0].mxu0
      %v5320 = vadd.f32 %v5159, %v5319
      %v5321 = vpop.f32.mrb[0].mxu0
      %5322 = vmatprep.mubr.bf16.mxu0 %v4807
      %5323 = vmatmul.mubr.bf16.gmra.mrb[0].mxu0 %v4806
      %v5324 = vpop.f32.mrb[0].mxu0
      %v5325 = vadd.f32 %v5164, %v5324
      %v5326 = vpop.f32.mrb[0].mxu0
      %v5327 = vpop.f32.mrb[0].mxu0
      %v5328 = vadd.f32 %v5167, %v5327
      %v5329 = vpop.f32.mrb[0].mxu0
      %5330 = vmatprep.mubr.bf16.mxu0 %v4811
      %5331 = vmatmul.mubr.bf16.gmra.mrb[0].mxu0 %v4810
      %v5332 = vpop.f32.mrb[0].mxu0
      %v5333 = vadd.f32 %v5172, %v5332
      %v5334 = vpop.f32.mrb[0].mxu0
      %v5335 = vpop.f32.mrb[0].mxu0
      %v5336 = vadd.f32 %v5175, %v5335
      %v5337 = vpop.f32.mrb[0].mxu0
      %5338 = vmatprep.mubr.bf16.mxu0 %v4815
      %5339 = vmatmul.mubr.bf16.gmra.mrb[0].mxu0 %v4814
      %v5340 = vpop.f32.mrb[0].mxu0
      %v5341 = vadd.f32 %v5180, %v5340
      %v5342 = vpop.f32.mrb[0].mxu0
      %v5343 = vpop.f32.mrb[0].mxu0
      %v5344 = vadd.f32 %v5183, %v5343
      %v5345 = vpop.f32.mrb[0].mxu0
      %5346 = vmatprep.mubr.bf16.mxu0 %v4819
      %5347 = vmatmul.mubr.bf16.gmra.mrb[0].mxu0 %v4818
      %v5348 = vpop.f32.mrb[0].mxu0
      %v5349 = vadd.f32 %v5188, %v5348
      %v5350 = vpop.f32.mrb[0].mxu0
      %v5351 = vpop.f32.mrb[0].mxu0
      %v5352 = vadd.f32 %v5191, %v5351
      %v5353 = vpop.f32.mrb[0].mxu0
      %5354 = vmatprep.mubr.bf16.mxu0 %v4823
      %5355 = vmatmul.mubr.bf16.gmra.mrb[0].mxu0 %v4822
      %v5356 = vpop.f32.mrb[0].mxu0
      %v5357 = vadd.f32 %v5196, %v5356
      %v5358 = vpop.f32.mrb[0].mxu0
      %v5359 = vpop.f32.mrb[0].mxu0
      %v5360 = vadd.f32 %v5199, %v5359
      %v5361 = vpop.f32.mrb[0].mxu0
      %5362 = vmatprep.mubr.bf16.mxu0 %v4827
      %5363 = vmatmul.mubr.bf16.gmra.mrb[0].mxu0 %v4826
      %v5364 = vpop.f32.mrb[0].mxu0
      %v5365 = vadd.f32 %v5204, %v5364
      %v5366 = vpop.f32.mrb[0].mxu0
      %v5367 = vpop.f32.mrb[0].mxu0
      %v5368 = vadd.f32 %v5207, %v5367
      %v5369 = vpop.f32.mrb[0].mxu0
      %5370 = vmatprep.mubr.bf16.mxu0 %v4831
      %5371 = vmatmul.mubr.bf16.gmra.mrb[0].mxu0 %v4830
      %v5372 = vpop.f32.mrb[0].mxu0
      %v5373 = vadd.f32 %v5212, %v5372
      %v5374 = vpop.f32.mrb[0].mxu0
      %v5375 = vpop.f32.mrb[0].mxu0
      %v5376 = vadd.f32 %v5215, %v5375
      %v5377 = vpop.f32.mrb[0].mxu0
      %5378 = vmatprep.mubr.bf16.mxu0 %v4835
      %5379 = vmatmul.mubr.bf16.gmra.mrb[0].mxu0 %v4834
      %v5380 = vpop.f32.mrb[0].mxu0
      %v5381 = vadd.f32 %v5220, %v5380
      %v5382 = vpop.f32.mrb[0].mxu0
      %v5383 = vpop.f32.mrb[0].mxu0
      %v5384 = vadd.f32 %v5223, %v5383
      %v5385 = vpop.f32.mrb[0].mxu0
      %5386 = vmatprep.mubr.bf16.mxu0 %v4839
      %5387 = vmatmul.mubr.bf16.gmra.mrb[0].mxu0 %v4838
      %v5388 = vpop.f32.mrb[0].mxu0
      %v5389 = vadd.f32 %v5228, %v5388
      %v5390 = vpop.f32.mrb[0].mxu0
      %v5391 = vpop.f32.mrb[0].mxu0
      %v5392 = vadd.f32 %v5231, %v5391
      %v5393 = vpop.f32.mrb[0].mxu0
      %5394 = vmatprep.mubr.bf16.mxu0 %v4843
      %5395 = vmatmul.mubr.bf16.gmra.mrb[0].mxu0 %v4842
      %v5396 = vpop.f32.mrb[0].mxu0
      %v5397 = vadd.f32 %v5236, %v5396
      %v5398 = vpop.f32.mrb[0].mxu0
      %v5399 = vpop.f32.mrb[0].mxu0
      %v5400 = vadd.f32 %v5239, %v5399
      %v5401 = vpop.f32.mrb[0].mxu0
      %5402 = vmatprep.mubr.bf16.mxu0 %v4847
      %5403 = vmatmul.mubr.bf16.gmra.mrb[0].mxu0 %v4846
      %v5404 = vpop.f32.mrb[0].mxu0
      %v5405 = vadd.f32 %v5244, %v5404
      %v5406 = vpop.f32.mrb[0].mxu0
      %v5407 = vpop.f32.mrb[0].mxu0
      %v5408 = vadd.f32 %v5247, %v5407
      %v5409 = vpop.f32.mrb[0].mxu0
      %5410 = vmatprep.mubr.bf16.mxu0 %v4851
      %5411 = vmatmul.mubr.bf16.gmra.mrb[0].mxu0 %v4850
      %v5412 = vpop.f32.mrb[0].mxu0
      %v5413 = vadd.f32 %v5252, %v5412
      %v5414 = vpop.f32.mrb[0].mxu0
      %v5415 = vpop.f32.mrb[0].mxu0
      %v5416 = vadd.f32 %v5255, %v5415
      %v5417 = vpop.f32.mrb[0].mxu0
      %5418 = vmatprep.mubr.bf16.mxu0 %v4855
      %5419 = vmatmul.mubr.bf16.gmra.mrb[0].mxu0 %v4854
      %v5420 = vpop.f32.mrb[0].mxu0
      %v5421 = vadd.f32 %v5260, %v5420
      %v5422 = vpop.f32.mrb[0].mxu0
      %v5423 = vpop.f32.mrb[0].mxu0
      %v5424 = vadd.f32 %v5263, %v5423
      %v5425 = vpop.f32.mrb[0].mxu0
      %5426 = vmatprep.mubr.bf16.mxu0 %v4859
      %5427 = vmatmul.mubr.bf16.gmra.mrb[0].mxu0 %v4858
      %v5428 = vpop.f32.mrb[0].mxu0
      %v5429 = vadd.f32 %v5268, %v5428
      %v5430 = vpop.f32.mrb[0].mxu0
      %v5431 = vpop.f32.mrb[0].mxu0
      %v5432 = vadd.f32 %v5271, %v5431
      %v5433 = vpop.f32.mrb[0].mxu0
      %5434 = vmatprep.mubr.bf16.mxu0 %v4863
      %5435 = vmatmul.mubr.bf16.gmra.mrb[0].mxu0 %v4862
      %v5436 = vpop.f32.mrb[0].mxu0
      %v5437 = vadd.f32 %v5276, %v5436
      %v5438 = vpop.f32.mrb[0].mxu0
      %v5439 = vpop.f32.mrb[0].mxu0
      %v5440 = vadd.f32 %v5279, %v5439
      %v5441 = vpop.f32.mrb[0].mxu0
      %5442 = vdwg.mxu0
      %vm5443 = vcmask 7168
      %5444 = vst.msk [vmem:[%s329] sm:$0xff] %vm5443, %v5317
      %5445 = vst.msk [vmem:[%s329 + $0x8] sm:$0xff] %vm5443, %v5320
      %5446 = vst.msk [vmem:[%s329 + $0x10] sm:$0xff] %vm5443, %v5325
      %5447 = vst.msk [vmem:[%s329 + $0x18] sm:$0xff] %vm5443, %v5328
      %5448 = vst.msk [vmem:[%s329 + $0x20] sm:$0xff] %vm5443, %v5333
      %5449 = vst.msk [vmem:[%s329 + $0x28] sm:$0xff] %vm5443, %v5336
      %5450 = vst.msk [vmem:[%s329 + $0x30] sm:$0xff] %vm5443, %v5341
      %5451 = vst.msk [vmem:[%s329 + $0x38] sm:$0xff] %vm5443, %v5344
      %5452 = vst.msk [vmem:[%s329 + $0x40] sm:$0xff] %vm5443, %v5349
      %5453 = vst.msk [vmem:[%s329 + $0x48] sm:$0xff] %vm5443, %v5352
      %5454 = vst.msk [vmem:[%s329 + $0x50] sm:$0xff] %vm5443, %v5357
      %5455 = vst.msk [vmem:[%s329 + $0x58] sm:$0xff] %vm5443, %v5360
      %5456 = vst.msk [vmem:[%s329 + $0x60] sm:$0xff] %vm5443, %v5365
      %5457 = vst.msk [vmem:[%s329 + $0x68] sm:$0xff] %vm5443, %v5368
      %5458 = vst.msk [vmem:[%s329 + $0x70] sm:$0xff] %vm5443, %v5373
      %5459 = vst.msk [vmem:[%s329 + $0x78] sm:$0xff] %vm5443, %v5376
      %5460 = vst.msk [vmem:[%s329 + $0x80] sm:$0xff] %vm5443, %v5381
      %5461 = vst.msk [vmem:[%s329 + $0x88] sm:$0xff] %vm5443, %v5384
      %5462 = vst.msk [vmem:[%s329 + $0x90] sm:$0xff] %vm5443, %v5389
      %5463 = vst.msk [vmem:[%s329 + $0x98] sm:$0xff] %vm5443, %v5392
      %5464 = vst.msk [vmem:[%s329 + $0xa0] sm:$0xff] %vm5443, %v5397
      %5465 = vst.msk [vmem:[%s329 + $0xa8] sm:$0xff] %vm5443, %v5400
      %5466 = vst.msk [vmem:[%s329 + $0xb0] sm:$0xff] %vm5443, %v5405
      %5467 = vst.msk [vmem:[%s329 + $0xb8] sm:$0xff] %vm5443, %v5408
      %5468 = vst.msk [vmem:[%s329 + $0xc0] sm:$0xff] %vm5443, %v5413
      %5469 = vst.msk [vmem:[%s329 + $0xc8] sm:$0xff] %vm5443, %v5416
      %5470 = vst.msk [vmem:[%s329 + $0xd0] sm:$0xff] %vm5443, %v5421
      %5471 = vst.msk [vmem:[%s329 + $0xd8] sm:$0xff] %vm5443, %v5424
      %5472 = vst.msk [vmem:[%s329 + $0xe0] sm:$0xff] %vm5443, %v5429
      %5473 = vst.msk [vmem:[%s329 + $0xe8] sm:$0xff] %vm5443, %v5432
      %5474 = vst.msk [vmem:[%s329 + $0xf0] sm:$0xff] %vm5443, %v5437
      %5475 = vst.msk [vmem:[%s329 + $0xf8] sm:$0xff] %vm5443, %v5440
      %s5476 = smul.u32 32, %s19
      %p5477 = scmp.lt.s32.totalorder %s5476, 63
      %s5478 = scalar_select %p5477, %s5476, 63
      %s5479 = smul.addr %s5478, 8
      %s5480 = scalar_lea.vmem %s8, %s5479
      // Predicated region
      $region53: #{critic_forward.1} parent=51 // pred_check
        %p5481 = pneg %p215
      $region54: #{critic_forward.1} parent=51 // pred_check_branch
        %5483 = sbr.rel (%p5481) target = $region56
      $region55: #{critic_forward.1} parent=51 // pred_region
        %s5484 = smul.u32 32, %s19
      $region56: #{critic_forward.1} parent=51 // pred_fallthru
        _
    $region52: #{critic_forward.1} parent=5 // pred_fallthru
      _
    %p5485 = scmp.le.s32.totalorder 2, %s14
    // Predicated region
    $region57: #{critic_forward.1} parent=5 // pred_check
      %p5486 = pneg %p5485
    $region58: #{critic_forward.1} parent=5 // pred_check_branch
      %5488 = sbr.rel (%p5486) target = $region60
    $region59: #{critic_forward.1} parent=5 // pred_region
      %s5489 = ssub.s32 %s14, 2
      // Predicated region
      $region61: #{critic_forward.1} parent=59 // pred_check
        %p5490 = pneg %p221
      $region62: #{critic_forward.1} parent=59 // pred_check_branch
        %5492 = sbr.rel (%p5490) target = $region64
      $region63: #{critic_forward.1} parent=59 // pred_region
        %s5493 = smul.u32 32, %s20
        %p5494 = scmp.lt.s32.totalorder %s5493, 63
        %s5495 = scalar_select %p5494, %s5493, 63
        %s5496 = smul.addr %s5495, 8
        %s5497 = scalar_lea.vmem %s8, %s5496
      $region64: #{critic_forward.1} parent=59 // pred_fallthru
        _
    $region60: #{critic_forward.1} parent=5 // pred_fallthru
      _
  $region6: #{critic_forward.1} parent=0 // loop_footer
    %s18 = sadd.s32 1, %s14
  $region7: #{critic_forward.1} parent=0 // loop_footer_branch
    %13 = sbr.rel target = $region3
  $region8: #{critic_forward.1} parent=0 // loop_exit
    _

</llo_original>
